<compile_context>
chip_gen: v7x
topology: tpu7x:2x2x1
jax: 0.10.0
libtpu: 0.0.40
codegen_flags: <defaults>
</compile_context>

<pallas_src>
import functools

import jax
import jax.numpy as jnp
from jax import lax
from jax.experimental import pallas as pl
from jax.experimental.pallas import tpu as pltpu

_BIG = 3.0e38  # additive mask for the global max pool
_VMEM = pl.BlockSpec(memory_space=pltpu.MemorySpace.VMEM)


# ----------------------------------------------------------------------------
# Single fused kernel: all GNN layers + pooling + readout + MLP head.
# ----------------------------------------------------------------------------
def _hiernet_fused_kernel(pool_ratio, num_layers, *refs):
    n_fixed = 5
    a_ref, brow_ref, bcol_ref, x0_ref, hls_ref = refs[:n_fixed]
    layer_refs = refs[n_fixed:n_fixed + 5 * num_layers]
    (w1m_ref, w1s_ref, w1h_ref, b1_ref,
     w2_ref, b2_ref, w3_ref, b3_ref) = refs[n_fixed + 5 * num_layers:
                                            n_fixed + 5 * num_layers + 8]
    pred_ref = refs[-1]

    a = a_ref[...]                              # [N, N]  A[target, source] (original graph)
    b_row = brow_ref[...]                       # [1, N]  int32 graph id per node
    b_col = bcol_ref[...]                       # [N, 1]
    hls = hls_ref[...]                          # [B, HLS]
    n = a.shape[0]
    bsz = hls.shape[0]
    hidden = layer_refs[0].shape[1]

    # ---- batch-derived masks, built in-kernel (VPU compares on 2-D iotas) ----
    same_g = (b_col == b_row).astype(jnp.float32)                         # [N, N]
    i_idx = lax.broadcasted_iota(jnp.int32, (n, n), 0)
    j_idx = lax.broadcasted_iota(jnp.int32, (n, n), 1)
    tie_low = (j_idx < i_idx).astype(jnp.float32)                         # 1 if j < i
    oh = (b_row == lax.broadcasted_iota(jnp.int32, (bsz, n), 0)).astype(jnp.float32)  # [B, N]
    bidx = lax.broadcasted_iota(jnp.int32, (bsz, 1), 0)

    x = x0_ref[...]                             # [N, Cin]
    act = jnp.ones((n, 1), jnp.float32)         # 1.0 for live (not-yet-pooled-away) nodes
    hmax_acc = jnp.zeros((bsz, hidden), jnp.float32)
    hsum_acc = jnp.zeros((bsz, hidden), jnp.float32)

    for li in range(num_layers):                # static unroll (num_layers == 3)
        w_ref, bias_ref, wrel_ref, brel_ref, wroot_ref = layer_refs[5 * li:5 * li + 5]

        # ---- GCNConv + ReLU; self-loop folded analytically, edge filter via act ----
        deg = jnp.dot(a, act, preferred_element_type=jnp.float32) + act          # [N, 1]
        dis = jnp.where(deg > 0, lax.rsqrt(jnp.maximum(deg, 1e-12)), 0.0)
        xw = jnp.dot(x, w_ref[...], preferred_element_type=jnp.float32)          # [N, H] MXU
        z = dis * xw                                                             # D^-1/2 (X W)
        msg = jnp.dot(a, z, preferred_element_type=jnp.float32) + act * z        # neigh + self
        y = jnp.maximum(dis * msg + bias_ref[...], 0.0) * act                    # [N, H]
        # TODO(synk): dropout is identity at p=0.0 (reference default) and is not implemented.

        # ---- SAGPooling score GNN (GraphConv H->1), reassociated:
        #      s = A @ (y . wrel) + y . wroot + brel (VPU mul + lane reduce, then mat-vec) ----
        t = jnp.sum(y * wrel_ref[...], axis=1, keepdims=True)                    # [N, 1]
        root = jnp.sum(y * wroot_ref[...], axis=1, keepdims=True)                # [N, 1]
        s = jnp.dot(a, t, preferred_element_type=jnp.float32) + root + brel_ref[...]

        # ---- per-graph top-k keep mask: rank among live nodes of the same graph ----
        s_i = s * jnp.ones_like(a)                                               # [i,j] = s[i]
        s_j = jnp.transpose(s_i)                                                 # [i,j] = s[j]
        better = jnp.where(s_j > s_i, 1.0,
                           jnp.where(s_j == s_i, tie_low, 0.0))
        rank = jnp.dot(better * same_g, act, preferred_element_type=jnp.float32)  # [N, 1]
        n_act = jnp.dot(same_g, act, preferred_element_type=jnp.float32)          # live per graph
        k = jnp.ceil(pool_ratio * n_act)
        keep = jnp.where((act > 0) & (rank < k), 1.0, 0.0)                        # [N, 1]

        # ---- tanh gating + global max / add pooling over the kept nodes ----
        xg = y * jnp.tanh(s) * keep                                               # [N, H]
        hsum_acc = hsum_acc + jnp.dot(oh, xg, preferred_element_type=jnp.float32)  # [B, H]
        hmax = jnp.zeros((bsz, hidden), jnp.float32)
        for gb in range(bsz):                                                     # static, tiny B
            member = (b_col == gb).astype(jnp.float32) * keep                     # kept nodes of gb
            row = jnp.max(xg + (member - 1.0) * _BIG, axis=0, keepdims=True)      # [1, H]
            anyk = jnp.max(member, axis=0, keepdims=True)                         # [1, 1]
            row = jnp.where(anyk > 0, row, 0.0)                                   # empty-graph guard
            hmax = hmax + jnp.where(bidx == gb, row, 0.0)
        hmax_acc = hmax_acc + hmax

        x = xg
        act = keep

    # ---- MLP head on concat([hmax, hsum, hls]) with W1 pre-split (no lane concat) ----
    # TODO(synk): JumpingKnowledge branch skipped (jknFlag == 0 in the reference module).
    h1 = (jnp.dot(hmax_acc, w1m_ref[...], preferred_element_type=jnp.float32)
          + jnp.dot(hsum_acc, w1s_ref[...], preferred_element_type=jnp.float32)
          + jnp.dot(hls, w1h_ref[...], preferred_element_type=jnp.float32)
          + b1_ref[...])
    h1 = jnp.maximum(h1, 0.0)
    h2 = jnp.maximum(
        jnp.dot(h1, w2_ref[...], preferred_element_type=jnp.float32) + b2_ref[...], 0.0)
    pred_ref[...] = (jnp.dot(h2, w3_ref[...], preferred_element_type=jnp.float32)
                     + b3_ref[...])


# ----------------------------------------------------------------------------
# Forward: one fused pallas_call for the whole network.
# ----------------------------------------------------------------------------
def hiernet_forward(params, x, adj, batch, hls_attr, pool_ratio=0.5):
    n = x.shape[0]
    bsz = hls_attr.shape[0]
    conv = params["conv"]
    num_layers = len(conv)

    batch_row = batch.astype(jnp.int32).reshape(1, n)
    batch_col = batch.astype(jnp.int32).reshape(n, 1)

    flat_layers = []
    for layer_params in conv:
        flat_layers.extend(layer_params)
    mlp = params["mlp"]

    n_inputs = 5 + 5 * num_layers + 8
    kern = functools.partial(_hiernet_fused_kernel, float(pool_ratio), num_layers)
    return pl.pallas_call(
        kern,
        out_shape=jax.ShapeDtypeStruct((bsz, 1), jnp.float32),
        in_specs=[_VMEM] * n_inputs,
        out_specs=_VMEM,
    )(adj, batch_row, batch_col, x.astype(jnp.float32), hls_attr, *flat_layers, *mlp)


# ----------------------------------------------------------------------------
# Deterministic parameter init (shapes per HierNet.__init__; synthetic weights).
# ----------------------------------------------------------------------------
def init_params(key, in_channels, hidden, hls_dim, num_layers=3):
    keys = jax.random.split(key, 3 * num_layers + 3)

    def glorot(k, shape):
        fan_in, fan_out = shape
        lim = (6.0 / (fan_in + fan_out)) ** 0.5
        return jax.random.uniform(k, shape, jnp.float32, -lim, lim)

    ki = 0
    conv = []
    for layer in range(num_layers):
        cin = in_channels if layer == 0 else hidden
        w = glorot(keys[ki], (cin, hidden)); ki += 1
        b = jnp.zeros((1, hidden), jnp.float32)
        wrel_row = jnp.transpose(glorot(keys[ki], (hidden, 1))); ki += 1    # [1, H]
        brel = jnp.zeros((1, 1), jnp.float32)
        wroot_row = jnp.transpose(glorot(keys[ki], (hidden, 1))); ki += 1   # [1, H]
        conv.append((w, b, wrel_row, brel, wroot_row))

    dims = [2 * hidden + hls_dim, 64, 64, 1]
    w1 = glorot(keys[ki], (dims[0], dims[1])); ki += 1
    b1 = jnp.zeros((1, dims[1]), jnp.float32)
    w2 = glorot(keys[ki], (dims[1], dims[2])); ki += 1
    b2 = jnp.zeros((1, dims[2]), jnp.float32)
    w3 = glorot(keys[ki], (dims[2], dims[3])); ki += 1
    b3 = jnp.zeros((1, dims[3]), jnp.float32)
    # split W1 so the fused head avoids an in-kernel lane concat of [hmax, hsum, hls]
    mlp = (w1[:hidden], w1[hidden:2 * hidden], w1[2 * hidden:], b1, w2, b2, w3, b3)
    return {"conv": conv, "mlp": mlp}


if __name__ == "__main__":
    N, B, NODES_PER_GRAPH = 16, 2, 8
    IN_CH, HIDDEN, HLS_DIM = 4, 32, 8

    key = jax.random.PRNGKey(0)
    kx, kh, kp = jax.random.split(key, 3)
    x = jax.random.normal(kx, (N, IN_CH), jnp.float32)
    hls_attr = jax.random.normal(kh, (B, HLS_DIM), jnp.float32)

    # bidirectional ring inside each graph
    src, dst = [], []
    for g in range(B):
        off = g * NODES_PER_GRAPH
        for i in range(NODES_PER_GRAPH):
            a_, b_ = off + i, off + (i + 1) % NODES_PER_GRAPH
            src += [a_, b_]
            dst += [b_, a_]
    edge_index = jnp.array([src, dst], dtype=jnp.int32)          # [2, 32]
    batch = jnp.array([g for g in range(B) for _ in range(NODES_PER_GRAPH)],
                      dtype=jnp.int32)
    # dense adjacency A[target, source]
    adj = jnp.zeros((N, N), jnp.float32).at[edge_index[1], edge_index[0]].set(1.0)

    params = init_params(kp, IN_CH, HIDDEN, HLS_DIM)

    fwd = jax.jit(functools.partial(hiernet_forward, pool_ratio=0.5))
    out = fwd(params, x, adj, batch, hls_attr)
    jax.block_until_ready(out)
    assert out.shape == (B, 1) and out.dtype == jnp.float32
    print("KERNEL_OK")
</pallas_src>

<mosaic_0001>
module attributes {stable_mosaic.version = 11 : i64} {
  func.func @_hiernet_fused_kernel(%arg0: memref<16x16xf32, #tpu.memory_space<vmem>>, %arg1: memref<1x16xi32, #tpu.memory_space<vmem>>, %arg2: memref<16x1xi32, #tpu.memory_space<vmem>>, %arg3: memref<16x4xf32, #tpu.memory_space<vmem>>, %arg4: memref<2x8xf32, #tpu.memory_space<vmem>>, %arg5: memref<4x32xf32, #tpu.memory_space<vmem>>, %arg6: memref<1x32xf32, #tpu.memory_space<vmem>>, %arg7: memref<1x32xf32, #tpu.memory_space<vmem>>, %arg8: memref<1x1xf32, #tpu.memory_space<vmem>>, %arg9: memref<1x32xf32, #tpu.memory_space<vmem>>, %arg10: memref<32x32xf32, #tpu.memory_space<vmem>>, %arg11: memref<1x32xf32, #tpu.memory_space<vmem>>, %arg12: memref<1x32xf32, #tpu.memory_space<vmem>>, %arg13: memref<1x1xf32, #tpu.memory_space<vmem>>, %arg14: memref<1x32xf32, #tpu.memory_space<vmem>>, %arg15: memref<32x32xf32, #tpu.memory_space<vmem>>, %arg16: memref<1x32xf32, #tpu.memory_space<vmem>>, %arg17: memref<1x32xf32, #tpu.memory_space<vmem>>, %arg18: memref<1x1xf32, #tpu.memory_space<vmem>>, %arg19: memref<1x32xf32, #tpu.memory_space<vmem>>, %arg20: memref<32x64xf32, #tpu.memory_space<vmem>>, %arg21: memref<32x64xf32, #tpu.memory_space<vmem>>, %arg22: memref<8x64xf32, #tpu.memory_space<vmem>>, %arg23: memref<1x64xf32, #tpu.memory_space<vmem>>, %arg24: memref<64x64xf32, #tpu.memory_space<vmem>>, %arg25: memref<1x64xf32, #tpu.memory_space<vmem>>, %arg26: memref<64x1xf32, #tpu.memory_space<vmem>>, %arg27: memref<1x1xf32, #tpu.memory_space<vmem>>, %arg28: memref<2x1xf32, #tpu.memory_space<vmem>>) attributes {dimension_semantics = [], scalar_prefetch = 0 : i64, scratch_operands = 0 : i64, tpu.core_type = #tpu.core_type<tc>} {
    %c0 = arith.constant 0 : index
    %c0_0 = arith.constant 0 : index
    %0 = vector.load %arg0[%c0, %c0_0] : memref<16x16xf32, #tpu.memory_space<vmem>>, vector<16x16xf32>
    %c0_1 = arith.constant 0 : index
    %c0_2 = arith.constant 0 : index
    %1 = vector.load %arg1[%c0_1, %c0_2] : memref<1x16xi32, #tpu.memory_space<vmem>>, vector<1x16xi32>
    %c0_3 = arith.constant 0 : index
    %c0_4 = arith.constant 0 : index
    %2 = vector.load %arg2[%c0_3, %c0_4] : memref<16x1xi32, #tpu.memory_space<vmem>>, vector<16x1xi32>
    %c0_5 = arith.constant 0 : index
    %c0_6 = arith.constant 0 : index
    %3 = vector.load %arg4[%c0_5, %c0_6] : memref<2x8xf32, #tpu.memory_space<vmem>>, vector<2x8xf32>
    %4 = vector.broadcast %2 : vector<16x1xi32> to vector<16x16xi32>
    %5 = vector.broadcast %1 : vector<1x16xi32> to vector<16x16xi32>
    %6 = arith.cmpi eq, %4, %5 : vector<16x16xi32>
    %7 = arith.extui %6 : vector<16x16xi1> to vector<16x16xi32>
    %8 = arith.sitofp %7 : vector<16x16xi32> to vector<16x16xf32>
    %9 = tpu.iota {dimensions = array<i32: 0>} : vector<16x16xi32>
    %10 = tpu.iota {dimensions = array<i32: 1>} : vector<16x16xi32>
    %11 = arith.cmpi slt, %10, %9 : vector<16x16xi32>
    %12 = arith.extui %11 : vector<16x16xi1> to vector<16x16xi32>
    %13 = arith.sitofp %12 : vector<16x16xi32> to vector<16x16xf32>
    %14 = tpu.iota {dimensions = array<i32: 0>} : vector<2x16xi32>
    %15 = vector.broadcast %1 : vector<1x16xi32> to vector<2x16xi32>
    %16 = arith.cmpi eq, %15, %14 : vector<2x16xi32>
    %17 = arith.extui %16 : vector<2x16xi1> to vector<2x16xi32>
    %18 = arith.sitofp %17 : vector<2x16xi32> to vector<2x16xf32>
    %19 = tpu.iota {dimensions = array<i32: 0>} : vector<2x1xi32>
    %c0_7 = arith.constant 0 : index
    %c0_8 = arith.constant 0 : index
    %20 = vector.load %arg3[%c0_7, %c0_8] : memref<16x4xf32, #tpu.memory_space<vmem>>, vector<16x4xf32>
    %cst = arith.constant 1.000000e+00 : f32
    %21 = vector.broadcast %cst : f32 to vector<16x1xf32>
    %cst_9 = arith.constant 0.000000e+00 : f32
    %22 = vector.broadcast %cst_9 : f32 to vector<2x32xf32>
    %cst_10 = arith.constant 0.000000e+00 : f32
    %23 = vector.broadcast %cst_10 : f32 to vector<2x32xf32>
    %cst_11 = arith.constant dense<0.000000e+00> : vector<16x1xf32>
    %24 = tpu.matmul %0, %21, %cst_11 {dimension_numbers = #tpu.dot_dimension_numbers<[1], [0], [0], [1], [0, 0, 1, 1], [], []>} : vector<16x16xf32>, vector<16x1xf32>, vector<16x1xf32> -> vector<16x1xf32>
    %25 = arith.addf %24, %21 : vector<16x1xf32>
    %cst_12 = arith.constant 0.000000e+00 : f32
    %26 = vector.broadcast %cst_12 : f32 to vector<16x1xf32>
    %27 = arith.cmpf ogt, %25, %26 : vector<16x1xf32>
    %cst_13 = arith.constant 9.99999996E-13 : f32
    %28 = vector.broadcast %cst_13 : f32 to vector<16x1xf32>
    %29 = arith.maximumf %25, %28 : vector<16x1xf32>
    %30 = math.rsqrt %29 : vector<16x1xf32>
    %cst_14 = arith.constant 0.000000e+00 : f32
    %31 = vector.broadcast %cst_14 : f32 to vector<16x1xf32>
    %32 = arith.select %27, %30, %31 : vector<16x1xi1>, vector<16x1xf32>
    %c0_15 = arith.constant 0 : index
    %c0_16 = arith.constant 0 : index
    %33 = vector.load %arg5[%c0_15, %c0_16] : memref<4x32xf32, #tpu.memory_space<vmem>>, vector<4x32xf32>
    %cst_17 = arith.constant dense<0.000000e+00> : vector<16x32xf32>
    %34 = tpu.matmul %20, %33, %cst_17 {dimension_numbers = #tpu.dot_dimension_numbers<[1], [0], [0], [1], [0, 0, 1, 1], [], []>} : vector<16x4xf32>, vector<4x32xf32>, vector<16x32xf32> -> vector<16x32xf32>
    %35 = vector.broadcast %32 : vector<16x1xf32> to vector<16x32xf32>
    %36 = arith.mulf %35, %34 : vector<16x32xf32>
    %cst_18 = arith.constant dense<0.000000e+00> : vector<16x32xf32>
    %37 = tpu.matmul %0, %36, %cst_18 {dimension_numbers = #tpu.dot_dimension_numbers<[1], [0], [0], [1], [0, 0, 1, 1], [], []>} : vector<16x16xf32>, vector<16x32xf32>, vector<16x32xf32> -> vector<16x32xf32>
    %38 = vector.broadcast %21 : vector<16x1xf32> to vector<16x32xf32>
    %39 = arith.mulf %38, %36 : vector<16x32xf32>
    %40 = arith.addf %37, %39 : vector<16x32xf32>
    %41 = vector.broadcast %32 : vector<16x1xf32> to vector<16x32xf32>
    %42 = arith.mulf %41, %40 : vector<16x32xf32>
    %c0_19 = arith.constant 0 : index
    %c0_20 = arith.constant 0 : index
    %43 = vector.load %arg6[%c0_19, %c0_20] : memref<1x32xf32, #tpu.memory_space<vmem>>, vector<1x32xf32>
    %44 = vector.broadcast %43 : vector<1x32xf32> to vector<16x32xf32>
    %45 = arith.addf %42, %44 : vector<16x32xf32>
    %cst_21 = arith.constant 0.000000e+00 : f32
    %46 = vector.broadcast %cst_21 : f32 to vector<16x32xf32>
    %47 = arith.maximumf %45, %46 : vector<16x32xf32>
    %48 = vector.broadcast %21 : vector<16x1xf32> to vector<16x32xf32>
    %49 = arith.mulf %47, %48 : vector<16x32xf32>
    %c0_22 = arith.constant 0 : index
    %c0_23 = arith.constant 0 : index
    %50 = vector.load %arg7[%c0_22, %c0_23] : memref<1x32xf32, #tpu.memory_space<vmem>>, vector<1x32xf32>
    %51 = vector.broadcast %50 : vector<1x32xf32> to vector<16x32xf32>
    %52 = arith.mulf %49, %51 : vector<16x32xf32>
    %cst_24 = arith.constant dense<0.000000e+00> : vector<16xf32>
    %53 = vector.multi_reduction <add>, %52, %cst_24 [1] : vector<16x32xf32> to vector<16xf32>
    %54 = vector.shape_cast %53 : vector<16xf32> to vector<16x1xf32>
    %c0_25 = arith.constant 0 : index
    %c0_26 = arith.constant 0 : index
    %55 = vector.load %arg9[%c0_25, %c0_26] : memref<1x32xf32, #tpu.memory_space<vmem>>, vector<1x32xf32>
    %56 = vector.broadcast %55 : vector<1x32xf32> to vector<16x32xf32>
    %57 = arith.mulf %49, %56 : vector<16x32xf32>
    %cst_27 = arith.constant dense<0.000000e+00> : vector<16xf32>
    %58 = vector.multi_reduction <add>, %57, %cst_27 [1] : vector<16x32xf32> to vector<16xf32>
    %59 = vector.shape_cast %58 : vector<16xf32> to vector<16x1xf32>
    %cst_28 = arith.constant dense<0.000000e+00> : vector<16x1xf32>
    %60 = tpu.matmul %0, %54, %cst_28 {dimension_numbers = #tpu.dot_dimension_numbers<[1], [0], [0], [1], [0, 0, 1, 1], [], []>} : vector<16x16xf32>, vector<16x1xf32>, vector<16x1xf32> -> vector<16x1xf32>
    %61 = arith.addf %60, %59 : vector<16x1xf32>
    %c0_29 = arith.constant 0 : index
    %c0_30 = arith.constant 0 : index
    %62 = vector.load %arg8[%c0_29, %c0_30] : memref<1x1xf32, #tpu.memory_space<vmem>>, vector<1x1xf32>
    %63 = vector.broadcast %62 : vector<1x1xf32> to vector<16x1xf32>
    %64 = arith.addf %61, %63 : vector<16x1xf32>
    %cst_31 = arith.constant 1.000000e+00 : f32
    %65 = vector.broadcast %cst_31 : f32 to vector<16x16xf32>
    %66 = vector.broadcast %64 : vector<16x1xf32> to vector<16x16xf32>
    %67 = arith.mulf %66, %65 : vector<16x16xf32>
    %68 = tpu.transpose %67, [1, 0] : vector<16x16xf32> -> vector<16x16xf32>
    %69 = arith.cmpf ogt, %68, %67 : vector<16x16xf32>
    %70 = arith.cmpf oeq, %68, %67 : vector<16x16xf32>
    %cst_32 = arith.constant 0.000000e+00 : f32
    %71 = vector.broadcast %cst_32 : f32 to vector<16x16xf32>
    %72 = arith.select %70, %13, %71 : vector<16x16xi1>, vector<16x16xf32>
    %cst_33 = arith.constant 1.000000e+00 : f32
    %73 = vector.broadcast %cst_33 : f32 to vector<16x16xf32>
    %74 = arith.select %69, %73, %72 : vector<16x16xi1>, vector<16x16xf32>
    %75 = arith.mulf %74, %8 : vector<16x16xf32>
    %cst_34 = arith.constant dense<0.000000e+00> : vector<16x1xf32>
    %76 = tpu.matmul %75, %21, %cst_34 {dimension_numbers = #tpu.dot_dimension_numbers<[1], [0], [0], [1], [0, 0, 1, 1], [], []>} : vector<16x16xf32>, vector<16x1xf32>, vector<16x1xf32> -> vector<16x1xf32>
    %cst_35 = arith.constant dense<0.000000e+00> : vector<16x1xf32>
    %77 = tpu.matmul %8, %21, %cst_35 {dimension_numbers = #tpu.dot_dimension_numbers<[1], [0], [0], [1], [0, 0, 1, 1], [], []>} : vector<16x16xf32>, vector<16x1xf32>, vector<16x1xf32> -> vector<16x1xf32>
    %cst_36 = arith.constant 5.000000e-01 : f32
    %78 = vector.broadcast %cst_36 : f32 to vector<16x1xf32>
    %79 = arith.mulf %78, %77 : vector<16x1xf32>
    %80 = math.ceil %79 : vector<16x1xf32>
    %cst_37 = arith.constant 0.000000e+00 : f32
    %81 = vector.broadcast %cst_37 : f32 to vector<16x1xf32>
    %82 = arith.cmpf ogt, %21, %81 : vector<16x1xf32>
    %83 = arith.cmpf olt, %76, %80 : vector<16x1xf32>
    %84 = arith.andi %82, %83 : vector<16x1xi1>
    %cst_38 = arith.constant 1.000000e+00 : f32
    %cst_39 = arith.constant 0.000000e+00 : f32
    %85 = vector.broadcast %cst_38 : f32 to vector<16x1xf32>
    %86 = vector.broadcast %cst_39 : f32 to vector<16x1xf32>
    %87 = arith.select %84, %85, %86 : vector<16x1xi1>, vector<16x1xf32>
    %88 = math.tanh %64 : vector<16x1xf32>
    %89 = vector.broadcast %88 : vector<16x1xf32> to vector<16x32xf32>
    %90 = arith.mulf %49, %89 : vector<16x32xf32>
    %91 = vector.broadcast %87 : vector<16x1xf32> to vector<16x32xf32>
    %92 = arith.mulf %90, %91 : vector<16x32xf32>
    %cst_40 = arith.constant dense<0.000000e+00> : vector<2x32xf32>
    %93 = tpu.matmul %18, %92, %cst_40 {dimension_numbers = #tpu.dot_dimension_numbers<[1], [0], [0], [1], [0, 0, 1, 1], [], []>} : vector<2x16xf32>, vector<16x32xf32>, vector<2x32xf32> -> vector<2x32xf32>
    %94 = arith.addf %23, %93 : vector<2x32xf32>
    %cst_41 = arith.constant 0.000000e+00 : f32
    %95 = vector.broadcast %cst_41 : f32 to vector<2x32xf32>
    %c0_i32 = arith.constant 0 : i32
    %96 = vector.broadcast %c0_i32 : i32 to vector<16x1xi32>
    %97 = arith.cmpi eq, %2, %96 : vector<16x1xi32>
    %98 = arith.extui %97 : vector<16x1xi1> to vector<16x1xi32>
    %99 = arith.sitofp %98 : vector<16x1xi32> to vector<16x1xf32>
    %100 = arith.mulf %99, %87 : vector<16x1xf32>
    %cst_42 = arith.constant 1.000000e+00 : f32
    %101 = vector.broadcast %cst_42 : f32 to vector<16x1xf32>
    %102 = arith.subf %100, %101 : vector<16x1xf32>
    %cst_43 = arith.constant 3.000000e+38 : f32
    %103 = vector.broadcast %cst_43 : f32 to vector<16x1xf32>
    %104 = arith.mulf %102, %103 : vector<16x1xf32>
    %105 = vector.broadcast %104 : vector<16x1xf32> to vector<16x32xf32>
    %106 = arith.addf %92, %105 : vector<16x32xf32>
    %cst_44 = arith.constant dense<0xFF800000> : vector<32xf32>
    %107 = vector.multi_reduction <maximumf>, %106, %cst_44 [0] : vector<16x32xf32> to vector<32xf32>
    %108 = vector.shape_cast %107 : vector<32xf32> to vector<1x32xf32>
    %cst_45 = arith.constant dense<0xFF800000> : vector<1xf32>
    %109 = vector.multi_reduction <maximumf>, %100, %cst_45 [0] : vector<16x1xf32> to vector<1xf32>
    %110 = vector.shape_cast %109 : vector<1xf32> to vector<1x1xf32>
    %cst_46 = arith.constant 0.000000e+00 : f32
    %111 = vector.broadcast %cst_46 : f32 to vector<1x1xf32>
    %112 = arith.cmpf ogt, %110, %111 : vector<1x1xf32>
    %cst_47 = arith.constant 0.000000e+00 : f32
    %113 = vector.shape_cast %112 : vector<1x1xi1> to vector<1x1xi1>
    %114 = vector.broadcast %113 : vector<1x1xi1> to vector<1x32xi1>
    %115 = vector.broadcast %cst_47 : f32 to vector<1x32xf32>
    %116 = arith.select %114, %108, %115 : vector<1x32xi1>, vector<1x32xf32>
    %c0_i32_48 = arith.constant 0 : i32
    %117 = vector.broadcast %c0_i32_48 : i32 to vector<2x1xi32>
    %118 = arith.cmpi eq, %19, %117 : vector<2x1xi32>
    %cst_49 = arith.constant 0.000000e+00 : f32
    %119 = vector.shape_cast %118 : vector<2x1xi1> to vector<2x1xi1>
    %120 = vector.broadcast %119 : vector<2x1xi1> to vector<2x32xi1>
    %121 = vector.shape_cast %116 : vector<1x32xf32> to vector<1x32xf32>
    %122 = vector.broadcast %121 : vector<1x32xf32> to vector<2x32xf32>
    %123 = vector.broadcast %cst_49 : f32 to vector<2x32xf32>
    %124 = arith.select %120, %122, %123 : vector<2x32xi1>, vector<2x32xf32>
    %125 = arith.addf %95, %124 : vector<2x32xf32>
    %c1_i32 = arith.constant 1 : i32
    %126 = vector.broadcast %c1_i32 : i32 to vector<16x1xi32>
    %127 = arith.cmpi eq, %2, %126 : vector<16x1xi32>
    %128 = arith.extui %127 : vector<16x1xi1> to vector<16x1xi32>
    %129 = arith.sitofp %128 : vector<16x1xi32> to vector<16x1xf32>
    %130 = arith.mulf %129, %87 : vector<16x1xf32>
    %cst_50 = arith.constant 1.000000e+00 : f32
    %131 = vector.broadcast %cst_50 : f32 to vector<16x1xf32>
    %132 = arith.subf %130, %131 : vector<16x1xf32>
    %cst_51 = arith.constant 3.000000e+38 : f32
    %133 = vector.broadcast %cst_51 : f32 to vector<16x1xf32>
    %134 = arith.mulf %132, %133 : vector<16x1xf32>
    %135 = vector.broadcast %134 : vector<16x1xf32> to vector<16x32xf32>
    %136 = arith.addf %92, %135 : vector<16x32xf32>
    %cst_52 = arith.constant dense<0xFF800000> : vector<32xf32>
    %137 = vector.multi_reduction <maximumf>, %136, %cst_52 [0] : vector<16x32xf32> to vector<32xf32>
    %138 = vector.shape_cast %137 : vector<32xf32> to vector<1x32xf32>
    %cst_53 = arith.constant dense<0xFF800000> : vector<1xf32>
    %139 = vector.multi_reduction <maximumf>, %130, %cst_53 [0] : vector<16x1xf32> to vector<1xf32>
    %140 = vector.shape_cast %139 : vector<1xf32> to vector<1x1xf32>
    %cst_54 = arith.constant 0.000000e+00 : f32
    %141 = vector.broadcast %cst_54 : f32 to vector<1x1xf32>
    %142 = arith.cmpf ogt, %140, %141 : vector<1x1xf32>
    %cst_55 = arith.constant 0.000000e+00 : f32
    %143 = vector.shape_cast %142 : vector<1x1xi1> to vector<1x1xi1>
    %144 = vector.broadcast %143 : vector<1x1xi1> to vector<1x32xi1>
    %145 = vector.broadcast %cst_55 : f32 to vector<1x32xf32>
    %146 = arith.select %144, %138, %145 : vector<1x32xi1>, vector<1x32xf32>
    %c1_i32_56 = arith.constant 1 : i32
    %147 = vector.broadcast %c1_i32_56 : i32 to vector<2x1xi32>
    %148 = arith.cmpi eq, %19, %147 : vector<2x1xi32>
    %cst_57 = arith.constant 0.000000e+00 : f32
    %149 = vector.shape_cast %148 : vector<2x1xi1> to vector<2x1xi1>
    %150 = vector.broadcast %149 : vector<2x1xi1> to vector<2x32xi1>
    %151 = vector.shape_cast %146 : vector<1x32xf32> to vector<1x32xf32>
    %152 = vector.broadcast %151 : vector<1x32xf32> to vector<2x32xf32>
    %153 = vector.broadcast %cst_57 : f32 to vector<2x32xf32>
    %154 = arith.select %150, %152, %153 : vector<2x32xi1>, vector<2x32xf32>
    %155 = arith.addf %125, %154 : vector<2x32xf32>
    %156 = arith.addf %22, %155 : vector<2x32xf32>
    %cst_58 = arith.constant dense<0.000000e+00> : vector<16x1xf32>
    %157 = tpu.matmul %0, %87, %cst_58 {dimension_numbers = #tpu.dot_dimension_numbers<[1], [0], [0], [1], [0, 0, 1, 1], [], []>} : vector<16x16xf32>, vector<16x1xf32>, vector<16x1xf32> -> vector<16x1xf32>
    %158 = arith.addf %157, %87 : vector<16x1xf32>
    %cst_59 = arith.constant 0.000000e+00 : f32
    %159 = vector.broadcast %cst_59 : f32 to vector<16x1xf32>
    %160 = arith.cmpf ogt, %158, %159 : vector<16x1xf32>
    %cst_60 = arith.constant 9.99999996E-13 : f32
    %161 = vector.broadcast %cst_60 : f32 to vector<16x1xf32>
    %162 = arith.maximumf %158, %161 : vector<16x1xf32>
    %163 = math.rsqrt %162 : vector<16x1xf32>
    %cst_61 = arith.constant 0.000000e+00 : f32
    %164 = vector.broadcast %cst_61 : f32 to vector<16x1xf32>
    %165 = arith.select %160, %163, %164 : vector<16x1xi1>, vector<16x1xf32>
    %c0_62 = arith.constant 0 : index
    %c0_63 = arith.constant 0 : index
    %166 = vector.load %arg10[%c0_62, %c0_63] : memref<32x32xf32, #tpu.memory_space<vmem>>, vector<32x32xf32>
    %cst_64 = arith.constant dense<0.000000e+00> : vector<16x32xf32>
    %167 = tpu.matmul %92, %166, %cst_64 {dimension_numbers = #tpu.dot_dimension_numbers<[1], [0], [0], [1], [0, 0, 1, 1], [], []>} : vector<16x32xf32>, vector<32x32xf32>, vector<16x32xf32> -> vector<16x32xf32>
    %168 = vector.broadcast %165 : vector<16x1xf32> to vector<16x32xf32>
    %169 = arith.mulf %168, %167 : vector<16x32xf32>
    %cst_65 = arith.constant dense<0.000000e+00> : vector<16x32xf32>
    %170 = tpu.matmul %0, %169, %cst_65 {dimension_numbers = #tpu.dot_dimension_numbers<[1], [0], [0], [1], [0, 0, 1, 1], [], []>} : vector<16x16xf32>, vector<16x32xf32>, vector<16x32xf32> -> vector<16x32xf32>
    %171 = vector.broadcast %87 : vector<16x1xf32> to vector<16x32xf32>
    %172 = arith.mulf %171, %169 : vector<16x32xf32>
    %173 = arith.addf %170, %172 : vector<16x32xf32>
    %174 = vector.broadcast %165 : vector<16x1xf32> to vector<16x32xf32>
    %175 = arith.mulf %174, %173 : vector<16x32xf32>
    %c0_66 = arith.constant 0 : index
    %c0_67 = arith.constant 0 : index
    %176 = vector.load %arg11[%c0_66, %c0_67] : memref<1x32xf32, #tpu.memory_space<vmem>>, vector<1x32xf32>
    %177 = vector.broadcast %176 : vector<1x32xf32> to vector<16x32xf32>
    %178 = arith.addf %175, %177 : vector<16x32xf32>
    %cst_68 = arith.constant 0.000000e+00 : f32
    %179 = vector.broadcast %cst_68 : f32 to vector<16x32xf32>
    %180 = arith.maximumf %178, %179 : vector<16x32xf32>
    %181 = vector.broadcast %87 : vector<16x1xf32> to vector<16x32xf32>
    %182 = arith.mulf %180, %181 : vector<16x32xf32>
    %c0_69 = arith.constant 0 : index
    %c0_70 = arith.constant 0 : index
    %183 = vector.load %arg12[%c0_69, %c0_70] : memref<1x32xf32, #tpu.memory_space<vmem>>, vector<1x32xf32>
    %184 = vector.broadcast %183 : vector<1x32xf32> to vector<16x32xf32>
    %185 = arith.mulf %182, %184 : vector<16x32xf32>
    %cst_71 = arith.constant dense<0.000000e+00> : vector<16xf32>
    %186 = vector.multi_reduction <add>, %185, %cst_71 [1] : vector<16x32xf32> to vector<16xf32>
    %187 = vector.shape_cast %186 : vector<16xf32> to vector<16x1xf32>
    %c0_72 = arith.constant 0 : index
    %c0_73 = arith.constant 0 : index
    %188 = vector.load %arg14[%c0_72, %c0_73] : memref<1x32xf32, #tpu.memory_space<vmem>>, vector<1x32xf32>
    %189 = vector.broadcast %188 : vector<1x32xf32> to vector<16x32xf32>
    %190 = arith.mulf %182, %189 : vector<16x32xf32>
    %cst_74 = arith.constant dense<0.000000e+00> : vector<16xf32>
    %191 = vector.multi_reduction <add>, %190, %cst_74 [1] : vector<16x32xf32> to vector<16xf32>
    %192 = vector.shape_cast %191 : vector<16xf32> to vector<16x1xf32>
    %cst_75 = arith.constant dense<0.000000e+00> : vector<16x1xf32>
    %193 = tpu.matmul %0, %187, %cst_75 {dimension_numbers = #tpu.dot_dimension_numbers<[1], [0], [0], [1], [0, 0, 1, 1], [], []>} : vector<16x16xf32>, vector<16x1xf32>, vector<16x1xf32> -> vector<16x1xf32>
    %194 = arith.addf %193, %192 : vector<16x1xf32>
    %c0_76 = arith.constant 0 : index
    %c0_77 = arith.constant 0 : index
    %195 = vector.load %arg13[%c0_76, %c0_77] : memref<1x1xf32, #tpu.memory_space<vmem>>, vector<1x1xf32>
    %196 = vector.broadcast %195 : vector<1x1xf32> to vector<16x1xf32>
    %197 = arith.addf %194, %196 : vector<16x1xf32>
    %cst_78 = arith.constant 1.000000e+00 : f32
    %198 = vector.broadcast %cst_78 : f32 to vector<16x16xf32>
    %199 = vector.broadcast %197 : vector<16x1xf32> to vector<16x16xf32>
    %200 = arith.mulf %199, %198 : vector<16x16xf32>
    %201 = tpu.transpose %200, [1, 0] : vector<16x16xf32> -> vector<16x16xf32>
    %202 = arith.cmpf ogt, %201, %200 : vector<16x16xf32>
    %203 = arith.cmpf oeq, %201, %200 : vector<16x16xf32>
    %cst_79 = arith.constant 0.000000e+00 : f32
    %204 = vector.broadcast %cst_79 : f32 to vector<16x16xf32>
    %205 = arith.select %203, %13, %204 : vector<16x16xi1>, vector<16x16xf32>
    %cst_80 = arith.constant 1.000000e+00 : f32
    %206 = vector.broadcast %cst_80 : f32 to vector<16x16xf32>
    %207 = arith.select %202, %206, %205 : vector<16x16xi1>, vector<16x16xf32>
    %208 = arith.mulf %207, %8 : vector<16x16xf32>
    %cst_81 = arith.constant dense<0.000000e+00> : vector<16x1xf32>
    %209 = tpu.matmul %208, %87, %cst_81 {dimension_numbers = #tpu.dot_dimension_numbers<[1], [0], [0], [1], [0, 0, 1, 1], [], []>} : vector<16x16xf32>, vector<16x1xf32>, vector<16x1xf32> -> vector<16x1xf32>
    %cst_82 = arith.constant dense<0.000000e+00> : vector<16x1xf32>
    %210 = tpu.matmul %8, %87, %cst_82 {dimension_numbers = #tpu.dot_dimension_numbers<[1], [0], [0], [1], [0, 0, 1, 1], [], []>} : vector<16x16xf32>, vector<16x1xf32>, vector<16x1xf32> -> vector<16x1xf32>
    %cst_83 = arith.constant 5.000000e-01 : f32
    %211 = vector.broadcast %cst_83 : f32 to vector<16x1xf32>
    %212 = arith.mulf %211, %210 : vector<16x1xf32>
    %213 = math.ceil %212 : vector<16x1xf32>
    %cst_84 = arith.constant 0.000000e+00 : f32
    %214 = vector.broadcast %cst_84 : f32 to vector<16x1xf32>
    %215 = arith.cmpf ogt, %87, %214 : vector<16x1xf32>
    %216 = arith.cmpf olt, %209, %213 : vector<16x1xf32>
    %217 = arith.andi %215, %216 : vector<16x1xi1>
    %cst_85 = arith.constant 1.000000e+00 : f32
    %cst_86 = arith.constant 0.000000e+00 : f32
    %218 = vector.broadcast %cst_85 : f32 to vector<16x1xf32>
    %219 = vector.broadcast %cst_86 : f32 to vector<16x1xf32>
    %220 = arith.select %217, %218, %219 : vector<16x1xi1>, vector<16x1xf32>
    %221 = math.tanh %197 : vector<16x1xf32>
    %222 = vector.broadcast %221 : vector<16x1xf32> to vector<16x32xf32>
    %223 = arith.mulf %182, %222 : vector<16x32xf32>
    %224 = vector.broadcast %220 : vector<16x1xf32> to vector<16x32xf32>
    %225 = arith.mulf %223, %224 : vector<16x32xf32>
    %cst_87 = arith.constant dense<0.000000e+00> : vector<2x32xf32>
    %226 = tpu.matmul %18, %225, %cst_87 {dimension_numbers = #tpu.dot_dimension_numbers<[1], [0], [0], [1], [0, 0, 1, 1], [], []>} : vector<2x16xf32>, vector<16x32xf32>, vector<2x32xf32> -> vector<2x32xf32>
    %227 = arith.addf %94, %226 : vector<2x32xf32>
    %cst_88 = arith.constant 0.000000e+00 : f32
    %228 = vector.broadcast %cst_88 : f32 to vector<2x32xf32>
    %c0_i32_89 = arith.constant 0 : i32
    %229 = vector.broadcast %c0_i32_89 : i32 to vector<16x1xi32>
    %230 = arith.cmpi eq, %2, %229 : vector<16x1xi32>
    %231 = arith.extui %230 : vector<16x1xi1> to vector<16x1xi32>
    %232 = arith.sitofp %231 : vector<16x1xi32> to vector<16x1xf32>
    %233 = arith.mulf %232, %220 : vector<16x1xf32>
    %cst_90 = arith.constant 1.000000e+00 : f32
    %234 = vector.broadcast %cst_90 : f32 to vector<16x1xf32>
    %235 = arith.subf %233, %234 : vector<16x1xf32>
    %cst_91 = arith.constant 3.000000e+38 : f32
    %236 = vector.broadcast %cst_91 : f32 to vector<16x1xf32>
    %237 = arith.mulf %235, %236 : vector<16x1xf32>
    %238 = vector.broadcast %237 : vector<16x1xf32> to vector<16x32xf32>
    %239 = arith.addf %225, %238 : vector<16x32xf32>
    %cst_92 = arith.constant dense<0xFF800000> : vector<32xf32>
    %240 = vector.multi_reduction <maximumf>, %239, %cst_92 [0] : vector<16x32xf32> to vector<32xf32>
    %241 = vector.shape_cast %240 : vector<32xf32> to vector<1x32xf32>
    %cst_93 = arith.constant dense<0xFF800000> : vector<1xf32>
    %242 = vector.multi_reduction <maximumf>, %233, %cst_93 [0] : vector<16x1xf32> to vector<1xf32>
    %243 = vector.shape_cast %242 : vector<1xf32> to vector<1x1xf32>
    %cst_94 = arith.constant 0.000000e+00 : f32
    %244 = vector.broadcast %cst_94 : f32 to vector<1x1xf32>
    %245 = arith.cmpf ogt, %243, %244 : vector<1x1xf32>
    %cst_95 = arith.constant 0.000000e+00 : f32
    %246 = vector.shape_cast %245 : vector<1x1xi1> to vector<1x1xi1>
    %247 = vector.broadcast %246 : vector<1x1xi1> to vector<1x32xi1>
    %248 = vector.broadcast %cst_95 : f32 to vector<1x32xf32>
    %249 = arith.select %247, %241, %248 : vector<1x32xi1>, vector<1x32xf32>
    %c0_i32_96 = arith.constant 0 : i32
    %250 = vector.broadcast %c0_i32_96 : i32 to vector<2x1xi32>
    %251 = arith.cmpi eq, %19, %250 : vector<2x1xi32>
    %cst_97 = arith.constant 0.000000e+00 : f32
    %252 = vector.shape_cast %251 : vector<2x1xi1> to vector<2x1xi1>
    %253 = vector.broadcast %252 : vector<2x1xi1> to vector<2x32xi1>
    %254 = vector.shape_cast %249 : vector<1x32xf32> to vector<1x32xf32>
    %255 = vector.broadcast %254 : vector<1x32xf32> to vector<2x32xf32>
    %256 = vector.broadcast %cst_97 : f32 to vector<2x32xf32>
    %257 = arith.select %253, %255, %256 : vector<2x32xi1>, vector<2x32xf32>
    %258 = arith.addf %228, %257 : vector<2x32xf32>
    %c1_i32_98 = arith.constant 1 : i32
    %259 = vector.broadcast %c1_i32_98 : i32 to vector<16x1xi32>
    %260 = arith.cmpi eq, %2, %259 : vector<16x1xi32>
    %261 = arith.extui %260 : vector<16x1xi1> to vector<16x1xi32>
    %262 = arith.sitofp %261 : vector<16x1xi32> to vector<16x1xf32>
    %263 = arith.mulf %262, %220 : vector<16x1xf32>
    %cst_99 = arith.constant 1.000000e+00 : f32
    %264 = vector.broadcast %cst_99 : f32 to vector<16x1xf32>
    %265 = arith.subf %263, %264 : vector<16x1xf32>
    %cst_100 = arith.constant 3.000000e+38 : f32
    %266 = vector.broadcast %cst_100 : f32 to vector<16x1xf32>
    %267 = arith.mulf %265, %266 : vector<16x1xf32>
    %268 = vector.broadcast %267 : vector<16x1xf32> to vector<16x32xf32>
    %269 = arith.addf %225, %268 : vector<16x32xf32>
    %cst_101 = arith.constant dense<0xFF800000> : vector<32xf32>
    %270 = vector.multi_reduction <maximumf>, %269, %cst_101 [0] : vector<16x32xf32> to vector<32xf32>
    %271 = vector.shape_cast %270 : vector<32xf32> to vector<1x32xf32>
    %cst_102 = arith.constant dense<0xFF800000> : vector<1xf32>
    %272 = vector.multi_reduction <maximumf>, %263, %cst_102 [0] : vector<16x1xf32> to vector<1xf32>
    %273 = vector.shape_cast %272 : vector<1xf32> to vector<1x1xf32>
    %cst_103 = arith.constant 0.000000e+00 : f32
    %274 = vector.broadcast %cst_103 : f32 to vector<1x1xf32>
    %275 = arith.cmpf ogt, %273, %274 : vector<1x1xf32>
    %cst_104 = arith.constant 0.000000e+00 : f32
    %276 = vector.shape_cast %275 : vector<1x1xi1> to vector<1x1xi1>
    %277 = vector.broadcast %276 : vector<1x1xi1> to vector<1x32xi1>
    %278 = vector.broadcast %cst_104 : f32 to vector<1x32xf32>
    %279 = arith.select %277, %271, %278 : vector<1x32xi1>, vector<1x32xf32>
    %c1_i32_105 = arith.constant 1 : i32
    %280 = vector.broadcast %c1_i32_105 : i32 to vector<2x1xi32>
    %281 = arith.cmpi eq, %19, %280 : vector<2x1xi32>
    %cst_106 = arith.constant 0.000000e+00 : f32
    %282 = vector.shape_cast %281 : vector<2x1xi1> to vector<2x1xi1>
    %283 = vector.broadcast %282 : vector<2x1xi1> to vector<2x32xi1>
    %284 = vector.shape_cast %279 : vector<1x32xf32> to vector<1x32xf32>
    %285 = vector.broadcast %284 : vector<1x32xf32> to vector<2x32xf32>
    %286 = vector.broadcast %cst_106 : f32 to vector<2x32xf32>
    %287 = arith.select %283, %285, %286 : vector<2x32xi1>, vector<2x32xf32>
    %288 = arith.addf %258, %287 : vector<2x32xf32>
    %289 = arith.addf %156, %288 : vector<2x32xf32>
    %cst_107 = arith.constant dense<0.000000e+00> : vector<16x1xf32>
    %290 = tpu.matmul %0, %220, %cst_107 {dimension_numbers = #tpu.dot_dimension_numbers<[1], [0], [0], [1], [0, 0, 1, 1], [], []>} : vector<16x16xf32>, vector<16x1xf32>, vector<16x1xf32> -> vector<16x1xf32>
    %291 = arith.addf %290, %220 : vector<16x1xf32>
    %cst_108 = arith.constant 0.000000e+00 : f32
    %292 = vector.broadcast %cst_108 : f32 to vector<16x1xf32>
    %293 = arith.cmpf ogt, %291, %292 : vector<16x1xf32>
    %cst_109 = arith.constant 9.99999996E-13 : f32
    %294 = vector.broadcast %cst_109 : f32 to vector<16x1xf32>
    %295 = arith.maximumf %291, %294 : vector<16x1xf32>
    %296 = math.rsqrt %295 : vector<16x1xf32>
    %cst_110 = arith.constant 0.000000e+00 : f32
    %297 = vector.broadcast %cst_110 : f32 to vector<16x1xf32>
    %298 = arith.select %293, %296, %297 : vector<16x1xi1>, vector<16x1xf32>
    %c0_111 = arith.constant 0 : index
    %c0_112 = arith.constant 0 : index
    %299 = vector.load %arg15[%c0_111, %c0_112] : memref<32x32xf32, #tpu.memory_space<vmem>>, vector<32x32xf32>
    %cst_113 = arith.constant dense<0.000000e+00> : vector<16x32xf32>
    %300 = tpu.matmul %225, %299, %cst_113 {dimension_numbers = #tpu.dot_dimension_numbers<[1], [0], [0], [1], [0, 0, 1, 1], [], []>} : vector<16x32xf32>, vector<32x32xf32>, vector<16x32xf32> -> vector<16x32xf32>
    %301 = vector.broadcast %298 : vector<16x1xf32> to vector<16x32xf32>
    %302 = arith.mulf %301, %300 : vector<16x32xf32>
    %cst_114 = arith.constant dense<0.000000e+00> : vector<16x32xf32>
    %303 = tpu.matmul %0, %302, %cst_114 {dimension_numbers = #tpu.dot_dimension_numbers<[1], [0], [0], [1], [0, 0, 1, 1], [], []>} : vector<16x16xf32>, vector<16x32xf32>, vector<16x32xf32> -> vector<16x32xf32>
    %304 = vector.broadcast %220 : vector<16x1xf32> to vector<16x32xf32>
    %305 = arith.mulf %304, %302 : vector<16x32xf32>
    %306 = arith.addf %303, %305 : vector<16x32xf32>
    %307 = vector.broadcast %298 : vector<16x1xf32> to vector<16x32xf32>
    %308 = arith.mulf %307, %306 : vector<16x32xf32>
    %c0_115 = arith.constant 0 : index
    %c0_116 = arith.constant 0 : index
    %309 = vector.load %arg16[%c0_115, %c0_116] : memref<1x32xf32, #tpu.memory_space<vmem>>, vector<1x32xf32>
    %310 = vector.broadcast %309 : vector<1x32xf32> to vector<16x32xf32>
    %311 = arith.addf %308, %310 : vector<16x32xf32>
    %cst_117 = arith.constant 0.000000e+00 : f32
    %312 = vector.broadcast %cst_117 : f32 to vector<16x32xf32>
    %313 = arith.maximumf %311, %312 : vector<16x32xf32>
    %314 = vector.broadcast %220 : vector<16x1xf32> to vector<16x32xf32>
    %315 = arith.mulf %313, %314 : vector<16x32xf32>
    %c0_118 = arith.constant 0 : index
    %c0_119 = arith.constant 0 : index
    %316 = vector.load %arg17[%c0_118, %c0_119] : memref<1x32xf32, #tpu.memory_space<vmem>>, vector<1x32xf32>
    %317 = vector.broadcast %316 : vector<1x32xf32> to vector<16x32xf32>
    %318 = arith.mulf %315, %317 : vector<16x32xf32>
    %cst_120 = arith.constant dense<0.000000e+00> : vector<16xf32>
    %319 = vector.multi_reduction <add>, %318, %cst_120 [1] : vector<16x32xf32> to vector<16xf32>
    %320 = vector.shape_cast %319 : vector<16xf32> to vector<16x1xf32>
    %c0_121 = arith.constant 0 : index
    %c0_122 = arith.constant 0 : index
    %321 = vector.load %arg19[%c0_121, %c0_122] : memref<1x32xf32, #tpu.memory_space<vmem>>, vector<1x32xf32>
    %322 = vector.broadcast %321 : vector<1x32xf32> to vector<16x32xf32>
    %323 = arith.mulf %315, %322 : vector<16x32xf32>
    %cst_123 = arith.constant dense<0.000000e+00> : vector<16xf32>
    %324 = vector.multi_reduction <add>, %323, %cst_123 [1] : vector<16x32xf32> to vector<16xf32>
    %325 = vector.shape_cast %324 : vector<16xf32> to vector<16x1xf32>
    %cst_124 = arith.constant dense<0.000000e+00> : vector<16x1xf32>
    %326 = tpu.matmul %0, %320, %cst_124 {dimension_numbers = #tpu.dot_dimension_numbers<[1], [0], [0], [1], [0, 0, 1, 1], [], []>} : vector<16x16xf32>, vector<16x1xf32>, vector<16x1xf32> -> vector<16x1xf32>
    %327 = arith.addf %326, %325 : vector<16x1xf32>
    %c0_125 = arith.constant 0 : index
    %c0_126 = arith.constant 0 : index
    %328 = vector.load %arg18[%c0_125, %c0_126] : memref<1x1xf32, #tpu.memory_space<vmem>>, vector<1x1xf32>
    %329 = vector.broadcast %328 : vector<1x1xf32> to vector<16x1xf32>
    %330 = arith.addf %327, %329 : vector<16x1xf32>
    %cst_127 = arith.constant 1.000000e+00 : f32
    %331 = vector.broadcast %cst_127 : f32 to vector<16x16xf32>
    %332 = vector.broadcast %330 : vector<16x1xf32> to vector<16x16xf32>
    %333 = arith.mulf %332, %331 : vector<16x16xf32>
    %334 = tpu.transpose %333, [1, 0] : vector<16x16xf32> -> vector<16x16xf32>
    %335 = arith.cmpf ogt, %334, %333 : vector<16x16xf32>
    %336 = arith.cmpf oeq, %334, %333 : vector<16x16xf32>
    %cst_128 = arith.constant 0.000000e+00 : f32
    %337 = vector.broadcast %cst_128 : f32 to vector<16x16xf32>
    %338 = arith.select %336, %13, %337 : vector<16x16xi1>, vector<16x16xf32>
    %cst_129 = arith.constant 1.000000e+00 : f32
    %339 = vector.broadcast %cst_129 : f32 to vector<16x16xf32>
    %340 = arith.select %335, %339, %338 : vector<16x16xi1>, vector<16x16xf32>
    %341 = arith.mulf %340, %8 : vector<16x16xf32>
    %cst_130 = arith.constant dense<0.000000e+00> : vector<16x1xf32>
    %342 = tpu.matmul %341, %220, %cst_130 {dimension_numbers = #tpu.dot_dimension_numbers<[1], [0], [0], [1], [0, 0, 1, 1], [], []>} : vector<16x16xf32>, vector<16x1xf32>, vector<16x1xf32> -> vector<16x1xf32>
    %cst_131 = arith.constant dense<0.000000e+00> : vector<16x1xf32>
    %343 = tpu.matmul %8, %220, %cst_131 {dimension_numbers = #tpu.dot_dimension_numbers<[1], [0], [0], [1], [0, 0, 1, 1], [], []>} : vector<16x16xf32>, vector<16x1xf32>, vector<16x1xf32> -> vector<16x1xf32>
    %cst_132 = arith.constant 5.000000e-01 : f32
    %344 = vector.broadcast %cst_132 : f32 to vector<16x1xf32>
    %345 = arith.mulf %344, %343 : vector<16x1xf32>
    %346 = math.ceil %345 : vector<16x1xf32>
    %cst_133 = arith.constant 0.000000e+00 : f32
    %347 = vector.broadcast %cst_133 : f32 to vector<16x1xf32>
    %348 = arith.cmpf ogt, %220, %347 : vector<16x1xf32>
    %349 = arith.cmpf olt, %342, %346 : vector<16x1xf32>
    %350 = arith.andi %348, %349 : vector<16x1xi1>
    %cst_134 = arith.constant 1.000000e+00 : f32
    %cst_135 = arith.constant 0.000000e+00 : f32
    %351 = vector.broadcast %cst_134 : f32 to vector<16x1xf32>
    %352 = vector.broadcast %cst_135 : f32 to vector<16x1xf32>
    %353 = arith.select %350, %351, %352 : vector<16x1xi1>, vector<16x1xf32>
    %354 = math.tanh %330 : vector<16x1xf32>
    %355 = vector.broadcast %354 : vector<16x1xf32> to vector<16x32xf32>
    %356 = arith.mulf %315, %355 : vector<16x32xf32>
    %357 = vector.broadcast %353 : vector<16x1xf32> to vector<16x32xf32>
    %358 = arith.mulf %356, %357 : vector<16x32xf32>
    %cst_136 = arith.constant dense<0.000000e+00> : vector<2x32xf32>
    %359 = tpu.matmul %18, %358, %cst_136 {dimension_numbers = #tpu.dot_dimension_numbers<[1], [0], [0], [1], [0, 0, 1, 1], [], []>} : vector<2x16xf32>, vector<16x32xf32>, vector<2x32xf32> -> vector<2x32xf32>
    %360 = arith.addf %227, %359 : vector<2x32xf32>
    %cst_137 = arith.constant 0.000000e+00 : f32
    %361 = vector.broadcast %cst_137 : f32 to vector<2x32xf32>
    %c0_i32_138 = arith.constant 0 : i32
    %362 = vector.broadcast %c0_i32_138 : i32 to vector<16x1xi32>
    %363 = arith.cmpi eq, %2, %362 : vector<16x1xi32>
    %364 = arith.extui %363 : vector<16x1xi1> to vector<16x1xi32>
    %365 = arith.sitofp %364 : vector<16x1xi32> to vector<16x1xf32>
    %366 = arith.mulf %365, %353 : vector<16x1xf32>
    %cst_139 = arith.constant 1.000000e+00 : f32
    %367 = vector.broadcast %cst_139 : f32 to vector<16x1xf32>
    %368 = arith.subf %366, %367 : vector<16x1xf32>
    %cst_140 = arith.constant 3.000000e+38 : f32
    %369 = vector.broadcast %cst_140 : f32 to vector<16x1xf32>
    %370 = arith.mulf %368, %369 : vector<16x1xf32>
    %371 = vector.broadcast %370 : vector<16x1xf32> to vector<16x32xf32>
    %372 = arith.addf %358, %371 : vector<16x32xf32>
    %cst_141 = arith.constant dense<0xFF800000> : vector<32xf32>
    %373 = vector.multi_reduction <maximumf>, %372, %cst_141 [0] : vector<16x32xf32> to vector<32xf32>
    %374 = vector.shape_cast %373 : vector<32xf32> to vector<1x32xf32>
    %cst_142 = arith.constant dense<0xFF800000> : vector<1xf32>
    %375 = vector.multi_reduction <maximumf>, %366, %cst_142 [0] : vector<16x1xf32> to vector<1xf32>
    %376 = vector.shape_cast %375 : vector<1xf32> to vector<1x1xf32>
    %cst_143 = arith.constant 0.000000e+00 : f32
    %377 = vector.broadcast %cst_143 : f32 to vector<1x1xf32>
    %378 = arith.cmpf ogt, %376, %377 : vector<1x1xf32>
    %cst_144 = arith.constant 0.000000e+00 : f32
    %379 = vector.shape_cast %378 : vector<1x1xi1> to vector<1x1xi1>
    %380 = vector.broadcast %379 : vector<1x1xi1> to vector<1x32xi1>
    %381 = vector.broadcast %cst_144 : f32 to vector<1x32xf32>
    %382 = arith.select %380, %374, %381 : vector<1x32xi1>, vector<1x32xf32>
    %c0_i32_145 = arith.constant 0 : i32
    %383 = vector.broadcast %c0_i32_145 : i32 to vector<2x1xi32>
    %384 = arith.cmpi eq, %19, %383 : vector<2x1xi32>
    %cst_146 = arith.constant 0.000000e+00 : f32
    %385 = vector.shape_cast %384 : vector<2x1xi1> to vector<2x1xi1>
    %386 = vector.broadcast %385 : vector<2x1xi1> to vector<2x32xi1>
    %387 = vector.shape_cast %382 : vector<1x32xf32> to vector<1x32xf32>
    %388 = vector.broadcast %387 : vector<1x32xf32> to vector<2x32xf32>
    %389 = vector.broadcast %cst_146 : f32 to vector<2x32xf32>
    %390 = arith.select %386, %388, %389 : vector<2x32xi1>, vector<2x32xf32>
    %391 = arith.addf %361, %390 : vector<2x32xf32>
    %c1_i32_147 = arith.constant 1 : i32
    %392 = vector.broadcast %c1_i32_147 : i32 to vector<16x1xi32>
    %393 = arith.cmpi eq, %2, %392 : vector<16x1xi32>
    %394 = arith.extui %393 : vector<16x1xi1> to vector<16x1xi32>
    %395 = arith.sitofp %394 : vector<16x1xi32> to vector<16x1xf32>
    %396 = arith.mulf %395, %353 : vector<16x1xf32>
    %cst_148 = arith.constant 1.000000e+00 : f32
    %397 = vector.broadcast %cst_148 : f32 to vector<16x1xf32>
    %398 = arith.subf %396, %397 : vector<16x1xf32>
    %cst_149 = arith.constant 3.000000e+38 : f32
    %399 = vector.broadcast %cst_149 : f32 to vector<16x1xf32>
    %400 = arith.mulf %398, %399 : vector<16x1xf32>
    %401 = vector.broadcast %400 : vector<16x1xf32> to vector<16x32xf32>
    %402 = arith.addf %358, %401 : vector<16x32xf32>
    %cst_150 = arith.constant dense<0xFF800000> : vector<32xf32>
    %403 = vector.multi_reduction <maximumf>, %402, %cst_150 [0] : vector<16x32xf32> to vector<32xf32>
    %404 = vector.shape_cast %403 : vector<32xf32> to vector<1x32xf32>
    %cst_151 = arith.constant dense<0xFF800000> : vector<1xf32>
    %405 = vector.multi_reduction <maximumf>, %396, %cst_151 [0] : vector<16x1xf32> to vector<1xf32>
    %406 = vector.shape_cast %405 : vector<1xf32> to vector<1x1xf32>
    %cst_152 = arith.constant 0.000000e+00 : f32
    %407 = vector.broadcast %cst_152 : f32 to vector<1x1xf32>
    %408 = arith.cmpf ogt, %406, %407 : vector<1x1xf32>
    %cst_153 = arith.constant 0.000000e+00 : f32
    %409 = vector.shape_cast %408 : vector<1x1xi1> to vector<1x1xi1>
    %410 = vector.broadcast %409 : vector<1x1xi1> to vector<1x32xi1>
    %411 = vector.broadcast %cst_153 : f32 to vector<1x32xf32>
    %412 = arith.select %410, %404, %411 : vector<1x32xi1>, vector<1x32xf32>
    %c1_i32_154 = arith.constant 1 : i32
    %413 = vector.broadcast %c1_i32_154 : i32 to vector<2x1xi32>
    %414 = arith.cmpi eq, %19, %413 : vector<2x1xi32>
    %cst_155 = arith.constant 0.000000e+00 : f32
    %415 = vector.shape_cast %414 : vector<2x1xi1> to vector<2x1xi1>
    %416 = vector.broadcast %415 : vector<2x1xi1> to vector<2x32xi1>
    %417 = vector.shape_cast %412 : vector<1x32xf32> to vector<1x32xf32>
    %418 = vector.broadcast %417 : vector<1x32xf32> to vector<2x32xf32>
    %419 = vector.broadcast %cst_155 : f32 to vector<2x32xf32>
    %420 = arith.select %416, %418, %419 : vector<2x32xi1>, vector<2x32xf32>
    %421 = arith.addf %391, %420 : vector<2x32xf32>
    %422 = arith.addf %289, %421 : vector<2x32xf32>
    %c0_156 = arith.constant 0 : index
    %c0_157 = arith.constant 0 : index
    %423 = vector.load %arg20[%c0_156, %c0_157] : memref<32x64xf32, #tpu.memory_space<vmem>>, vector<32x64xf32>
    %cst_158 = arith.constant dense<0.000000e+00> : vector<2x64xf32>
    %424 = tpu.matmul %422, %423, %cst_158 {dimension_numbers = #tpu.dot_dimension_numbers<[1], [0], [0], [1], [0, 0, 1, 1], [], []>} : vector<2x32xf32>, vector<32x64xf32>, vector<2x64xf32> -> vector<2x64xf32>
    %c0_159 = arith.constant 0 : index
    %c0_160 = arith.constant 0 : index
    %425 = vector.load %arg21[%c0_159, %c0_160] : memref<32x64xf32, #tpu.memory_space<vmem>>, vector<32x64xf32>
    %cst_161 = arith.constant dense<0.000000e+00> : vector<2x64xf32>
    %426 = tpu.matmul %360, %425, %cst_161 {dimension_numbers = #tpu.dot_dimension_numbers<[1], [0], [0], [1], [0, 0, 1, 1], [], []>} : vector<2x32xf32>, vector<32x64xf32>, vector<2x64xf32> -> vector<2x64xf32>
    %427 = arith.addf %424, %426 : vector<2x64xf32>
    %c0_162 = arith.constant 0 : index
    %c0_163 = arith.constant 0 : index
    %428 = vector.load %arg22[%c0_162, %c0_163] : memref<8x64xf32, #tpu.memory_space<vmem>>, vector<8x64xf32>
    %cst_164 = arith.constant dense<0.000000e+00> : vector<2x64xf32>
    %429 = tpu.matmul %3, %428, %cst_164 {dimension_numbers = #tpu.dot_dimension_numbers<[1], [0], [0], [1], [0, 0, 1, 1], [], []>} : vector<2x8xf32>, vector<8x64xf32>, vector<2x64xf32> -> vector<2x64xf32>
    %430 = arith.addf %427, %429 : vector<2x64xf32>
    %c0_165 = arith.constant 0 : index
    %c0_166 = arith.constant 0 : index
    %431 = vector.load %arg23[%c0_165, %c0_166] : memref<1x64xf32, #tpu.memory_space<vmem>>, vector<1x64xf32>
    %432 = vector.broadcast %431 : vector<1x64xf32> to vector<2x64xf32>
    %433 = arith.addf %430, %432 : vector<2x64xf32>
    %cst_167 = arith.constant 0.000000e+00 : f32
    %434 = vector.broadcast %cst_167 : f32 to vector<2x64xf32>
    %435 = arith.maximumf %433, %434 : vector<2x64xf32>
    %c0_168 = arith.constant 0 : index
    %c0_169 = arith.constant 0 : index
    %436 = vector.load %arg24[%c0_168, %c0_169] : memref<64x64xf32, #tpu.memory_space<vmem>>, vector<64x64xf32>
    %cst_170 = arith.constant dense<0.000000e+00> : vector<2x64xf32>
    %437 = tpu.matmul %435, %436, %cst_170 {dimension_numbers = #tpu.dot_dimension_numbers<[1], [0], [0], [1], [0, 0, 1, 1], [], []>} : vector<2x64xf32>, vector<64x64xf32>, vector<2x64xf32> -> vector<2x64xf32>
    %c0_171 = arith.constant 0 : index
    %c0_172 = arith.constant 0 : index
    %438 = vector.load %arg25[%c0_171, %c0_172] : memref<1x64xf32, #tpu.memory_space<vmem>>, vector<1x64xf32>
    %439 = vector.broadcast %438 : vector<1x64xf32> to vector<2x64xf32>
    %440 = arith.addf %437, %439 : vector<2x64xf32>
    %cst_173 = arith.constant 0.000000e+00 : f32
    %441 = vector.broadcast %cst_173 : f32 to vector<2x64xf32>
    %442 = arith.maximumf %440, %441 : vector<2x64xf32>
    %c0_174 = arith.constant 0 : index
    %c0_175 = arith.constant 0 : index
    %443 = vector.load %arg26[%c0_174, %c0_175] : memref<64x1xf32, #tpu.memory_space<vmem>>, vector<64x1xf32>
    %cst_176 = arith.constant dense<0.000000e+00> : vector<2x1xf32>
    %444 = tpu.matmul %442, %443, %cst_176 {dimension_numbers = #tpu.dot_dimension_numbers<[1], [0], [0], [1], [0, 0, 1, 1], [], []>} : vector<2x64xf32>, vector<64x1xf32>, vector<2x1xf32> -> vector<2x1xf32>
    %c0_177 = arith.constant 0 : index
    %c0_178 = arith.constant 0 : index
    %445 = vector.load %arg27[%c0_177, %c0_178] : memref<1x1xf32, #tpu.memory_space<vmem>>, vector<1x1xf32>
    %446 = vector.broadcast %445 : vector<1x1xf32> to vector<2x1xf32>
    %447 = arith.addf %444, %446 : vector<2x1xf32>
    %c0_179 = arith.constant 0 : index
    %c0_180 = arith.constant 0 : index
    %448 = vector.load %arg28[%c0_179, %c0_180] : memref<2x1xf32, #tpu.memory_space<vmem>>, vector<2x1xf32>
    tpu.vector_store %arg28[%c0_179, %c0_180], %447 {strides = array<i32>} : memref<2x1xf32, #tpu.memory_space<vmem>>, vector<2x1xf32>,
    return
  }
}

</mosaic_0001>

<llo_original>
// kernel: hiernet_forward.1
$region0: #{hiernet_forward.1}
  #allocation0 [shape = 'u32[]', space=smem, size = 0x4, offset = 0x4, fixed_abs, tag = 'smem constant byte address 0x4 - core index']
  #allocation1 [shape = 'u32[144,128]{1,0:T(1,128)}', space=vmem, size = 0x12000, scoped, tag = 'internal scratch']
  #allocation2 [shape = 'f32[1,1]{1,0:T(1,128)S(1)}', space=vmem, size = 0x200, scoped, tag = 'scoped memory for hiernet_forward.1']
  #allocation3 [shape = 'f32[1,1]{1,0:T(1,128)S(1)}', space=vmem, size = 0x200, scoped, tag = 'scoped memory for hiernet_forward.1']
  #allocation4 [shape = 'f32[1,1]{1,0:T(1,128)S(1)}', space=vmem, size = 0x200, scoped, tag = 'scoped memory for hiernet_forward.1']
  #allocation5 [shape = 'f32[1,1]{1,0:T(1,128)S(1)}', space=vmem, size = 0x200, scoped, tag = 'scoped memory for hiernet_forward.1']
  %s0 = inlined_call_operand.vmem [shape: f32[16,16], index: 0, kind: input, shape index: {}]
  %s1 = inlined_call_operand.vmem [shape: s32[1,16], index: 1, kind: input, shape index: {}]
  %s2 = inlined_call_operand.vmem [shape: s32[16,1], index: 2, kind: input, shape index: {}]
  %s3 = inlined_call_operand.vmem [shape: f32[16,4], index: 3, kind: input, shape index: {}]
  %s4 = inlined_call_operand.vmem [shape: f32[2,8], index: 4, kind: input, shape index: {}]
  %s5 = inlined_call_operand.hbm [shape: f32[4,32], index: 5, kind: input, shape index: {}]
  %s6 = inlined_call_operand.hbm [shape: f32[1,32], index: 6, kind: input, shape index: {}]
  %s7 = inlined_call_operand.hbm [shape: f32[1,32], index: 7, kind: input, shape index: {}]
  %s8 = inlined_call_operand.<no memory space> [shape: f32[1,1], index: 8, kind: input, shape index: {}]
  %s9 = inlined_call_operand.hbm [shape: f32[1,32], index: 9, kind: input, shape index: {}]
  %s10 = inlined_call_operand.vmem [shape: f32[32,32], index: 10, kind: input, shape index: {}]
  %s11 = inlined_call_operand.hbm [shape: f32[1,32], index: 11, kind: input, shape index: {}]
  %s12 = inlined_call_operand.hbm [shape: f32[1,32], index: 12, kind: input, shape index: {}]
  %s13 = inlined_call_operand.<no memory space> [shape: f32[1,1], index: 13, kind: input, shape index: {}]
  %s14 = inlined_call_operand.hbm [shape: f32[1,32], index: 14, kind: input, shape index: {}]
  %s15 = inlined_call_operand.vmem [shape: f32[32,32], index: 15, kind: input, shape index: {}]
  %s16 = inlined_call_operand.hbm [shape: f32[1,32], index: 16, kind: input, shape index: {}]
  %s17 = inlined_call_operand.hbm [shape: f32[1,32], index: 17, kind: input, shape index: {}]
  %s18 = inlined_call_operand.<no memory space> [shape: f32[1,1], index: 18, kind: input, shape index: {}]
  %s19 = inlined_call_operand.hbm [shape: f32[1,32], index: 19, kind: input, shape index: {}]
  %s20 = inlined_call_operand.vmem [shape: f32[32,64], index: 20, kind: input, shape index: {}]
  %s21 = inlined_call_operand.hbm [shape: f32[32,64], index: 21, kind: input, shape index: {}]
  %s22 = inlined_call_operand.hbm [shape: f32[8,64], index: 22, kind: input, shape index: {}]
  %s23 = inlined_call_operand.hbm [shape: f32[1,64], index: 23, kind: input, shape index: {}]
  %s24 = inlined_call_operand.vmem [shape: f32[64,64], index: 24, kind: input, shape index: {}]
  %s25 = inlined_call_operand.vmem [shape: f32[1,64], index: 25, kind: input, shape index: {}]
  %s26 = inlined_call_operand.vmem [shape: f32[64,1], index: 26, kind: input, shape index: {}]
  %s27 = inlined_call_operand.<no memory space> [shape: f32[1,1], index: 27, kind: input, shape index: {}]
  %s28 = inlined_call_operand.vmem [shape: f32[2,1], index: 28, kind: output, shape index: {}]
  %s29 = sld [smem:[#allocation0]]
  $region174: #{hiernet_forward.1} parent=0
    _
  %s31 = ssub.s32 1, %s29
  %s32 = scalar_select 0, %s31, %s29
  %v33 = vstv %s8
  %34 = vst [vmem:[#allocation2] sm:$0x1] %v33
  %v35 = vstv %s13
  %36 = vst [vmem:[#allocation3] sm:$0x1] %v35
  %v37 = vstv %s18
  %38 = vst [vmem:[#allocation4] sm:$0x1] %v37
  %v39 = vstv %s27
  %40 = vst [vmem:[#allocation5] sm:$0x1] %v39
  $region1: #{hiernet_forward.1} parent=0
    #allocation6 [shape = 'u8[2048]{0}', space=vmem, size = 0x800, scoped, tag = 'input window, operand 5, single buffered']
    #allocation7 [shape = 's32[1]{0}', space=sflag, size = 0x4, scoped, tag = 'scoped memory for hiernet_forward.1']
    #allocation8 [shape = 'u8[512]{0}', space=vmem, size = 0x400, scoped, tag = 'input window, operand 6, single buffered']
    #allocation9 [shape = 's32[1]{0}', space=sflag, size = 0x4, scoped, tag = 'scoped memory for hiernet_forward.1']
    #allocation10 [shape = 'u8[512]{0}', space=vmem, size = 0x400, scoped, tag = 'input window, operand 7, single buffered']
    #allocation11 [shape = 'u8[512]{0}', space=vmem, size = 0x400, scoped, tag = 'input window, operand 9, single buffered']
    #allocation12 [shape = 's32[1]{0}', space=sflag, size = 0x4, scoped, tag = 'scoped memory for hiernet_forward.1']
    #allocation13 [shape = 'u8[512]{0}', space=vmem, size = 0x400, scoped, tag = 'input window, operand 11, single buffered']
    #allocation14 [shape = 'u8[512]{0}', space=vmem, size = 0x400, scoped, tag = 'input window, operand 12, single buffered']
    #allocation15 [shape = 's32[1]{0}', space=sflag, size = 0x4, scoped, tag = 'scoped memory for hiernet_forward.1']
    #allocation16 [shape = 'u8[512]{0}', space=vmem, size = 0x400, scoped, tag = 'input window, operand 14, single buffered']
    #allocation17 [shape = 'u8[512]{0}', space=vmem, size = 0x400, scoped, tag = 'input window, operand 16, single buffered']
    #allocation18 [shape = 's32[1]{0}', space=sflag, size = 0x4, scoped, tag = 'scoped memory for hiernet_forward.1']
    #allocation19 [shape = 'u8[512]{0}', space=vmem, size = 0x400, scoped, tag = 'input window, operand 17, single buffered']
    #allocation20 [shape = 'u8[512]{0}', space=vmem, size = 0x400, scoped, tag = 'input window, operand 19, single buffered']
    #allocation21 [shape = 's32[1]{0}', space=sflag, size = 0x4, scoped, tag = 'scoped memory for hiernet_forward.1']
    #allocation22 [shape = 'u8[16384]{0}', space=vmem, size = 0x4000, scoped, tag = 'input window, operand 21, single buffered']
    #allocation23 [shape = 'u8[4096]{0}', space=vmem, size = 0x1000, scoped, tag = 'input window, operand 22, single buffered']
    #allocation24 [shape = 's32[1]{0}', space=sflag, size = 0x4, scoped, tag = 'scoped memory for hiernet_forward.1']
    #allocation25 [shape = 'u8[512]{0}', space=vmem, size = 0x400, scoped, tag = 'input window, operand 23, single buffered']
    %41 = vsyncpa [#allocation7], 0
    %42 = vsyncpa [#allocation9], 0
    %43 = vsyncpa [#allocation12], 0
    %44 = vsyncpa [#allocation15], 0
    %45 = vsyncpa [#allocation18], 0
    %46 = vsyncpa [#allocation21], 0
    %47 = vsyncpa [#allocation24], 0
    // Predicated region
    $region2: #{hiernet_forward.1} parent=1 // pred_check
      _
    $region3: #{hiernet_forward.1} parent=1 // pred_check_branch
      %49 = sbr.rel (0) target = $region5
    $region4: #{hiernet_forward.1} parent=1 // pred_region
      _
    $region5: #{hiernet_forward.1} parent=1 // pred_fallthru
      _
    // Predicated region
    $region6: #{hiernet_forward.1} parent=1 // pred_check
      _
    $region7: #{hiernet_forward.1} parent=1 // pred_check_branch
      %51 = sbr.rel (0) target = $region9
    $region8: #{hiernet_forward.1} parent=1 // pred_region
      _
    $region9: #{hiernet_forward.1} parent=1 // pred_fallthru
      _
    // Predicated region
    $region10: #{hiernet_forward.1} parent=1 // pred_check
      _
    $region11: #{hiernet_forward.1} parent=1 // pred_check_branch
      %53 = sbr.rel (0) target = $region13
    $region12: #{hiernet_forward.1} parent=1 // pred_region
      _
    $region13: #{hiernet_forward.1} parent=1 // pred_fallthru
      _
    // Predicated region
    $region14: #{hiernet_forward.1} parent=1 // pred_check
      _
    $region15: #{hiernet_forward.1} parent=1 // pred_check_branch
      %55 = sbr.rel (0) target = $region17
    $region16: #{hiernet_forward.1} parent=1 // pred_region
      _
    $region17: #{hiernet_forward.1} parent=1 // pred_fallthru
      _
    // Predicated region
    $region18: #{hiernet_forward.1} parent=1 // pred_check
      _
    $region19: #{hiernet_forward.1} parent=1 // pred_check_branch
      %57 = sbr.rel (0) target = $region21
    $region20: #{hiernet_forward.1} parent=1 // pred_region
      _
    $region21: #{hiernet_forward.1} parent=1 // pred_fallthru
      _
    // Predicated region
    $region22: #{hiernet_forward.1} parent=1 // pred_check
      _
    $region23: #{hiernet_forward.1} parent=1 // pred_check_branch
      %59 = sbr.rel (0) target = $region25
    $region24: #{hiernet_forward.1} parent=1 // pred_region
      %s61 = ssub.s32 64, 64
      %62 = vsyncadd [#allocation7], %s61
      %s64 = sshll.u32 [#allocation6], 4
      %s65 = int_to_ptr.vmem [resolvable:$true] %s64
      %67 = dma.hbm_to_vmem [thread:$0]  %s5, 64, %s65, [#allocation7]
    $region25: #{hiernet_forward.1} parent=1 // pred_fallthru
      _
    // Predicated region
    $region26: #{hiernet_forward.1} parent=1 // pred_check
      _
    $region27: #{hiernet_forward.1} parent=1 // pred_check_branch
      %69 = sbr.rel (0) target = $region29
    $region28: #{hiernet_forward.1} parent=1 // pred_region
      %s71 = ssub.s32 16, 16
      %72 = vsyncadd [#allocation9], %s71
      %s74 = sshll.u32 [#allocation8], 4
      %s75 = int_to_ptr.vmem [resolvable:$true] %s74
      %77 = dma.hbm_to_vmem [thread:$0]  %s6, 16, %s75, [#allocation9]
    $region29: #{hiernet_forward.1} parent=1 // pred_fallthru
      _
    // Predicated region
    $region30: #{hiernet_forward.1} parent=1 // pred_check
      _
    $region31: #{hiernet_forward.1} parent=1 // pred_check_branch
      %79 = sbr.rel (0) target = $region33
    $region32: #{hiernet_forward.1} parent=1 // pred_region
      %s81 = ssub.s32 16, 16
      %82 = vsyncadd [#allocation9], %s81
      %s84 = sshll.u32 [#allocation10], 4
      %s85 = int_to_ptr.vmem [resolvable:$true] %s84
      %87 = dma.hbm_to_vmem [thread:$0]  %s7, 16, %s85, [#allocation9]
    $region33: #{hiernet_forward.1} parent=1 // pred_fallthru
      _
    // Predicated region
    $region34: #{hiernet_forward.1} parent=1 // pred_check
      _
    $region35: #{hiernet_forward.1} parent=1 // pred_check_branch
      %89 = sbr.rel (0) target = $region37
    $region36: #{hiernet_forward.1} parent=1 // pred_region
      _
    $region37: #{hiernet_forward.1} parent=1 // pred_fallthru
      _
    // Predicated region
    $region38: #{hiernet_forward.1} parent=1 // pred_check
      _
    $region39: #{hiernet_forward.1} parent=1 // pred_check_branch
      %91 = sbr.rel (0) target = $region41
    $region40: #{hiernet_forward.1} parent=1 // pred_region
      %s93 = ssub.s32 16, 16
      %94 = vsyncadd [#allocation12], %s93
      %s96 = sshll.u32 [#allocation11], 4
      %s97 = int_to_ptr.vmem [resolvable:$true] %s96
      %99 = dma.hbm_to_vmem [thread:$0]  %s9, 16, %s97, [#allocation12]
    $region41: #{hiernet_forward.1} parent=1 // pred_fallthru
      _
    // Predicated region
    $region42: #{hiernet_forward.1} parent=1 // pred_check
      _
    $region43: #{hiernet_forward.1} parent=1 // pred_check_branch
      %101 = sbr.rel (0) target = $region45
    $region44: #{hiernet_forward.1} parent=1 // pred_region
      _
    $region45: #{hiernet_forward.1} parent=1 // pred_fallthru
      _
    // Predicated region
    $region46: #{hiernet_forward.1} parent=1 // pred_check
      _
    $region47: #{hiernet_forward.1} parent=1 // pred_check_branch
      %103 = sbr.rel (0) target = $region49
    $region48: #{hiernet_forward.1} parent=1 // pred_region
      %s105 = ssub.s32 16, 16
      %106 = vsyncadd [#allocation12], %s105
      %s108 = sshll.u32 [#allocation13], 4
      %s109 = int_to_ptr.vmem [resolvable:$true] %s108
      %111 = dma.hbm_to_vmem [thread:$0]  %s11, 16, %s109, [#allocation12]
    $region49: #{hiernet_forward.1} parent=1 // pred_fallthru
      _
    // Predicated region
    $region50: #{hiernet_forward.1} parent=1 // pred_check
      _
    $region51: #{hiernet_forward.1} parent=1 // pred_check_branch
      %113 = sbr.rel (0) target = $region53
    $region52: #{hiernet_forward.1} parent=1 // pred_region
      %s115 = ssub.s32 16, 16
      %116 = vsyncadd [#allocation15], %s115
      %s118 = sshll.u32 [#allocation14], 4
      %s119 = int_to_ptr.vmem [resolvable:$true] %s118
      %121 = dma.hbm_to_vmem [thread:$0]  %s12, 16, %s119, [#allocation15]
    $region53: #{hiernet_forward.1} parent=1 // pred_fallthru
      _
    // Predicated region
    $region54: #{hiernet_forward.1} parent=1 // pred_check
      _
    $region55: #{hiernet_forward.1} parent=1 // pred_check_branch
      %123 = sbr.rel (0) target = $region57
    $region56: #{hiernet_forward.1} parent=1 // pred_region
      _
    $region57: #{hiernet_forward.1} parent=1 // pred_fallthru
      _
    // Predicated region
    $region58: #{hiernet_forward.1} parent=1 // pred_check
      _
    $region59: #{hiernet_forward.1} parent=1 // pred_check_branch
      %125 = sbr.rel (0) target = $region61
    $region60: #{hiernet_forward.1} parent=1 // pred_region
      %s127 = ssub.s32 16, 16
      %128 = vsyncadd [#allocation15], %s127
      %s130 = sshll.u32 [#allocation16], 4
      %s131 = int_to_ptr.vmem [resolvable:$true] %s130
      %133 = dma.hbm_to_vmem [thread:$0]  %s14, 16, %s131, [#allocation15]
    $region61: #{hiernet_forward.1} parent=1 // pred_fallthru
      _
    // Predicated region
    $region62: #{hiernet_forward.1} parent=1 // pred_check
      _
    $region63: #{hiernet_forward.1} parent=1 // pred_check_branch
      %135 = sbr.rel (0) target = $region65
    $region64: #{hiernet_forward.1} parent=1 // pred_region
      _
    $region65: #{hiernet_forward.1} parent=1 // pred_fallthru
      _
    // Predicated region
    $region66: #{hiernet_forward.1} parent=1 // pred_check
      _
    $region67: #{hiernet_forward.1} parent=1 // pred_check_branch
      %137 = sbr.rel (0) target = $region69
    $region68: #{hiernet_forward.1} parent=1 // pred_region
      %s139 = ssub.s32 16, 16
      %140 = vsyncadd [#allocation18], %s139
      %s142 = sshll.u32 [#allocation17], 4
      %s143 = int_to_ptr.vmem [resolvable:$true] %s142
      %145 = dma.hbm_to_vmem [thread:$0]  %s16, 16, %s143, [#allocation18]
    $region69: #{hiernet_forward.1} parent=1 // pred_fallthru
      _
    // Predicated region
    $region70: #{hiernet_forward.1} parent=1 // pred_check
      _
    $region71: #{hiernet_forward.1} parent=1 // pred_check_branch
      %147 = sbr.rel (0) target = $region73
    $region72: #{hiernet_forward.1} parent=1 // pred_region
      %s149 = ssub.s32 16, 16
      %150 = vsyncadd [#allocation18], %s149
      %s152 = sshll.u32 [#allocation19], 4
      %s153 = int_to_ptr.vmem [resolvable:$true] %s152
      %155 = dma.hbm_to_vmem [thread:$0]  %s17, 16, %s153, [#allocation18]
    $region73: #{hiernet_forward.1} parent=1 // pred_fallthru
      _
    // Predicated region
    $region74: #{hiernet_forward.1} parent=1 // pred_check
      _
    $region75: #{hiernet_forward.1} parent=1 // pred_check_branch
      %157 = sbr.rel (0) target = $region77
    $region76: #{hiernet_forward.1} parent=1 // pred_region
      _
    $region77: #{hiernet_forward.1} parent=1 // pred_fallthru
      _
    // Predicated region
    $region78: #{hiernet_forward.1} parent=1 // pred_check
      _
    $region79: #{hiernet_forward.1} parent=1 // pred_check_branch
      %159 = sbr.rel (0) target = $region81
    $region80: #{hiernet_forward.1} parent=1 // pred_region
      %s161 = ssub.s32 16, 16
      %162 = vsyncadd [#allocation21], %s161
      %s164 = sshll.u32 [#allocation20], 4
      %s165 = int_to_ptr.vmem [resolvable:$true] %s164
      %167 = dma.hbm_to_vmem [thread:$0]  %s19, 16, %s165, [#allocation21]
    $region81: #{hiernet_forward.1} parent=1 // pred_fallthru
      _
    // Predicated region
    $region82: #{hiernet_forward.1} parent=1 // pred_check
      _
    $region83: #{hiernet_forward.1} parent=1 // pred_check_branch
      %169 = sbr.rel (0) target = $region85
    $region84: #{hiernet_forward.1} parent=1 // pred_region
      _
    $region85: #{hiernet_forward.1} parent=1 // pred_fallthru
      _
    // Predicated region
    $region86: #{hiernet_forward.1} parent=1 // pred_check
      _
    $region87: #{hiernet_forward.1} parent=1 // pred_check_branch
      %171 = sbr.rel (0) target = $region89
    $region88: #{hiernet_forward.1} parent=1 // pred_region
      %s173 = ssub.s32 512, 512
      %174 = vsyncadd [#allocation21], %s173
      %s175 = sshll.u32 [#allocation22], 4
      %s176 = int_to_ptr.vmem [resolvable:$true] %s175
      %181 = dma.hbm_to_vmem [thread:$0]  %s21, 512, %s176, [#allocation21], 128, 128, 8
    $region89: #{hiernet_forward.1} parent=1 // pred_fallthru
      _
    // Predicated region
    $region90: #{hiernet_forward.1} parent=1 // pred_check
      _
    $region91: #{hiernet_forward.1} parent=1 // pred_check_branch
      %183 = sbr.rel (0) target = $region93
    $region92: #{hiernet_forward.1} parent=1 // pred_region
      %s185 = ssub.s32 128, 128
      %186 = vsyncadd [#allocation24], %s185
      %s188 = sshll.u32 [#allocation23], 4
      %s189 = int_to_ptr.vmem [resolvable:$true] %s188
      %191 = dma.hbm_to_vmem [thread:$0]  %s22, 128, %s189, [#allocation24]
    $region93: #{hiernet_forward.1} parent=1 // pred_fallthru
      _
    // Predicated region
    $region94: #{hiernet_forward.1} parent=1 // pred_check
      _
    $region95: #{hiernet_forward.1} parent=1 // pred_check_branch
      %193 = sbr.rel (0) target = $region97
    $region96: #{hiernet_forward.1} parent=1 // pred_region
      %s195 = ssub.s32 16, 16
      %196 = vsyncadd [#allocation24], %s195
      %s198 = sshll.u32 [#allocation25], 4
      %s199 = int_to_ptr.vmem [resolvable:$true] %s198
      %201 = dma.hbm_to_vmem [thread:$0]  %s23, 16, %s199, [#allocation24]
    $region97: #{hiernet_forward.1} parent=1 // pred_fallthru
      _
    // Predicated region
    $region98: #{hiernet_forward.1} parent=1 // pred_check
      _
    $region99: #{hiernet_forward.1} parent=1 // pred_check_branch
      %203 = sbr.rel (0) target = $region101
    $region100: #{hiernet_forward.1} parent=1 // pred_region
      _
    $region101: #{hiernet_forward.1} parent=1 // pred_fallthru
      _
    // Predicated region
    $region102: #{hiernet_forward.1} parent=1 // pred_check
      _
    $region103: #{hiernet_forward.1} parent=1 // pred_check_branch
      %205 = sbr.rel (0) target = $region105
    $region104: #{hiernet_forward.1} parent=1 // pred_region
      _
    $region105: #{hiernet_forward.1} parent=1 // pred_fallthru
      _
    // Predicated region
    $region106: #{hiernet_forward.1} parent=1 // pred_check
      _
    $region107: #{hiernet_forward.1} parent=1 // pred_check_branch
      %207 = sbr.rel (0) target = $region109
    $region108: #{hiernet_forward.1} parent=1 // pred_region
      _
    $region109: #{hiernet_forward.1} parent=1 // pred_fallthru
      _
    // Predicated region
    $region110: #{hiernet_forward.1} parent=1 // pred_check
      _
    $region111: #{hiernet_forward.1} parent=1 // pred_check_branch
      %209 = sbr.rel (0) target = $region113
    $region112: #{hiernet_forward.1} parent=1 // pred_region
      _
    $region113: #{hiernet_forward.1} parent=1 // pred_fallthru
      _
    // Predicated region
    $region114: #{hiernet_forward.1} parent=1 // pred_check
      _
    $region115: #{hiernet_forward.1} parent=1 // pred_check_branch
      %211 = sbr.rel (0) target = $region117
    $region116: #{hiernet_forward.1} parent=1 // pred_region
      %212 = dma.done [#allocation7], 64
    $region117: #{hiernet_forward.1} parent=1 // pred_fallthru
      _
    // Predicated region
    $region118: #{hiernet_forward.1} parent=1 // pred_check
      _
    $region119: #{hiernet_forward.1} parent=1 // pred_check_branch
      %214 = sbr.rel (0) target = $region121
    $region120: #{hiernet_forward.1} parent=1 // pred_region
      %215 = dma.done [#allocation9], 16
    $region121: #{hiernet_forward.1} parent=1 // pred_fallthru
      _
    // Predicated region
    $region122: #{hiernet_forward.1} parent=1 // pred_check
      _
    $region123: #{hiernet_forward.1} parent=1 // pred_check_branch
      %217 = sbr.rel (0) target = $region125
    $region124: #{hiernet_forward.1} parent=1 // pred_region
      %218 = dma.done [#allocation9], 16
    $region125: #{hiernet_forward.1} parent=1 // pred_fallthru
      _
    // Predicated region
    $region126: #{hiernet_forward.1} parent=1 // pred_check
      _
    $region127: #{hiernet_forward.1} parent=1 // pred_check_branch
      %220 = sbr.rel (0) target = $region129
    $region128: #{hiernet_forward.1} parent=1 // pred_region
      %221 = dma.done [#allocation12], 16
    $region129: #{hiernet_forward.1} parent=1 // pred_fallthru
      _
    // Predicated region
    $region130: #{hiernet_forward.1} parent=1 // pred_check
      _
    $region131: #{hiernet_forward.1} parent=1 // pred_check_branch
      %223 = sbr.rel (0) target = $region133
    $region132: #{hiernet_forward.1} parent=1 // pred_region
      %224 = dma.done [#allocation12], 16
    $region133: #{hiernet_forward.1} parent=1 // pred_fallthru
      _
    // Predicated region
    $region134: #{hiernet_forward.1} parent=1 // pred_check
      _
    $region135: #{hiernet_forward.1} parent=1 // pred_check_branch
      %226 = sbr.rel (0) target = $region137
    $region136: #{hiernet_forward.1} parent=1 // pred_region
      %227 = dma.done [#allocation15], 16
    $region137: #{hiernet_forward.1} parent=1 // pred_fallthru
      _
    // Predicated region
    $region138: #{hiernet_forward.1} parent=1 // pred_check
      _
    $region139: #{hiernet_forward.1} parent=1 // pred_check_branch
      %229 = sbr.rel (0) target = $region141
    $region140: #{hiernet_forward.1} parent=1 // pred_region
      %230 = dma.done [#allocation15], 16
    $region141: #{hiernet_forward.1} parent=1 // pred_fallthru
      _
    // Predicated region
    $region142: #{hiernet_forward.1} parent=1 // pred_check
      _
    $region143: #{hiernet_forward.1} parent=1 // pred_check_branch
      %232 = sbr.rel (0) target = $region145
    $region144: #{hiernet_forward.1} parent=1 // pred_region
      %233 = dma.done [#allocation18], 16
    $region145: #{hiernet_forward.1} parent=1 // pred_fallthru
      _
    // Predicated region
    $region146: #{hiernet_forward.1} parent=1 // pred_check
      _
    $region147: #{hiernet_forward.1} parent=1 // pred_check_branch
      %235 = sbr.rel (0) target = $region149
    $region148: #{hiernet_forward.1} parent=1 // pred_region
      %236 = dma.done [#allocation18], 16
    $region149: #{hiernet_forward.1} parent=1 // pred_fallthru
      _
    // Predicated region
    $region150: #{hiernet_forward.1} parent=1 // pred_check
      _
    $region151: #{hiernet_forward.1} parent=1 // pred_check_branch
      %238 = sbr.rel (0) target = $region153
    $region152: #{hiernet_forward.1} parent=1 // pred_region
      %239 = dma.done [#allocation21], 16
    $region153: #{hiernet_forward.1} parent=1 // pred_fallthru
      _
    // Predicated region
    $region154: #{hiernet_forward.1} parent=1 // pred_check
      _
    $region155: #{hiernet_forward.1} parent=1 // pred_check_branch
      %241 = sbr.rel (0) target = $region157
    $region156: #{hiernet_forward.1} parent=1 // pred_region
      %242 = dma.done [#allocation21], 512
    $region157: #{hiernet_forward.1} parent=1 // pred_fallthru
      _
    // Predicated region
    $region158: #{hiernet_forward.1} parent=1 // pred_check
      _
    $region159: #{hiernet_forward.1} parent=1 // pred_check_branch
      %244 = sbr.rel (0) target = $region161
    $region160: #{hiernet_forward.1} parent=1 // pred_region
      %245 = dma.done [#allocation24], 128
    $region161: #{hiernet_forward.1} parent=1 // pred_fallthru
      _
    // Predicated region
    $region162: #{hiernet_forward.1} parent=1 // pred_check
      _
    $region163: #{hiernet_forward.1} parent=1 // pred_check_branch
      %247 = sbr.rel (0) target = $region165
    $region164: #{hiernet_forward.1} parent=1 // pred_region
      %248 = dma.done [#allocation24], 16
    $region165: #{hiernet_forward.1} parent=1 // pred_fallthru
      _
    %v249 = vld [vmem:[%s0] sm:$0xff]
    %v250 = vld [vmem:[%s0 + $0x8] sm:$0xff]
    %v251 = vld [vmem:[%s1] sm:$0x1]
    %v252 = vld [vmem:[%s2] sm:$0xff]
    %v253 = vld [vmem:[%s2 + $0x8] sm:$0xff]
    %v254 = vld [vmem:[%s4] sm:$0x3]
    %255 = vset.pattern.permute.xlu0 0
    %256 = vperm.xlu0 %255, %v252
    %v257 = vpop.permute.xlu0 %256
    %258 = vset.pattern.permute.xlu0 0
    %259 = vperm.xlu0 %258, %v253
    %v260 = vpop.permute.xlu0 %259
    %v261 = vlaneseq
    %v262 = vshrl.u32 %v261, 7
    %v263 = vsub.s32 0, %v262
    %v264 = vrot.slane %v251, %v263
    %vm265 = vcmp.eq.s32.totalorder %v257, %v264
    %vm266 = vcmp.eq.s32.totalorder %v260, %v264
    %v267 = vsel %vm265, 1, 0
    %v268 = vsel %vm266, 1, 0
    %v269 = vcvt.s32.f32 %v267
    %v270 = vcvt.s32.f32 %v268
    %v271 = vlaneseq
    %v272 = vshrl.u32 %v271, 7
    %v273 = vadd.s32 %v272, 8
    %v274 = vlaneseq
    %v275 = vand.u32 %v274, 127
    %vm276 = vcmp.lt.s32.totalorder %v275, %v272
    %vm277 = vcmp.lt.s32.totalorder %v275, %v273
    %v278 = vsel %vm276, 1, 0
    %v279 = vsel %vm277, 1, 0
    %v280 = vcvt.s32.f32 %v278
    %v281 = vcvt.s32.f32 %v279
    %vm282 = vcmp.eq.s32.totalorder %v264, %v272
    %v283 = vsel %vm282, 1, 0
    %v284 = vcvt.s32.f32 %v283
    %v285 = vld [vmem:[%s3] sm:$0xff]
    %v286 = vld [vmem:[%s3 + $0x8] sm:$0xff]
    %vm287 = vcmask 130048
    %v289 = vsel %vm287, %v249, 0
    %v292 = vsel %vm287, %v250, 0
    %294 = vmatprep.subr.mxu0 0.0
    %295 = vmatpush1.msra.mxu0 1.0
    %296 = vmatprep.subr.mxu0 0.0
    %297 = vmatpush1.msra.mxu0 1.0
    %298 = vmatprep.subr.mxu0 0.0
    %299 = vmatpush1.msra.mxu0 0.0
    %300 = vmatprep.subr.mxu0 0.0
    %301 = vmatpush1.msra.mxu0 0.0
    %302 = vmatprep.subr.mxu0 0.0
    %303 = vmatpush1.msra.mxu0 0.0
    %304 = vmatprep.subr.mxu0 0.0
    %305 = vmatpush1.msra.mxu0 0.0
    %306 = vmatprep.subr.mxu0 0.0
    %307 = vmatpush1.msra.mxu0 0.0
    %308 = vmatprep.subr.mxu0 0.0
    %309 = vmatpush1.msra.mxu0 0.0
    %310 = vmatprep.subr.mxu0 0.0
    %311 = vmatpush1.msra.mxu0 0.0
    %312 = vmatprep.subr.mxu0 0.0
    %313 = vmatpush1.msra.mxu0 0.0
    %314 = vmatprep.subr.mxu0 0.0
    %315 = vmatpush1.msra.mxu0 0.0
    %316 = vmatprep.subr.mxu0 0.0
    %317 = vmatpush1.msra.mxu0 0.0
    %318 = vmatprep.subr.mxu0 0.0
    %319 = vmatpush1.msra.mxu0 0.0
    %320 = vmatprep.subr.mxu0 0.0
    %321 = vmatpush1.msra.mxu0 0.0
    %322 = vmatprep.subr.mxu0 0.0
    %323 = vmatpush1.msra.mxu0 0.0
    %324 = vmatprep.subr.mxu0 0.0
    %325 = vmatpush1.msra.mxu0 0.0
    %326 = vmatprep.subr.mxu0 0.0
    %327 = vmatpush1.msra.mxu0 0.0
    %328 = vmatprep.subr.mxu0 0.0
    %329 = vmatpush1.msra.mxu0 0.0
    %330 = vmatprep.subr.mxu0 0.0
    %331 = vmatpush1.msra.mxu0 0.0
    %332 = vmatprep.subr.mxu0 0.0
    %333 = vmatpush1.msra.mxu0 0.0
    %334 = vmatprep.subr.mxu0 0.0
    %335 = vmatpush1.msra.mxu0 0.0
    %336 = vmatprep.subr.mxu0 0.0
    %337 = vmatpush1.msra.mxu0 0.0
    %338 = vmatprep.subr.mxu0 0.0
    %339 = vmatpush1.msra.mxu0 0.0
    %340 = vmatprep.subr.mxu0 0.0
    %341 = vmatpush1.msra.mxu0 0.0
    %342 = vmatprep.subr.mxu0 0.0
    %343 = vmatpush1.msra.mxu0 0.0
    %344 = vmatprep.subr.mxu0 0.0
    %345 = vmatpush1.msra.mxu0 0.0
    %346 = vmatprep.subr.mxu0 0.0
    %347 = vmatpush1.msra.mxu0 0.0
    %348 = vmatprep.subr.mxu0 0.0
    %349 = vmatpush1.msra.mxu0 0.0
    %350 = vmatprep.subr.mxu0 0.0
    %351 = vmatpush1.msra.mxu0 0.0
    %352 = vmatprep.subr.mxu0 0.0
    %353 = vmatpush1.msra.mxu0 0.0
    %354 = vmatprep.subr.mxu0 0.0
    %355 = vmatpush1.msra.mxu0 0.0
    %356 = vmatprep.subr.mxu0 0.0
    %357 = vmatpush1.msra.mxu0 0.0
    %358 = vmatprep.mubr.f32.mxu0 0.0
    %359 = vmatmul.mubr.f32.gmra.mrb[0].mxu0 %v289
    %v360 = vpop.f32.mrb[0].mxu0
    %v361 = vadd.f32 1.0, %v360
    %v362 = vpop.f32.mrb[0].mxu0
    %363 = vmatprep.mubr.f32.mxu0 0.0
    %364 = vmatmul.mubr.f32.gmra.mrb[0].mxu0 %v292
    %v365 = vpop.f32.mrb[0].mxu0
    %v366 = vadd.f32 1.0, %v365
    %v367 = vpop.f32.mrb[0].mxu0
    %368 = vdwg.mxu0
    %vm369 = vcmp.gt.f32.partialorder %v361, 0.0
    %vm370 = vcmp.gt.f32.partialorder %v366, 0.0
    %v371 = vmax.f32 %v361, 1e-12
    %v372 = vmax.f32 %v366, 1e-12
    %v373 = vrsqrt.pop %v371
    %v374 = vrsqrt.pop %v372
    %v375 = vsel %vm369, %v373, 0.0
    %v376 = vsel %vm370, %v374, 0.0
    %v377 = vld [vmem:[#allocation6] sm:$0xf]
    %vm378 = vcmask 31744
    %v380 = vsel %vm378, %v285, 0
    %v383 = vsel %vm378, %v286, 0
    %vm385 = vcmask 1043456
    %v387 = vsel %vm385, %v377, 0
    %389 = vmatprep.subr.mxu0 0.0
    %390 = vmatpush1.msra.mxu0 %v387
    %391 = vmatprep.subr.mxu0 0.0
    %392 = vmatpush1.msra.mxu0 0.0
    %393 = vmatprep.subr.mxu0 0.0
    %394 = vmatpush1.msra.mxu0 0.0
    %395 = vmatprep.subr.mxu0 0.0
    %396 = vmatpush1.msra.mxu0 0.0
    %397 = vmatprep.subr.mxu0 0.0
    %398 = vmatpush1.msra.mxu0 0.0
    %399 = vmatprep.subr.mxu0 0.0
    %400 = vmatpush1.msra.mxu0 0.0
    %401 = vmatprep.subr.mxu0 0.0
    %402 = vmatpush1.msra.mxu0 0.0
    %403 = vmatprep.subr.mxu0 0.0
    %404 = vmatpush1.msra.mxu0 0.0
    %405 = vmatprep.subr.mxu0 0.0
    %406 = vmatpush1.msra.mxu0 0.0
    %407 = vmatprep.subr.mxu0 0.0
    %408 = vmatpush1.msra.mxu0 0.0
    %409 = vmatprep.subr.mxu0 0.0
    %410 = vmatpush1.msra.mxu0 0.0
    %411 = vmatprep.subr.mxu0 0.0
    %412 = vmatpush1.msra.mxu0 0.0
    %413 = vmatprep.subr.mxu0 0.0
    %414 = vmatpush1.msra.mxu0 0.0
    %415 = vmatprep.subr.mxu0 0.0
    %416 = vmatpush1.msra.mxu0 0.0
    %417 = vmatprep.subr.mxu0 0.0
    %418 = vmatpush1.msra.mxu0 0.0
    %419 = vmatprep.subr.mxu0 0.0
    %420 = vmatpush1.msra.mxu0 0.0
    %421 = vmatprep.subr.mxu0 0.0
    %422 = vmatpush1.msra.mxu0 0.0
    %423 = vmatprep.subr.mxu0 0.0
    %424 = vmatpush1.msra.mxu0 0.0
    %425 = vmatprep.subr.mxu0 0.0
    %426 = vmatpush1.msra.mxu0 0.0
    %427 = vmatprep.subr.mxu0 0.0
    %428 = vmatpush1.msra.mxu0 0.0
    %429 = vmatprep.subr.mxu0 0.0
    %430 = vmatpush1.msra.mxu0 0.0
    %431 = vmatprep.subr.mxu0 0.0
    %432 = vmatpush1.msra.mxu0 0.0
    %433 = vmatprep.subr.mxu0 0.0
    %434 = vmatpush1.msra.mxu0 0.0
    %435 = vmatprep.subr.mxu0 0.0
    %436 = vmatpush1.msra.mxu0 0.0
    %437 = vmatprep.subr.mxu0 0.0
    %438 = vmatpush1.msra.mxu0 0.0
    %439 = vmatprep.subr.mxu0 0.0
    %440 = vmatpush1.msra.mxu0 0.0
    %441 = vmatprep.subr.mxu0 0.0
    %442 = vmatpush1.msra.mxu0 0.0
    %443 = vmatprep.subr.mxu0 0.0
    %444 = vmatpush1.msra.mxu0 0.0
    %445 = vmatprep.subr.mxu0 0.0
    %446 = vmatpush1.msra.mxu0 0.0
    %447 = vmatprep.subr.mxu0 0.0
    %448 = vmatpush1.msra.mxu0 0.0
    %449 = vmatprep.subr.mxu0 0.0
    %450 = vmatpush1.msra.mxu0 0.0
    %451 = vmatprep.subr.mxu0 0.0
    %452 = vmatpush1.msra.mxu0 0.0
    %453 = vmatprep.mubr.f32.mxu0 0.0
    %454 = vmatmul.mubr.f32.gmra.mrb[0].mxu0 %v380
    %v455 = vpop.f32.mrb[0].mxu0
    %v456 = vadd.f32 0.0, %v455
    %v457 = vpop.f32.mrb[0].mxu0
    %458 = vmatprep.mubr.f32.mxu0 0.0
    %459 = vmatmul.mubr.f32.gmra.mrb[0].mxu0 %v383
    %v460 = vpop.f32.mrb[0].mxu0
    %v461 = vadd.f32 0.0, %v460
    %v462 = vpop.f32.mrb[0].mxu0
    %463 = vdwg.mxu0
    %465 = vset.pattern.permute.xlu0 0
    %466 = vperm.xlu0 %465, %v375
    %v467 = vpop.permute.xlu0 %466
    %470 = vset.pattern.permute.xlu0 0
    %471 = vperm.xlu0 %470, %v376
    %v472 = vpop.permute.xlu0 %471
    %v474 = vmul.f32 %v467, %v456
    %v475 = vmul.f32 %v472, %v461
    %476 = vmatprep.subr.mxu0 0.0
    %477 = vmatpush1.msra.mxu0 %v474
    %478 = vmatprep.subr.mxu0 0.0
    %479 = vmatpush1.msra.mxu0 %v475
    %480 = vmatprep.subr.mxu0 0.0
    %481 = vmatpush1.msra.mxu0 0.0
    %482 = vmatprep.subr.mxu0 0.0
    %483 = vmatpush1.msra.mxu0 0.0
    %484 = vmatprep.subr.mxu0 0.0
    %485 = vmatpush1.msra.mxu0 0.0
    %486 = vmatprep.subr.mxu0 0.0
    %487 = vmatpush1.msra.mxu0 0.0
    %488 = vmatprep.subr.mxu0 0.0
    %489 = vmatpush1.msra.mxu0 0.0
    %490 = vmatprep.subr.mxu0 0.0
    %491 = vmatpush1.msra.mxu0 0.0
    %492 = vmatprep.subr.mxu0 0.0
    %493 = vmatpush1.msra.mxu0 0.0
    %494 = vmatprep.subr.mxu0 0.0
    %495 = vmatpush1.msra.mxu0 0.0
    %496 = vmatprep.subr.mxu0 0.0
    %497 = vmatpush1.msra.mxu0 0.0
    %498 = vmatprep.subr.mxu0 0.0
    %499 = vmatpush1.msra.mxu0 0.0
    %500 = vmatprep.subr.mxu0 0.0
    %501 = vmatpush1.msra.mxu0 0.0
    %502 = vmatprep.subr.mxu0 0.0
    %503 = vmatpush1.msra.mxu0 0.0
    %504 = vmatprep.subr.mxu0 0.0
    %505 = vmatpush1.msra.mxu0 0.0
    %506 = vmatprep.subr.mxu0 0.0
    %507 = vmatpush1.msra.mxu0 0.0
    %508 = vmatprep.subr.mxu0 0.0
    %509 = vmatpush1.msra.mxu0 0.0
    %510 = vmatprep.subr.mxu0 0.0
    %511 = vmatpush1.msra.mxu0 0.0
    %512 = vmatprep.subr.mxu0 0.0
    %513 = vmatpush1.msra.mxu0 0.0
    %514 = vmatprep.subr.mxu0 0.0
    %515 = vmatpush1.msra.mxu0 0.0
    %516 = vmatprep.subr.mxu0 0.0
    %517 = vmatpush1.msra.mxu0 0.0
    %518 = vmatprep.subr.mxu0 0.0
    %519 = vmatpush1.msra.mxu0 0.0
    %520 = vmatprep.subr.mxu0 0.0
    %521 = vmatpush1.msra.mxu0 0.0
    %522 = vmatprep.subr.mxu0 0.0
    %523 = vmatpush1.msra.mxu0 0.0
    %524 = vmatprep.subr.mxu0 0.0
    %525 = vmatpush1.msra.mxu0 0.0
    %526 = vmatprep.subr.mxu0 0.0
    %527 = vmatpush1.msra.mxu0 0.0
    %528 = vmatprep.subr.mxu0 0.0
    %529 = vmatpush1.msra.mxu0 0.0
    %530 = vmatprep.subr.mxu0 0.0
    %531 = vmatpush1.msra.mxu0 0.0
    %532 = vmatprep.subr.mxu0 0.0
    %533 = vmatpush1.msra.mxu0 0.0
    %534 = vmatprep.subr.mxu0 0.0
    %535 = vmatpush1.msra.mxu0 0.0
    %536 = vmatprep.subr.mxu0 0.0
    %537 = vmatpush1.msra.mxu0 0.0
    %538 = vmatprep.subr.mxu0 0.0
    %539 = vmatpush1.msra.mxu0 0.0
    %540 = vmatprep.mubr.f32.mxu0 0.0
    %541 = vmatmul.mubr.f32.gmra.mrb[0].mxu0 %v289
    %v542 = vpop.f32.mrb[0].mxu0
    %v543 = vadd.f32 %v474, %v542
    %v544 = vpop.f32.mrb[0].mxu0
    %545 = vmatprep.mubr.f32.mxu0 0.0
    %546 = vmatmul.mubr.f32.gmra.mrb[0].mxu0 %v292
    %v547 = vpop.f32.mrb[0].mxu0
    %v548 = vadd.f32 %v475, %v547
    %v549 = vpop.f32.mrb[0].mxu0
    %550 = vdwg.mxu0
    %v551 = vmul.f32 %v467, %v543
    %v552 = vmul.f32 %v472, %v548
    %v553 = vld [vmem:[#allocation8] sm:$0x1]
    %v555 = vlaneseq
    %v556 = vshrl.u32 %v555, 7
    %v557 = vsub.s32 0, %v556
    %v558 = vrot.slane %v553, %v557
    %v560 = vadd.f32 %v551, %v558
    %v561 = vadd.f32 %v552, %v558
    %v562 = vmax.f32 %v560, 0.0
    %v563 = vmax.f32 %v561, 0.0
    %v564 = vld [vmem:[#allocation10] sm:$0x1]
    %v566 = vlaneseq
    %v567 = vshrl.u32 %v566, 7
    %v568 = vsub.s32 0, %v567
    %v569 = vrot.slane %v564, %v568
    %v571 = vmul.f32 %v562, %v569
    %v572 = vmul.f32 %v563, %v569
    %vm573 = vcmask 261120
    %v574 = vsel %vm573, %v571, 0.0
    %575 = vadd.xlane.f32.xlu0 %v574
    %v576 = vpop.xlane.xlu0 %575
    %v577 = vsel %vm573, %v572, 0.0
    %578 = vadd.xlane.f32.xlu0 %v577
    %v579 = vpop.xlane.xlu0 %578
    %v580 = vld [vmem:[#allocation11] sm:$0x1]
    %v582 = vlaneseq
    %v583 = vshrl.u32 %v582, 7
    %v584 = vsub.s32 0, %v583
    %v585 = vrot.slane %v580, %v584
    %v587 = vmul.f32 %v562, %v585
    %v588 = vmul.f32 %v563, %v585
    %v589 = vsel %vm573, %v587, 0.0
    %590 = vadd.xlane.f32.xlu0 %v589
    %v591 = vpop.xlane.xlu0 %590
    %v592 = vsel %vm573, %v588, 0.0
    %593 = vadd.xlane.f32.xlu0 %v592
    %v594 = vpop.xlane.xlu0 %593
    %595 = vmatprep.subr.mxu0 0.0
    %596 = vmatpush1.msra.mxu0 %v576
    %597 = vmatprep.subr.mxu0 0.0
    %598 = vmatpush1.msra.mxu0 %v579
    %599 = vmatprep.subr.mxu0 0.0
    %600 = vmatpush1.msra.mxu0 0.0
    %601 = vmatprep.subr.mxu0 0.0
    %602 = vmatpush1.msra.mxu0 0.0
    %603 = vmatprep.subr.mxu0 0.0
    %604 = vmatpush1.msra.mxu0 0.0
    %605 = vmatprep.subr.mxu0 0.0
    %606 = vmatpush1.msra.mxu0 0.0
    %607 = vmatprep.subr.mxu0 0.0
    %608 = vmatpush1.msra.mxu0 0.0
    %609 = vmatprep.subr.mxu0 0.0
    %610 = vmatpush1.msra.mxu0 0.0
    %611 = vmatprep.subr.mxu0 0.0
    %612 = vmatpush1.msra.mxu0 0.0
    %613 = vmatprep.subr.mxu0 0.0
    %614 = vmatpush1.msra.mxu0 0.0
    %615 = vmatprep.subr.mxu0 0.0
    %616 = vmatpush1.msra.mxu0 0.0
    %617 = vmatprep.subr.mxu0 0.0
    %618 = vmatpush1.msra.mxu0 0.0
    %619 = vmatprep.subr.mxu0 0.0
    %620 = vmatpush1.msra.mxu0 0.0
    %621 = vmatprep.subr.mxu0 0.0
    %622 = vmatpush1.msra.mxu0 0.0
    %623 = vmatprep.subr.mxu0 0.0
    %624 = vmatpush1.msra.mxu0 0.0
    %625 = vmatprep.subr.mxu0 0.0
    %626 = vmatpush1.msra.mxu0 0.0
    %627 = vmatprep.subr.mxu0 0.0
    %628 = vmatpush1.msra.mxu0 0.0
    %629 = vmatprep.subr.mxu0 0.0
    %630 = vmatpush1.msra.mxu0 0.0
    %631 = vmatprep.subr.mxu0 0.0
    %632 = vmatpush1.msra.mxu0 0.0
    %633 = vmatprep.subr.mxu0 0.0
    %634 = vmatpush1.msra.mxu0 0.0
    %635 = vmatprep.subr.mxu0 0.0
    %636 = vmatpush1.msra.mxu0 0.0
    %637 = vmatprep.subr.mxu0 0.0
    %638 = vmatpush1.msra.mxu0 0.0
    %639 = vmatprep.subr.mxu0 0.0
    %640 = vmatpush1.msra.mxu0 0.0
    %641 = vmatprep.subr.mxu0 0.0
    %642 = vmatpush1.msra.mxu0 0.0
    %643 = vmatprep.subr.mxu0 0.0
    %644 = vmatpush1.msra.mxu0 0.0
    %645 = vmatprep.subr.mxu0 0.0
    %646 = vmatpush1.msra.mxu0 0.0
    %647 = vmatprep.subr.mxu0 0.0
    %648 = vmatpush1.msra.mxu0 0.0
    %649 = vmatprep.subr.mxu0 0.0
    %650 = vmatpush1.msra.mxu0 0.0
    %651 = vmatprep.subr.mxu0 0.0
    %652 = vmatpush1.msra.mxu0 0.0
    %653 = vmatprep.subr.mxu0 0.0
    %654 = vmatpush1.msra.mxu0 0.0
    %655 = vmatprep.subr.mxu0 0.0
    %656 = vmatpush1.msra.mxu0 0.0
    %657 = vmatprep.subr.mxu0 0.0
    %658 = vmatpush1.msra.mxu0 0.0
    %659 = vmatprep.mubr.f32.mxu0 0.0
    %660 = vmatmul.mubr.f32.gmra.mrb[0].mxu0 %v289
    %v661 = vpop.f32.mrb[0].mxu0
    %v662 = vadd.f32 %v591, %v661
    %v663 = vpop.f32.mrb[0].mxu0
    %664 = vmatprep.mubr.f32.mxu0 0.0
    %665 = vmatmul.mubr.f32.gmra.mrb[0].mxu0 %v292
    %v666 = vpop.f32.mrb[0].mxu0
    %v667 = vadd.f32 %v594, %v666
    %v668 = vpop.f32.mrb[0].mxu0
    %669 = vdwg.mxu0
    %v670 = vld [vmem:[#allocation2] sm:$0x1]
    %v672 = vlaneseq
    %v673 = vshrl.u32 %v672, 7
    %v674 = vsub.s32 0, %v673
    %v675 = vrot.slane %v670, %v674
    %v677 = vadd.f32 %v662, %v675
    %v678 = vadd.f32 %v667, %v675
    %680 = vset.pattern.permute.xlu0 0
    %681 = vperm.xlu0 %680, %v677
    %v682 = vpop.permute.xlu0 %681
    %685 = vset.pattern.permute.xlu0 0
    %686 = vperm.xlu0 %685, %v678
    %v687 = vpop.permute.xlu0 %686
    %689 = vxpose.xlu0.b32.start [1/16] %v682, 128
    %690 = vxpose.xlu0.b32.cont [2/16] %v687, 128
    %691 = vxpose.xlu0.b32.cont [3/16] 0.0, 128
    %692 = vxpose.xlu0.b32.cont [4/16] 0.0, 128
    %693 = vxpose.xlu0.b32.cont [5/16] 0.0, 128
    %694 = vxpose.xlu0.b32.cont [6/16] 0.0, 128
    %695 = vxpose.xlu0.b32.cont [7/16] 0.0, 128
    %696 = vxpose.xlu0.b32.cont [8/16] 0.0, 128
    %697 = vxpose.xlu0.b32.cont [9/16] 0.0, 128
    %698 = vxpose.xlu0.b32.cont [10/16] 0.0, 128
    %699 = vxpose.xlu0.b32.cont [11/16] 0.0, 128
    %700 = vxpose.xlu0.b32.cont [12/16] 0.0, 128
    %701 = vxpose.xlu0.b32.cont [13/16] 0.0, 128
    %702 = vxpose.xlu0.b32.cont [14/16] 0.0, 128
    %703 = vxpose.xlu0.b32.cont [15/16] 0.0, 128
    %704 = vxpose.xlu0.b32.end [16/16] 0.0, 128
    %v705 = vpop.trf.xlu0
    %v706 = vpop.trf.xlu0
    %v707 = vpop.trf.xlu0
    %v708 = vpop.trf.xlu0
    %v709 = vpop.trf.xlu0
    %v710 = vpop.trf.xlu0
    %v711 = vpop.trf.xlu0
    %v712 = vpop.trf.xlu0
    %v713 = vpop.trf.xlu0
    %v714 = vpop.trf.xlu0
    %v715 = vpop.trf.xlu0
    %v716 = vpop.trf.xlu0
    %v717 = vpop.trf.xlu0
    %v718 = vpop.trf.xlu0
    %v719 = vpop.trf.xlu0
    %v720 = vpop.trf.xlu0
    %vm721 = vcmp.gt.f32.partialorder %v705, %v682
    %vm722 = vcmp.gt.f32.partialorder %v706, %v687
    %vm723 = vcmp.eq.f32.partialorder %v705, %v682
    %vm724 = vcmp.eq.f32.partialorder %v706, %v687
    %v725 = vsel %vm723, %v280, 0.0
    %v726 = vsel %vm724, %v281, 0.0
    %v727 = vsel %vm721, 1.0, %v725
    %v728 = vsel %vm722, 1.0, %v726
    %v729 = vmul.f32 %v727, %v269
    %v730 = vmul.f32 %v728, %v270
    %v732 = vsel %vm287, %v729, 0
    %v735 = vsel %vm287, %v730, 0
    %737 = vmatprep.subr.mxu0 0.0
    %738 = vmatpush1.msra.mxu0 1.0
    %739 = vmatprep.subr.mxu0 0.0
    %740 = vmatpush1.msra.mxu0 1.0
    %741 = vmatprep.subr.mxu0 0.0
    %742 = vmatpush1.msra.mxu0 0.0
    %743 = vmatprep.subr.mxu0 0.0
    %744 = vmatpush1.msra.mxu0 0.0
    %745 = vmatprep.subr.mxu0 0.0
    %746 = vmatpush1.msra.mxu0 0.0
    %747 = vmatprep.subr.mxu0 0.0
    %748 = vmatpush1.msra.mxu0 0.0
    %749 = vmatprep.subr.mxu0 0.0
    %750 = vmatpush1.msra.mxu0 0.0
    %751 = vmatprep.subr.mxu0 0.0
    %752 = vmatpush1.msra.mxu0 0.0
    %753 = vmatprep.subr.mxu0 0.0
    %754 = vmatpush1.msra.mxu0 0.0
    %755 = vmatprep.subr.mxu0 0.0
    %756 = vmatpush1.msra.mxu0 0.0
    %757 = vmatprep.subr.mxu0 0.0
    %758 = vmatpush1.msra.mxu0 0.0
    %759 = vmatprep.subr.mxu0 0.0
    %760 = vmatpush1.msra.mxu0 0.0
    %761 = vmatprep.subr.mxu0 0.0
    %762 = vmatpush1.msra.mxu0 0.0
    %763 = vmatprep.subr.mxu0 0.0
    %764 = vmatpush1.msra.mxu0 0.0
    %765 = vmatprep.subr.mxu0 0.0
    %766 = vmatpush1.msra.mxu0 0.0
    %767 = vmatprep.subr.mxu0 0.0
    %768 = vmatpush1.msra.mxu0 0.0
    %769 = vmatprep.subr.mxu0 0.0
    %770 = vmatpush1.msra.mxu0 0.0
    %771 = vmatprep.subr.mxu0 0.0
    %772 = vmatpush1.msra.mxu0 0.0
    %773 = vmatprep.subr.mxu0 0.0
    %774 = vmatpush1.msra.mxu0 0.0
    %775 = vmatprep.subr.mxu0 0.0
    %776 = vmatpush1.msra.mxu0 0.0
    %777 = vmatprep.subr.mxu0 0.0
    %778 = vmatpush1.msra.mxu0 0.0
    %779 = vmatprep.subr.mxu0 0.0
    %780 = vmatpush1.msra.mxu0 0.0
    %781 = vmatprep.subr.mxu0 0.0
    %782 = vmatpush1.msra.mxu0 0.0
    %783 = vmatprep.subr.mxu0 0.0
    %784 = vmatpush1.msra.mxu0 0.0
    %785 = vmatprep.subr.mxu0 0.0
    %786 = vmatpush1.msra.mxu0 0.0
    %787 = vmatprep.subr.mxu0 0.0
    %788 = vmatpush1.msra.mxu0 0.0
    %789 = vmatprep.subr.mxu0 0.0
    %790 = vmatpush1.msra.mxu0 0.0
    %791 = vmatprep.subr.mxu0 0.0
    %792 = vmatpush1.msra.mxu0 0.0
    %793 = vmatprep.subr.mxu0 0.0
    %794 = vmatpush1.msra.mxu0 0.0
    %795 = vmatprep.subr.mxu0 0.0
    %796 = vmatpush1.msra.mxu0 0.0
    %797 = vmatprep.subr.mxu0 0.0
    %798 = vmatpush1.msra.mxu0 0.0
    %799 = vmatprep.subr.mxu0 0.0
    %800 = vmatpush1.msra.mxu0 0.0
    %801 = vmatprep.mubr.f32.mxu0 0.0
    %802 = vmatmul.mubr.f32.gmra.mrb[0].mxu0 %v732
    %v803 = vpop.f32.mrb[0].mxu0
    %v804 = vadd.f32 0.0, %v803
    %v805 = vpop.f32.mrb[0].mxu0
    %806 = vmatprep.mubr.f32.mxu0 0.0
    %807 = vmatmul.mubr.f32.gmra.mrb[0].mxu0 %v735
    %v808 = vpop.f32.mrb[0].mxu0
    %v809 = vadd.f32 0.0, %v808
    %v810 = vpop.f32.mrb[0].mxu0
    %811 = vdwg.mxu0
    %v813 = vsel %vm287, %v269, 0
    %v816 = vsel %vm287, %v270, 0
    %818 = vmatprep.subr.mxu0 0.0
    %819 = vmatpush1.msra.mxu0 1.0
    %820 = vmatprep.subr.mxu0 0.0
    %821 = vmatpush1.msra.mxu0 1.0
    %822 = vmatprep.subr.mxu0 0.0
    %823 = vmatpush1.msra.mxu0 0.0
    %824 = vmatprep.subr.mxu0 0.0
    %825 = vmatpush1.msra.mxu0 0.0
    %826 = vmatprep.subr.mxu0 0.0
    %827 = vmatpush1.msra.mxu0 0.0
    %828 = vmatprep.subr.mxu0 0.0
    %829 = vmatpush1.msra.mxu0 0.0
    %830 = vmatprep.subr.mxu0 0.0
    %831 = vmatpush1.msra.mxu0 0.0
    %832 = vmatprep.subr.mxu0 0.0
    %833 = vmatpush1.msra.mxu0 0.0
    %834 = vmatprep.subr.mxu0 0.0
    %835 = vmatpush1.msra.mxu0 0.0
    %836 = vmatprep.subr.mxu0 0.0
    %837 = vmatpush1.msra.mxu0 0.0
    %838 = vmatprep.subr.mxu0 0.0
    %839 = vmatpush1.msra.mxu0 0.0
    %840 = vmatprep.subr.mxu0 0.0
    %841 = vmatpush1.msra.mxu0 0.0
    %842 = vmatprep.subr.mxu0 0.0
    %843 = vmatpush1.msra.mxu0 0.0
    %844 = vmatprep.subr.mxu0 0.0
    %845 = vmatpush1.msra.mxu0 0.0
    %846 = vmatprep.subr.mxu0 0.0
    %847 = vmatpush1.msra.mxu0 0.0
    %848 = vmatprep.subr.mxu0 0.0
    %849 = vmatpush1.msra.mxu0 0.0
    %850 = vmatprep.subr.mxu0 0.0
    %851 = vmatpush1.msra.mxu0 0.0
    %852 = vmatprep.subr.mxu0 0.0
    %853 = vmatpush1.msra.mxu0 0.0
    %854 = vmatprep.subr.mxu0 0.0
    %855 = vmatpush1.msra.mxu0 0.0
    %856 = vmatprep.subr.mxu0 0.0
    %857 = vmatpush1.msra.mxu0 0.0
    %858 = vmatprep.subr.mxu0 0.0
    %859 = vmatpush1.msra.mxu0 0.0
    %860 = vmatprep.subr.mxu0 0.0
    %861 = vmatpush1.msra.mxu0 0.0
    %862 = vmatprep.subr.mxu0 0.0
    %863 = vmatpush1.msra.mxu0 0.0
    %864 = vmatprep.subr.mxu0 0.0
    %865 = vmatpush1.msra.mxu0 0.0
    %866 = vmatprep.subr.mxu0 0.0
    %867 = vmatpush1.msra.mxu0 0.0
    %868 = vmatprep.subr.mxu0 0.0
    %869 = vmatpush1.msra.mxu0 0.0
    %870 = vmatprep.subr.mxu0 0.0
    %871 = vmatpush1.msra.mxu0 0.0
    %872 = vmatprep.subr.mxu0 0.0
    %873 = vmatpush1.msra.mxu0 0.0
    %874 = vmatprep.subr.mxu0 0.0
    %875 = vmatpush1.msra.mxu0 0.0
    %876 = vmatprep.subr.mxu0 0.0
    %877 = vmatpush1.msra.mxu0 0.0
    %878 = vmatprep.subr.mxu0 0.0
    %879 = vmatpush1.msra.mxu0 0.0
    %880 = vmatprep.subr.mxu0 0.0
    %881 = vmatpush1.msra.mxu0 0.0
    %882 = vmatprep.mubr.f32.mxu0 0.0
    %883 = vmatmul.mubr.f32.gmra.mrb[0].mxu0 %v813
    %v884 = vpop.f32.mrb[0].mxu0
    %v885 = vadd.f32 0.0, %v884
    %v886 = vpop.f32.mrb[0].mxu0
    %887 = vmatprep.mubr.f32.mxu0 0.0
    %888 = vmatmul.mubr.f32.gmra.mrb[0].mxu0 %v816
    %v889 = vpop.f32.mrb[0].mxu0
    %v890 = vadd.f32 0.0, %v889
    %v891 = vpop.f32.mrb[0].mxu0
    %892 = vdwg.mxu0
    %v893 = vmul.f32 %v885, 0.5
    %v894 = vmul.f32 %v890, 0.5
    %v895 = vceil.f32 %v893
    %v896 = vceil.f32 %v894
    %vm897 = vcmp.gt.f32.partialorder 1.0, 0.0
    %vm898 = vcmp.lt.f32.partialorder %v804, %v895
    %vm899 = vcmp.lt.f32.partialorder %v809, %v896
    %vm900 = vmand %vm897, %vm898
    %vm901 = vmand %vm897, %vm899
    %v902 = vsel %vm900, 1.0, 0.0
    %v903 = vsel %vm901, 1.0, 0.0
    %v904 = vtanh.pop %v677
    %v905 = vtanh.pop %v678
    %907 = vset.pattern.permute.xlu0 0
    %908 = vperm.xlu0 %907, %v904
    %v909 = vpop.permute.xlu0 %908
    %912 = vset.pattern.permute.xlu0 0
    %913 = vperm.xlu0 %912, %v905
    %v914 = vpop.permute.xlu0 %913
    %v916 = vmul.f32 %v562, %v909
    %v917 = vmul.f32 %v563, %v914
    %919 = vset.pattern.permute.xlu0 0
    %920 = vperm.xlu0 %919, %v902
    %v921 = vpop.permute.xlu0 %920
    %924 = vset.pattern.permute.xlu0 0
    %925 = vperm.xlu0 %924, %v903
    %v926 = vpop.permute.xlu0 %925
    %v928 = vmul.f32 %v916, %v921
    %v929 = vmul.f32 %v917, %v926
    %vm930 = vcmp.eq.s32.totalorder %v252, 0
    %vm931 = vcmp.eq.s32.totalorder %v253, 0
    %v932 = vsel %vm930, 1, 0
    %v933 = vsel %vm931, 1, 0
    %v934 = vcvt.s32.f32 %v932
    %v935 = vcvt.s32.f32 %v933
    %v936 = vmul.f32 %v934, %v902
    %v937 = vmul.f32 %v935, %v903
    %v938 = vsub.f32 %v936, 1.0
    %v939 = vsub.f32 %v937, 1.0
    %v940 = vmul.f32 %v938, 3e+38
    %v941 = vmul.f32 %v939, 3e+38
    %943 = vset.pattern.permute.xlu0 0
    %944 = vperm.xlu0 %943, %v940
    %v945 = vpop.permute.xlu0 %944
    %948 = vset.pattern.permute.xlu0 0
    %949 = vperm.xlu0 %948, %v941
    %v950 = vpop.permute.xlu0 %949
    %v952 = vadd.f32 %v928, %v945
    %v953 = vadd.f32 %v929, %v950
    %v954 = vsel %vm573, %v952, -inf
    %v955 = vsel %vm573, %v953, -inf
    %v956 = vmax.f32 %v954, %v955
    %v957 = vrot.slane %v956, 4
    %v958 = vmax.f32 %v956, %v957
    %v959 = vrot.slane %v958, 2
    %v960 = vmax.f32 %v958, %v959
    %v961 = vrot.slane %v960, 1
    %v962 = vmax.f32 %v960, %v961
    %vm963 = vcmask 7168
    %v964 = vsel %vm963, %v936, -inf
    %v965 = vsel %vm963, %v937, -inf
    %v966 = vmax.f32 %v964, %v965
    %v967 = vrot.slane %v966, 4
    %v968 = vmax.f32 %v966, %v967
    %v969 = vrot.slane %v968, 2
    %v970 = vmax.f32 %v968, %v969
    %v971 = vrot.slane %v970, 1
    %v972 = vmax.f32 %v970, %v971
    %vm973 = vcmp.gt.f32.partialorder %v972, 0.0
    %v974 = vsel %vm973, 1, 0
    %975 = vset.pattern.permute.xlu0 0
    %976 = vperm.xlu0 %975, %v974
    %v977 = vpop.permute.xlu0 %976
    %vm978 = vcmp.eq.s32.totalorder %v977, 1
    %v979 = vsel %vm978, %v962, 0.0
    %vm980 = vcmp.eq.s32.totalorder %v272, 0
    %v981 = vsel %vm980, 1, 0
    %vm982 = vcmp.eq.s32.totalorder %v981, 1
    %v983 = vsel %vm982, %v979, 0.0
    %v984 = vadd.f32 %v983, 0.0
    %vm985 = vcmp.eq.s32.totalorder %v252, 1
    %vm986 = vcmp.eq.s32.totalorder %v253, 1
    %v987 = vsel %vm985, 1, 0
    %v988 = vsel %vm986, 1, 0
    %v989 = vcvt.s32.f32 %v987
    %v990 = vcvt.s32.f32 %v988
    %v991 = vmul.f32 %v989, %v902
    %v992 = vmul.f32 %v990, %v903
    %v993 = vsub.f32 %v991, 1.0
    %v994 = vsub.f32 %v992, 1.0
    %v995 = vmul.f32 %v993, 3e+38
    %v996 = vmul.f32 %v994, 3e+38
    %998 = vset.pattern.permute.xlu0 0
    %999 = vperm.xlu0 %998, %v995
    %v1000 = vpop.permute.xlu0 %999
    %1003 = vset.pattern.permute.xlu0 0
    %1004 = vperm.xlu0 %1003, %v996
    %v1005 = vpop.permute.xlu0 %1004
    %v1007 = vadd.f32 %v928, %v1000
    %v1008 = vadd.f32 %v929, %v1005
    %v1009 = vsel %vm573, %v1007, -inf
    %v1010 = vsel %vm573, %v1008, -inf
    %v1011 = vmax.f32 %v1009, %v1010
    %v1012 = vrot.slane %v1011, 4
    %v1013 = vmax.f32 %v1011, %v1012
    %v1014 = vrot.slane %v1013, 2
    %v1015 = vmax.f32 %v1013, %v1014
    %v1016 = vrot.slane %v1015, 1
    %v1017 = vmax.f32 %v1015, %v1016
    %v1018 = vsel %vm963, %v991, -inf
    %v1019 = vsel %vm963, %v992, -inf
    %v1020 = vmax.f32 %v1018, %v1019
    %v1021 = vrot.slane %v1020, 4
    %v1022 = vmax.f32 %v1020, %v1021
    %v1023 = vrot.slane %v1022, 2
    %v1024 = vmax.f32 %v1022, %v1023
    %v1025 = vrot.slane %v1024, 1
    %v1026 = vmax.f32 %v1024, %v1025
    %vm1027 = vcmp.gt.f32.partialorder %v1026, 0.0
    %v1028 = vsel %vm1027, 1, 0
    %1029 = vset.pattern.permute.xlu0 0
    %1030 = vperm.xlu0 %1029, %v1028
    %v1031 = vpop.permute.xlu0 %1030
    %vm1032 = vcmp.eq.s32.totalorder %v1031, 1
    %v1033 = vsel %vm1032, %v1017, 0.0
    %vm1034 = vcmp.eq.s32.totalorder %v272, 1
    %v1035 = vsel %vm1034, 1, 0
    %vm1036 = vcmp.eq.s32.totalorder %v1035, 1
    %v1037 = vsel %vm1036, %v1033, 0.0
    %v1038 = vadd.f32 %v984, %v1037
    %v1039 = vadd.f32 %v1038, 0.0
    %1040 = vmatprep.subr.mxu0 0.0
    %1041 = vmatpush1.msra.mxu0 %v902
    %1042 = vmatprep.subr.mxu0 0.0
    %1043 = vmatpush1.msra.mxu0 %v903
    %1044 = vmatprep.subr.mxu0 0.0
    %1045 = vmatpush1.msra.mxu0 0.0
    %1046 = vmatprep.subr.mxu0 0.0
    %1047 = vmatpush1.msra.mxu0 0.0
    %1048 = vmatprep.subr.mxu0 0.0
    %1049 = vmatpush1.msra.mxu0 0.0
    %1050 = vmatprep.subr.mxu0 0.0
    %1051 = vmatpush1.msra.mxu0 0.0
    %1052 = vmatprep.subr.mxu0 0.0
    %1053 = vmatpush1.msra.mxu0 0.0
    %1054 = vmatprep.subr.mxu0 0.0
    %1055 = vmatpush1.msra.mxu0 0.0
    %1056 = vmatprep.subr.mxu0 0.0
    %1057 = vmatpush1.msra.mxu0 0.0
    %1058 = vmatprep.subr.mxu0 0.0
    %1059 = vmatpush1.msra.mxu0 0.0
    %1060 = vmatprep.subr.mxu0 0.0
    %1061 = vmatpush1.msra.mxu0 0.0
    %1062 = vmatprep.subr.mxu0 0.0
    %1063 = vmatpush1.msra.mxu0 0.0
    %1064 = vmatprep.subr.mxu0 0.0
    %1065 = vmatpush1.msra.mxu0 0.0
    %1066 = vmatprep.subr.mxu0 0.0
    %1067 = vmatpush1.msra.mxu0 0.0
    %1068 = vmatprep.subr.mxu0 0.0
    %1069 = vmatpush1.msra.mxu0 0.0
    %1070 = vmatprep.subr.mxu0 0.0
    %1071 = vmatpush1.msra.mxu0 0.0
    %1072 = vmatprep.subr.mxu0 0.0
    %1073 = vmatpush1.msra.mxu0 0.0
    %1074 = vmatprep.subr.mxu0 0.0
    %1075 = vmatpush1.msra.mxu0 0.0
    %1076 = vmatprep.subr.mxu0 0.0
    %1077 = vmatpush1.msra.mxu0 0.0
    %1078 = vmatprep.subr.mxu0 0.0
    %1079 = vmatpush1.msra.mxu0 0.0
    %1080 = vmatprep.subr.mxu0 0.0
    %1081 = vmatpush1.msra.mxu0 0.0
    %1082 = vmatprep.subr.mxu0 0.0
    %1083 = vmatpush1.msra.mxu0 0.0
    %1084 = vmatprep.subr.mxu0 0.0
    %1085 = vmatpush1.msra.mxu0 0.0
    %1086 = vmatprep.subr.mxu0 0.0
    %1087 = vmatpush1.msra.mxu0 0.0
    %1088 = vmatprep.subr.mxu0 0.0
    %1089 = vmatpush1.msra.mxu0 0.0
    %1090 = vmatprep.subr.mxu0 0.0
    %1091 = vmatpush1.msra.mxu0 0.0
    %1092 = vmatprep.subr.mxu0 0.0
    %1093 = vmatpush1.msra.mxu0 0.0
    %1094 = vmatprep.subr.mxu0 0.0
    %1095 = vmatpush1.msra.mxu0 0.0
    %1096 = vmatprep.subr.mxu0 0.0
    %1097 = vmatpush1.msra.mxu0 0.0
    %1098 = vmatprep.subr.mxu0 0.0
    %1099 = vmatpush1.msra.mxu0 0.0
    %1100 = vmatprep.subr.mxu0 0.0
    %1101 = vmatpush1.msra.mxu0 0.0
    %1102 = vmatprep.subr.mxu0 0.0
    %1103 = vmatpush1.msra.mxu0 0.0
    %1104 = vmatprep.mubr.f32.mxu0 0.0
    %1105 = vmatmul.mubr.f32.gmra.mrb[0].mxu0 %v289
    %v1106 = vpop.f32.mrb[0].mxu0
    %v1107 = vadd.f32 %v902, %v1106
    %v1108 = vpop.f32.mrb[0].mxu0
    %1109 = vmatprep.mubr.f32.mxu0 0.0
    %1110 = vmatmul.mubr.f32.gmra.mrb[0].mxu0 %v292
    %v1111 = vpop.f32.mrb[0].mxu0
    %v1112 = vadd.f32 %v903, %v1111
    %v1113 = vpop.f32.mrb[0].mxu0
    %1114 = vdwg.mxu0
    %vm1115 = vcmp.gt.f32.partialorder %v1107, 0.0
    %vm1116 = vcmp.gt.f32.partialorder %v1112, 0.0
    %v1117 = vmax.f32 %v1107, 1e-12
    %v1118 = vmax.f32 %v1112, 1e-12
    %v1119 = vrsqrt.pop %v1117
    %v1120 = vrsqrt.pop %v1118
    %v1121 = vsel %vm1115, %v1119, 0.0
    %v1122 = vsel %vm1116, %v1120, 0.0
    %v1123 = vld [vmem:[%s10] sm:$0xff]
    %v1124 = vld [vmem:[%s10 + $0x8] sm:$0xff]
    %v1125 = vld [vmem:[%s10 + $0x10] sm:$0xff]
    %v1126 = vld [vmem:[%s10 + $0x18] sm:$0xff]
    %v1128 = vsel %vm573, %v928, 0
    %v1131 = vsel %vm573, %v929, 0
    %1133 = vmatprep.subr.mxu0 0.0
    %1134 = vmatpush1.msra.mxu0 %v1123
    %1135 = vmatprep.subr.mxu0 0.0
    %1136 = vmatpush1.msra.mxu0 %v1124
    %1137 = vmatprep.subr.mxu0 0.0
    %1138 = vmatpush1.msra.mxu0 %v1125
    %1139 = vmatprep.subr.mxu0 0.0
    %1140 = vmatpush1.msra.mxu0 %v1126
    %1141 = vmatprep.subr.mxu0 0.0
    %1142 = vmatpush1.msra.mxu0 0.0
    %1143 = vmatprep.subr.mxu0 0.0
    %1144 = vmatpush1.msra.mxu0 0.0
    %1145 = vmatprep.subr.mxu0 0.0
    %1146 = vmatpush1.msra.mxu0 0.0
    %1147 = vmatprep.subr.mxu0 0.0
    %1148 = vmatpush1.msra.mxu0 0.0
    %1149 = vmatprep.subr.mxu0 0.0
    %1150 = vmatpush1.msra.mxu0 0.0
    %1151 = vmatprep.subr.mxu0 0.0
    %1152 = vmatpush1.msra.mxu0 0.0
    %1153 = vmatprep.subr.mxu0 0.0
    %1154 = vmatpush1.msra.mxu0 0.0
    %1155 = vmatprep.subr.mxu0 0.0
    %1156 = vmatpush1.msra.mxu0 0.0
    %1157 = vmatprep.subr.mxu0 0.0
    %1158 = vmatpush1.msra.mxu0 0.0
    %1159 = vmatprep.subr.mxu0 0.0
    %1160 = vmatpush1.msra.mxu0 0.0
    %1161 = vmatprep.subr.mxu0 0.0
    %1162 = vmatpush1.msra.mxu0 0.0
    %1163 = vmatprep.subr.mxu0 0.0
    %1164 = vmatpush1.msra.mxu0 0.0
    %1165 = vmatprep.subr.mxu0 0.0
    %1166 = vmatpush1.msra.mxu0 0.0
    %1167 = vmatprep.subr.mxu0 0.0
    %1168 = vmatpush1.msra.mxu0 0.0
    %1169 = vmatprep.subr.mxu0 0.0
    %1170 = vmatpush1.msra.mxu0 0.0
    %1171 = vmatprep.subr.mxu0 0.0
    %1172 = vmatpush1.msra.mxu0 0.0
    %1173 = vmatprep.subr.mxu0 0.0
    %1174 = vmatpush1.msra.mxu0 0.0
    %1175 = vmatprep.subr.mxu0 0.0
    %1176 = vmatpush1.msra.mxu0 0.0
    %1177 = vmatprep.subr.mxu0 0.0
    %1178 = vmatpush1.msra.mxu0 0.0
    %1179 = vmatprep.subr.mxu0 0.0
    %1180 = vmatpush1.msra.mxu0 0.0
    %1181 = vmatprep.subr.mxu0 0.0
    %1182 = vmatpush1.msra.mxu0 0.0
    %1183 = vmatprep.subr.mxu0 0.0
    %1184 = vmatpush1.msra.mxu0 0.0
    %1185 = vmatprep.subr.mxu0 0.0
    %1186 = vmatpush1.msra.mxu0 0.0
    %1187 = vmatprep.subr.mxu0 0.0
    %1188 = vmatpush1.msra.mxu0 0.0
    %1189 = vmatprep.subr.mxu0 0.0
    %1190 = vmatpush1.msra.mxu0 0.0
    %1191 = vmatprep.subr.mxu0 0.0
    %1192 = vmatpush1.msra.mxu0 0.0
    %1193 = vmatprep.subr.mxu0 0.0
    %1194 = vmatpush1.msra.mxu0 0.0
    %1195 = vmatprep.subr.mxu0 0.0
    %1196 = vmatpush1.msra.mxu0 0.0
    %1197 = vmatprep.mubr.f32.mxu0 0.0
    %1198 = vmatmul.mubr.f32.gmra.mrb[0].mxu0 %v1128
    %v1199 = vpop.f32.mrb[0].mxu0
    %v1200 = vadd.f32 0.0, %v1199
    %v1201 = vpop.f32.mrb[0].mxu0
    %1202 = vmatprep.mubr.f32.mxu0 0.0
    %1203 = vmatmul.mubr.f32.gmra.mrb[0].mxu0 %v1131
    %v1204 = vpop.f32.mrb[0].mxu0
    %v1205 = vadd.f32 0.0, %v1204
    %v1206 = vpop.f32.mrb[0].mxu0
    %1207 = vdwg.mxu0
    %1209 = vset.pattern.permute.xlu0 0
    %1210 = vperm.xlu0 %1209, %v1121
    %v1211 = vpop.permute.xlu0 %1210
    %1214 = vset.pattern.permute.xlu0 0
    %1215 = vperm.xlu0 %1214, %v1122
    %v1216 = vpop.permute.xlu0 %1215
    %v1218 = vmul.f32 %v1211, %v1200
    %v1219 = vmul.f32 %v1216, %v1205
    %v1220 = vmul.f32 %v921, %v1218
    %v1221 = vmul.f32 %v926, %v1219
    %1222 = vmatprep.subr.mxu0 0.0
    %1223 = vmatpush1.msra.mxu0 %v1218
    %1224 = vmatprep.subr.mxu0 0.0
    %1225 = vmatpush1.msra.mxu0 %v1219
    %1226 = vmatprep.subr.mxu0 0.0
    %1227 = vmatpush1.msra.mxu0 0.0
    %1228 = vmatprep.subr.mxu0 0.0
    %1229 = vmatpush1.msra.mxu0 0.0
    %1230 = vmatprep.subr.mxu0 0.0
    %1231 = vmatpush1.msra.mxu0 0.0
    %1232 = vmatprep.subr.mxu0 0.0
    %1233 = vmatpush1.msra.mxu0 0.0
    %1234 = vmatprep.subr.mxu0 0.0
    %1235 = vmatpush1.msra.mxu0 0.0
    %1236 = vmatprep.subr.mxu0 0.0
    %1237 = vmatpush1.msra.mxu0 0.0
    %1238 = vmatprep.subr.mxu0 0.0
    %1239 = vmatpush1.msra.mxu0 0.0
    %1240 = vmatprep.subr.mxu0 0.0
    %1241 = vmatpush1.msra.mxu0 0.0
    %1242 = vmatprep.subr.mxu0 0.0
    %1243 = vmatpush1.msra.mxu0 0.0
    %1244 = vmatprep.subr.mxu0 0.0
    %1245 = vmatpush1.msra.mxu0 0.0
    %1246 = vmatprep.subr.mxu0 0.0
    %1247 = vmatpush1.msra.mxu0 0.0
    %1248 = vmatprep.subr.mxu0 0.0
    %1249 = vmatpush1.msra.mxu0 0.0
    %1250 = vmatprep.subr.mxu0 0.0
    %1251 = vmatpush1.msra.mxu0 0.0
    %1252 = vmatprep.subr.mxu0 0.0
    %1253 = vmatpush1.msra.mxu0 0.0
    %1254 = vmatprep.subr.mxu0 0.0
    %1255 = vmatpush1.msra.mxu0 0.0
    %1256 = vmatprep.subr.mxu0 0.0
    %1257 = vmatpush1.msra.mxu0 0.0
    %1258 = vmatprep.subr.mxu0 0.0
    %1259 = vmatpush1.msra.mxu0 0.0
    %1260 = vmatprep.subr.mxu0 0.0
    %1261 = vmatpush1.msra.mxu0 0.0
    %1262 = vmatprep.subr.mxu0 0.0
    %1263 = vmatpush1.msra.mxu0 0.0
    %1264 = vmatprep.subr.mxu0 0.0
    %1265 = vmatpush1.msra.mxu0 0.0
    %1266 = vmatprep.subr.mxu0 0.0
    %1267 = vmatpush1.msra.mxu0 0.0
    %1268 = vmatprep.subr.mxu0 0.0
    %1269 = vmatpush1.msra.mxu0 0.0
    %1270 = vmatprep.subr.mxu0 0.0
    %1271 = vmatpush1.msra.mxu0 0.0
    %1272 = vmatprep.subr.mxu0 0.0
    %1273 = vmatpush1.msra.mxu0 0.0
    %1274 = vmatprep.subr.mxu0 0.0
    %1275 = vmatpush1.msra.mxu0 0.0
    %1276 = vmatprep.subr.mxu0 0.0
    %1277 = vmatpush1.msra.mxu0 0.0
    %1278 = vmatprep.subr.mxu0 0.0
    %1279 = vmatpush1.msra.mxu0 0.0
    %1280 = vmatprep.subr.mxu0 0.0
    %1281 = vmatpush1.msra.mxu0 0.0
    %1282 = vmatprep.subr.mxu0 0.0
    %1283 = vmatpush1.msra.mxu0 0.0
    %1284 = vmatprep.subr.mxu0 0.0
    %1285 = vmatpush1.msra.mxu0 0.0
    %1286 = vmatprep.mubr.f32.mxu0 0.0
    %1287 = vmatmul.mubr.f32.gmra.mrb[0].mxu0 %v289
    %v1288 = vpop.f32.mrb[0].mxu0
    %v1289 = vadd.f32 %v1220, %v1288
    %v1290 = vpop.f32.mrb[0].mxu0
    %1291 = vmatprep.mubr.f32.mxu0 0.0
    %1292 = vmatmul.mubr.f32.gmra.mrb[0].mxu0 %v292
    %v1293 = vpop.f32.mrb[0].mxu0
    %v1294 = vadd.f32 %v1221, %v1293
    %v1295 = vpop.f32.mrb[0].mxu0
    %1296 = vdwg.mxu0
    %v1297 = vmul.f32 %v1211, %v1289
    %v1298 = vmul.f32 %v1216, %v1294
    %v1299 = vld [vmem:[#allocation13] sm:$0x1]
    %v1301 = vlaneseq
    %v1302 = vshrl.u32 %v1301, 7
    %v1303 = vsub.s32 0, %v1302
    %v1304 = vrot.slane %v1299, %v1303
    %v1306 = vadd.f32 %v1297, %v1304
    %v1307 = vadd.f32 %v1298, %v1304
    %v1308 = vmax.f32 %v1306, 0.0
    %v1309 = vmax.f32 %v1307, 0.0
    %v1310 = vmul.f32 %v1308, %v921
    %v1311 = vmul.f32 %v1309, %v926
    %v1312 = vld [vmem:[#allocation14] sm:$0x1]
    %v1314 = vlaneseq
    %v1315 = vshrl.u32 %v1314, 7
    %v1316 = vsub.s32 0, %v1315
    %v1317 = vrot.slane %v1312, %v1316
    %v1319 = vmul.f32 %v1310, %v1317
    %v1320 = vmul.f32 %v1311, %v1317
    %v1321 = vsel %vm573, %v1319, 0.0
    %1322 = vadd.xlane.f32.xlu0 %v1321
    %v1323 = vpop.xlane.xlu0 %1322
    %v1324 = vsel %vm573, %v1320, 0.0
    %1325 = vadd.xlane.f32.xlu0 %v1324
    %v1326 = vpop.xlane.xlu0 %1325
    %v1327 = vld [vmem:[#allocation16] sm:$0x1]
    %v1329 = vlaneseq
    %v1330 = vshrl.u32 %v1329, 7
    %v1331 = vsub.s32 0, %v1330
    %v1332 = vrot.slane %v1327, %v1331
    %v1334 = vmul.f32 %v1310, %v1332
    %v1335 = vmul.f32 %v1311, %v1332
    %v1336 = vsel %vm573, %v1334, 0.0
    %1337 = vadd.xlane.f32.xlu0 %v1336
    %v1338 = vpop.xlane.xlu0 %1337
    %v1339 = vsel %vm573, %v1335, 0.0
    %1340 = vadd.xlane.f32.xlu0 %v1339
    %v1341 = vpop.xlane.xlu0 %1340
    %1342 = vmatprep.subr.mxu0 0.0
    %1343 = vmatpush1.msra.mxu0 %v1323
    %1344 = vmatprep.subr.mxu0 0.0
    %1345 = vmatpush1.msra.mxu0 %v1326
    %1346 = vmatprep.subr.mxu0 0.0
    %1347 = vmatpush1.msra.mxu0 0.0
    %1348 = vmatprep.subr.mxu0 0.0
    %1349 = vmatpush1.msra.mxu0 0.0
    %1350 = vmatprep.subr.mxu0 0.0
    %1351 = vmatpush1.msra.mxu0 0.0
    %1352 = vmatprep.subr.mxu0 0.0
    %1353 = vmatpush1.msra.mxu0 0.0
    %1354 = vmatprep.subr.mxu0 0.0
    %1355 = vmatpush1.msra.mxu0 0.0
    %1356 = vmatprep.subr.mxu0 0.0
    %1357 = vmatpush1.msra.mxu0 0.0
    %1358 = vmatprep.subr.mxu0 0.0
    %1359 = vmatpush1.msra.mxu0 0.0
    %1360 = vmatprep.subr.mxu0 0.0
    %1361 = vmatpush1.msra.mxu0 0.0
    %1362 = vmatprep.subr.mxu0 0.0
    %1363 = vmatpush1.msra.mxu0 0.0
    %1364 = vmatprep.subr.mxu0 0.0
    %1365 = vmatpush1.msra.mxu0 0.0
    %1366 = vmatprep.subr.mxu0 0.0
    %1367 = vmatpush1.msra.mxu0 0.0
    %1368 = vmatprep.subr.mxu0 0.0
    %1369 = vmatpush1.msra.mxu0 0.0
    %1370 = vmatprep.subr.mxu0 0.0
    %1371 = vmatpush1.msra.mxu0 0.0
    %1372 = vmatprep.subr.mxu0 0.0
    %1373 = vmatpush1.msra.mxu0 0.0
    %1374 = vmatprep.subr.mxu0 0.0
    %1375 = vmatpush1.msra.mxu0 0.0
    %1376 = vmatprep.subr.mxu0 0.0
    %1377 = vmatpush1.msra.mxu0 0.0
    %1378 = vmatprep.subr.mxu0 0.0
    %1379 = vmatpush1.msra.mxu0 0.0
    %1380 = vmatprep.subr.mxu0 0.0
    %1381 = vmatpush1.msra.mxu0 0.0
    %1382 = vmatprep.subr.mxu0 0.0
    %1383 = vmatpush1.msra.mxu0 0.0
    %1384 = vmatprep.subr.mxu0 0.0
    %1385 = vmatpush1.msra.mxu0 0.0
    %1386 = vmatprep.subr.mxu0 0.0
    %1387 = vmatpush1.msra.mxu0 0.0
    %1388 = vmatprep.subr.mxu0 0.0
    %1389 = vmatpush1.msra.mxu0 0.0
    %1390 = vmatprep.subr.mxu0 0.0
    %1391 = vmatpush1.msra.mxu0 0.0
    %1392 = vmatprep.subr.mxu0 0.0
    %1393 = vmatpush1.msra.mxu0 0.0
    %1394 = vmatprep.subr.mxu0 0.0
    %1395 = vmatpush1.msra.mxu0 0.0
    %1396 = vmatprep.subr.mxu0 0.0
    %1397 = vmatpush1.msra.mxu0 0.0
    %1398 = vmatprep.subr.mxu0 0.0
    %1399 = vmatpush1.msra.mxu0 0.0
    %1400 = vmatprep.subr.mxu0 0.0
    %1401 = vmatpush1.msra.mxu0 0.0
    %1402 = vmatprep.subr.mxu0 0.0
    %1403 = vmatpush1.msra.mxu0 0.0
    %1404 = vmatprep.subr.mxu0 0.0
    %1405 = vmatpush1.msra.mxu0 0.0
    %1406 = vmatprep.mubr.f32.mxu0 0.0
    %1407 = vmatmul.mubr.f32.gmra.mrb[0].mxu0 %v289
    %v1408 = vpop.f32.mrb[0].mxu0
    %v1409 = vadd.f32 %v1338, %v1408
    %v1410 = vpop.f32.mrb[0].mxu0
    %1411 = vmatprep.mubr.f32.mxu0 0.0
    %1412 = vmatmul.mubr.f32.gmra.mrb[0].mxu0 %v292
    %v1413 = vpop.f32.mrb[0].mxu0
    %v1414 = vadd.f32 %v1341, %v1413
    %v1415 = vpop.f32.mrb[0].mxu0
    %1416 = vdwg.mxu0
    %v1417 = vld [vmem:[#allocation3] sm:$0x1]
    %v1419 = vlaneseq
    %v1420 = vshrl.u32 %v1419, 7
    %v1421 = vsub.s32 0, %v1420
    %v1422 = vrot.slane %v1417, %v1421
    %v1424 = vadd.f32 %v1409, %v1422
    %v1425 = vadd.f32 %v1414, %v1422
    %1427 = vset.pattern.permute.xlu0 0
    %1428 = vperm.xlu0 %1427, %v1424
    %v1429 = vpop.permute.xlu0 %1428
    %1432 = vset.pattern.permute.xlu0 0
    %1433 = vperm.xlu0 %1432, %v1425
    %v1434 = vpop.permute.xlu0 %1433
    %1436 = vxpose.xlu0.b32.start [1/16] %v1429, 128
    %1437 = vxpose.xlu0.b32.cont [2/16] %v1434, 128
    %1438 = vxpose.xlu0.b32.cont [3/16] 0.0, 128
    %1439 = vxpose.xlu0.b32.cont [4/16] 0.0, 128
    %1440 = vxpose.xlu0.b32.cont [5/16] 0.0, 128
    %1441 = vxpose.xlu0.b32.cont [6/16] 0.0, 128
    %1442 = vxpose.xlu0.b32.cont [7/16] 0.0, 128
    %1443 = vxpose.xlu0.b32.cont [8/16] 0.0, 128
    %1444 = vxpose.xlu0.b32.cont [9/16] 0.0, 128
    %1445 = vxpose.xlu0.b32.cont [10/16] 0.0, 128
    %1446 = vxpose.xlu0.b32.cont [11/16] 0.0, 128
    %1447 = vxpose.xlu0.b32.cont [12/16] 0.0, 128
    %1448 = vxpose.xlu0.b32.cont [13/16] 0.0, 128
    %1449 = vxpose.xlu0.b32.cont [14/16] 0.0, 128
    %1450 = vxpose.xlu0.b32.cont [15/16] 0.0, 128
    %1451 = vxpose.xlu0.b32.end [16/16] 0.0, 128
    %v1452 = vpop.trf.xlu0
    %v1453 = vpop.trf.xlu0
    %v1454 = vpop.trf.xlu0
    %v1455 = vpop.trf.xlu0
    %v1456 = vpop.trf.xlu0
    %v1457 = vpop.trf.xlu0
    %v1458 = vpop.trf.xlu0
    %v1459 = vpop.trf.xlu0
    %v1460 = vpop.trf.xlu0
    %v1461 = vpop.trf.xlu0
    %v1462 = vpop.trf.xlu0
    %v1463 = vpop.trf.xlu0
    %v1464 = vpop.trf.xlu0
    %v1465 = vpop.trf.xlu0
    %v1466 = vpop.trf.xlu0
    %v1467 = vpop.trf.xlu0
    %vm1468 = vcmp.gt.f32.partialorder %v1452, %v1429
    %vm1469 = vcmp.gt.f32.partialorder %v1453, %v1434
    %vm1470 = vcmp.eq.f32.partialorder %v1452, %v1429
    %vm1471 = vcmp.eq.f32.partialorder %v1453, %v1434
    %v1472 = vsel %vm1470, %v280, 0.0
    %v1473 = vsel %vm1471, %v281, 0.0
    %v1474 = vsel %vm1468, 1.0, %v1472
    %v1475 = vsel %vm1469, 1.0, %v1473
    %v1476 = vmul.f32 %v1474, %v269
    %v1477 = vmul.f32 %v1475, %v270
    %v1479 = vsel %vm287, %v1476, 0
    %v1482 = vsel %vm287, %v1477, 0
    %1484 = vmatprep.subr.mxu0 0.0
    %1485 = vmatpush1.msra.mxu0 %v902
    %1486 = vmatprep.subr.mxu0 0.0
    %1487 = vmatpush1.msra.mxu0 %v903
    %1488 = vmatprep.subr.mxu0 0.0
    %1489 = vmatpush1.msra.mxu0 0.0
    %1490 = vmatprep.subr.mxu0 0.0
    %1491 = vmatpush1.msra.mxu0 0.0
    %1492 = vmatprep.subr.mxu0 0.0
    %1493 = vmatpush1.msra.mxu0 0.0
    %1494 = vmatprep.subr.mxu0 0.0
    %1495 = vmatpush1.msra.mxu0 0.0
    %1496 = vmatprep.subr.mxu0 0.0
    %1497 = vmatpush1.msra.mxu0 0.0
    %1498 = vmatprep.subr.mxu0 0.0
    %1499 = vmatpush1.msra.mxu0 0.0
    %1500 = vmatprep.subr.mxu0 0.0
    %1501 = vmatpush1.msra.mxu0 0.0
    %1502 = vmatprep.subr.mxu0 0.0
    %1503 = vmatpush1.msra.mxu0 0.0
    %1504 = vmatprep.subr.mxu0 0.0
    %1505 = vmatpush1.msra.mxu0 0.0
    %1506 = vmatprep.subr.mxu0 0.0
    %1507 = vmatpush1.msra.mxu0 0.0
    %1508 = vmatprep.subr.mxu0 0.0
    %1509 = vmatpush1.msra.mxu0 0.0
    %1510 = vmatprep.subr.mxu0 0.0
    %1511 = vmatpush1.msra.mxu0 0.0
    %1512 = vmatprep.subr.mxu0 0.0
    %1513 = vmatpush1.msra.mxu0 0.0
    %1514 = vmatprep.subr.mxu0 0.0
    %1515 = vmatpush1.msra.mxu0 0.0
    %1516 = vmatprep.subr.mxu0 0.0
    %1517 = vmatpush1.msra.mxu0 0.0
    %1518 = vmatprep.subr.mxu0 0.0
    %1519 = vmatpush1.msra.mxu0 0.0
    %1520 = vmatprep.subr.mxu0 0.0
    %1521 = vmatpush1.msra.mxu0 0.0
    %1522 = vmatprep.subr.mxu0 0.0
    %1523 = vmatpush1.msra.mxu0 0.0
    %1524 = vmatprep.subr.mxu0 0.0
    %1525 = vmatpush1.msra.mxu0 0.0
    %1526 = vmatprep.subr.mxu0 0.0
    %1527 = vmatpush1.msra.mxu0 0.0
    %1528 = vmatprep.subr.mxu0 0.0
    %1529 = vmatpush1.msra.mxu0 0.0
    %1530 = vmatprep.subr.mxu0 0.0
    %1531 = vmatpush1.msra.mxu0 0.0
    %1532 = vmatprep.subr.mxu0 0.0
    %1533 = vmatpush1.msra.mxu0 0.0
    %1534 = vmatprep.subr.mxu0 0.0
    %1535 = vmatpush1.msra.mxu0 0.0
    %1536 = vmatprep.subr.mxu0 0.0
    %1537 = vmatpush1.msra.mxu0 0.0
    %1538 = vmatprep.subr.mxu0 0.0
    %1539 = vmatpush1.msra.mxu0 0.0
    %1540 = vmatprep.subr.mxu0 0.0
    %1541 = vmatpush1.msra.mxu0 0.0
    %1542 = vmatprep.subr.mxu0 0.0
    %1543 = vmatpush1.msra.mxu0 0.0
    %1544 = vmatprep.subr.mxu0 0.0
    %1545 = vmatpush1.msra.mxu0 0.0
    %1546 = vmatprep.subr.mxu0 0.0
    %1547 = vmatpush1.msra.mxu0 0.0
    %1548 = vmatprep.mubr.f32.mxu0 0.0
    %1549 = vmatmul.mubr.f32.gmra.mrb[0].mxu0 %v1479
    %v1550 = vpop.f32.mrb[0].mxu0
    %v1551 = vadd.f32 0.0, %v1550
    %v1552 = vpop.f32.mrb[0].mxu0
    %1553 = vmatprep.mubr.f32.mxu0 0.0
    %1554 = vmatmul.mubr.f32.gmra.mrb[0].mxu0 %v1482
    %v1555 = vpop.f32.mrb[0].mxu0
    %v1556 = vadd.f32 0.0, %v1555
    %v1557 = vpop.f32.mrb[0].mxu0
    %1558 = vdwg.mxu0
    %1559 = vmatprep.subr.mxu0 0.0
    %1560 = vmatpush1.msra.mxu0 %v902
    %1561 = vmatprep.subr.mxu0 0.0
    %1562 = vmatpush1.msra.mxu0 %v903
    %1563 = vmatprep.subr.mxu0 0.0
    %1564 = vmatpush1.msra.mxu0 0.0
    %1565 = vmatprep.subr.mxu0 0.0
    %1566 = vmatpush1.msra.mxu0 0.0
    %1567 = vmatprep.subr.mxu0 0.0
    %1568 = vmatpush1.msra.mxu0 0.0
    %1569 = vmatprep.subr.mxu0 0.0
    %1570 = vmatpush1.msra.mxu0 0.0
    %1571 = vmatprep.subr.mxu0 0.0
    %1572 = vmatpush1.msra.mxu0 0.0
    %1573 = vmatprep.subr.mxu0 0.0
    %1574 = vmatpush1.msra.mxu0 0.0
    %1575 = vmatprep.subr.mxu0 0.0
    %1576 = vmatpush1.msra.mxu0 0.0
    %1577 = vmatprep.subr.mxu0 0.0
    %1578 = vmatpush1.msra.mxu0 0.0
    %1579 = vmatprep.subr.mxu0 0.0
    %1580 = vmatpush1.msra.mxu0 0.0
    %1581 = vmatprep.subr.mxu0 0.0
    %1582 = vmatpush1.msra.mxu0 0.0
    %1583 = vmatprep.subr.mxu0 0.0
    %1584 = vmatpush1.msra.mxu0 0.0
    %1585 = vmatprep.subr.mxu0 0.0
    %1586 = vmatpush1.msra.mxu0 0.0
    %1587 = vmatprep.subr.mxu0 0.0
    %1588 = vmatpush1.msra.mxu0 0.0
    %1589 = vmatprep.subr.mxu0 0.0
    %1590 = vmatpush1.msra.mxu0 0.0
    %1591 = vmatprep.subr.mxu0 0.0
    %1592 = vmatpush1.msra.mxu0 0.0
    %1593 = vmatprep.subr.mxu0 0.0
    %1594 = vmatpush1.msra.mxu0 0.0
    %1595 = vmatprep.subr.mxu0 0.0
    %1596 = vmatpush1.msra.mxu0 0.0
    %1597 = vmatprep.subr.mxu0 0.0
    %1598 = vmatpush1.msra.mxu0 0.0
    %1599 = vmatprep.subr.mxu0 0.0
    %1600 = vmatpush1.msra.mxu0 0.0
    %1601 = vmatprep.subr.mxu0 0.0
    %1602 = vmatpush1.msra.mxu0 0.0
    %1603 = vmatprep.subr.mxu0 0.0
    %1604 = vmatpush1.msra.mxu0 0.0
    %1605 = vmatprep.subr.mxu0 0.0
    %1606 = vmatpush1.msra.mxu0 0.0
    %1607 = vmatprep.subr.mxu0 0.0
    %1608 = vmatpush1.msra.mxu0 0.0
    %1609 = vmatprep.subr.mxu0 0.0
    %1610 = vmatpush1.msra.mxu0 0.0
    %1611 = vmatprep.subr.mxu0 0.0
    %1612 = vmatpush1.msra.mxu0 0.0
    %1613 = vmatprep.subr.mxu0 0.0
    %1614 = vmatpush1.msra.mxu0 0.0
    %1615 = vmatprep.subr.mxu0 0.0
    %1616 = vmatpush1.msra.mxu0 0.0
    %1617 = vmatprep.subr.mxu0 0.0
    %1618 = vmatpush1.msra.mxu0 0.0
    %1619 = vmatprep.subr.mxu0 0.0
    %1620 = vmatpush1.msra.mxu0 0.0
    %1621 = vmatprep.subr.mxu0 0.0
    %1622 = vmatpush1.msra.mxu0 0.0
    %1623 = vmatprep.mubr.f32.mxu0 0.0
    %1624 = vmatmul.mubr.f32.gmra.mrb[0].mxu0 %v813
    %v1625 = vpop.f32.mrb[0].mxu0
    %v1626 = vadd.f32 0.0, %v1625
    %v1627 = vpop.f32.mrb[0].mxu0
    %1628 = vmatprep.mubr.f32.mxu0 0.0
    %1629 = vmatmul.mubr.f32.gmra.mrb[0].mxu0 %v816
    %v1630 = vpop.f32.mrb[0].mxu0
    %v1631 = vadd.f32 0.0, %v1630
    %v1632 = vpop.f32.mrb[0].mxu0
    %1633 = vdwg.mxu0
    %v1634 = vmul.f32 %v1626, 0.5
    %v1635 = vmul.f32 %v1631, 0.5
    %v1636 = vceil.f32 %v1634
    %v1637 = vceil.f32 %v1635
    %vm1638 = vcmp.gt.f32.partialorder %v902, 0.0
    %vm1639 = vcmp.gt.f32.partialorder %v903, 0.0
    %vm1640 = vcmp.lt.f32.partialorder %v1551, %v1636
    %vm1641 = vcmp.lt.f32.partialorder %v1556, %v1637
    %vm1642 = vmand %vm1638, %vm1640
    %vm1643 = vmand %vm1639, %vm1641
    %v1644 = vsel %vm1642, 1.0, 0.0
    %v1645 = vsel %vm1643, 1.0, 0.0
    %v1646 = vtanh.pop %v1424
    %v1647 = vtanh.pop %v1425
    %1649 = vset.pattern.permute.xlu0 0
    %1650 = vperm.xlu0 %1649, %v1646
    %v1651 = vpop.permute.xlu0 %1650
    %1654 = vset.pattern.permute.xlu0 0
    %1655 = vperm.xlu0 %1654, %v1647
    %v1656 = vpop.permute.xlu0 %1655
    %v1658 = vmul.f32 %v1310, %v1651
    %v1659 = vmul.f32 %v1311, %v1656
    %1661 = vset.pattern.permute.xlu0 0
    %1662 = vperm.xlu0 %1661, %v1644
    %v1663 = vpop.permute.xlu0 %1662
    %1666 = vset.pattern.permute.xlu0 0
    %1667 = vperm.xlu0 %1666, %v1645
    %v1668 = vpop.permute.xlu0 %1667
    %v1670 = vmul.f32 %v1658, %v1663
    %v1671 = vmul.f32 %v1659, %v1668
    %v1673 = vsel %vm287, %v284, 0
    %1675 = vmatprep.subr.mxu0 0.0
    %1676 = vmatpush1.msra.mxu0 %v1670
    %1677 = vmatprep.subr.mxu0 0.0
    %1678 = vmatpush1.msra.mxu0 %v1671
    %1679 = vmatprep.subr.mxu0 0.0
    %1680 = vmatpush1.msra.mxu0 0.0
    %1681 = vmatprep.subr.mxu0 0.0
    %1682 = vmatpush1.msra.mxu0 0.0
    %1683 = vmatprep.subr.mxu0 0.0
    %1684 = vmatpush1.msra.mxu0 0.0
    %1685 = vmatprep.subr.mxu0 0.0
    %1686 = vmatpush1.msra.mxu0 0.0
    %1687 = vmatprep.subr.mxu0 0.0
    %1688 = vmatpush1.msra.mxu0 0.0
    %1689 = vmatprep.subr.mxu0 0.0
    %1690 = vmatpush1.msra.mxu0 0.0
    %1691 = vmatprep.subr.mxu0 0.0
    %1692 = vmatpush1.msra.mxu0 0.0
    %1693 = vmatprep.subr.mxu0 0.0
    %1694 = vmatpush1.msra.mxu0 0.0
    %1695 = vmatprep.subr.mxu0 0.0
    %1696 = vmatpush1.msra.mxu0 0.0
    %1697 = vmatprep.subr.mxu0 0.0
    %1698 = vmatpush1.msra.mxu0 0.0
    %1699 = vmatprep.subr.mxu0 0.0
    %1700 = vmatpush1.msra.mxu0 0.0
    %1701 = vmatprep.subr.mxu0 0.0
    %1702 = vmatpush1.msra.mxu0 0.0
    %1703 = vmatprep.subr.mxu0 0.0
    %1704 = vmatpush1.msra.mxu0 0.0
    %1705 = vmatprep.subr.mxu0 0.0
    %1706 = vmatpush1.msra.mxu0 0.0
    %1707 = vmatprep.subr.mxu0 0.0
    %1708 = vmatpush1.msra.mxu0 0.0
    %1709 = vmatprep.subr.mxu0 0.0
    %1710 = vmatpush1.msra.mxu0 0.0
    %1711 = vmatprep.subr.mxu0 0.0
    %1712 = vmatpush1.msra.mxu0 0.0
    %1713 = vmatprep.subr.mxu0 0.0
    %1714 = vmatpush1.msra.mxu0 0.0
    %1715 = vmatprep.subr.mxu0 0.0
    %1716 = vmatpush1.msra.mxu0 0.0
    %1717 = vmatprep.subr.mxu0 0.0
    %1718 = vmatpush1.msra.mxu0 0.0
    %1719 = vmatprep.subr.mxu0 0.0
    %1720 = vmatpush1.msra.mxu0 0.0
    %1721 = vmatprep.subr.mxu0 0.0
    %1722 = vmatpush1.msra.mxu0 0.0
    %1723 = vmatprep.subr.mxu0 0.0
    %1724 = vmatpush1.msra.mxu0 0.0
    %1725 = vmatprep.subr.mxu0 0.0
    %1726 = vmatpush1.msra.mxu0 0.0
    %1727 = vmatprep.subr.mxu0 0.0
    %1728 = vmatpush1.msra.mxu0 0.0
    %1729 = vmatprep.subr.mxu0 0.0
    %1730 = vmatpush1.msra.mxu0 0.0
    %1731 = vmatprep.subr.mxu0 0.0
    %1732 = vmatpush1.msra.mxu0 0.0
    %1733 = vmatprep.subr.mxu0 0.0
    %1734 = vmatpush1.msra.mxu0 0.0
    %1735 = vmatprep.subr.mxu0 0.0
    %1736 = vmatpush1.msra.mxu0 0.0
    %1737 = vmatprep.subr.mxu0 0.0
    %1738 = vmatpush1.msra.mxu0 0.0
    %1739 = vmatprep.mubr.f32.mxu0 0.0
    %1740 = vmatmul.mubr.f32.gmra.mrb[0].mxu0 %v1673
    %v1741 = vpop.f32.mrb[0].mxu0
    %v1742 = vadd.f32 0.0, %v1741
    %v1743 = vpop.f32.mrb[0].mxu0
    %1744 = vdwg.mxu0
    %1745 = vmatprep.subr.mxu0 0.0
    %1746 = vmatpush1.msra.mxu0 %v928
    %1747 = vmatprep.subr.mxu0 0.0
    %1748 = vmatpush1.msra.mxu0 %v929
    %1749 = vmatprep.subr.mxu0 0.0
    %1750 = vmatpush1.msra.mxu0 0.0
    %1751 = vmatprep.subr.mxu0 0.0
    %1752 = vmatpush1.msra.mxu0 0.0
    %1753 = vmatprep.subr.mxu0 0.0
    %1754 = vmatpush1.msra.mxu0 0.0
    %1755 = vmatprep.subr.mxu0 0.0
    %1756 = vmatpush1.msra.mxu0 0.0
    %1757 = vmatprep.subr.mxu0 0.0
    %1758 = vmatpush1.msra.mxu0 0.0
    %1759 = vmatprep.subr.mxu0 0.0
    %1760 = vmatpush1.msra.mxu0 0.0
    %1761 = vmatprep.subr.mxu0 0.0
    %1762 = vmatpush1.msra.mxu0 0.0
    %1763 = vmatprep.subr.mxu0 0.0
    %1764 = vmatpush1.msra.mxu0 0.0
    %1765 = vmatprep.subr.mxu0 0.0
    %1766 = vmatpush1.msra.mxu0 0.0
    %1767 = vmatprep.subr.mxu0 0.0
    %1768 = vmatpush1.msra.mxu0 0.0
    %1769 = vmatprep.subr.mxu0 0.0
    %1770 = vmatpush1.msra.mxu0 0.0
    %1771 = vmatprep.subr.mxu0 0.0
    %1772 = vmatpush1.msra.mxu0 0.0
    %1773 = vmatprep.subr.mxu0 0.0
    %1774 = vmatpush1.msra.mxu0 0.0
    %1775 = vmatprep.subr.mxu0 0.0
    %1776 = vmatpush1.msra.mxu0 0.0
    %1777 = vmatprep.subr.mxu0 0.0
    %1778 = vmatpush1.msra.mxu0 0.0
    %1779 = vmatprep.subr.mxu0 0.0
    %1780 = vmatpush1.msra.mxu0 0.0
    %1781 = vmatprep.subr.mxu0 0.0
    %1782 = vmatpush1.msra.mxu0 0.0
    %1783 = vmatprep.subr.mxu0 0.0
    %1784 = vmatpush1.msra.mxu0 0.0
    %1785 = vmatprep.subr.mxu0 0.0
    %1786 = vmatpush1.msra.mxu0 0.0
    %1787 = vmatprep.subr.mxu0 0.0
    %1788 = vmatpush1.msra.mxu0 0.0
    %1789 = vmatprep.subr.mxu0 0.0
    %1790 = vmatpush1.msra.mxu0 0.0
    %1791 = vmatprep.subr.mxu0 0.0
    %1792 = vmatpush1.msra.mxu0 0.0
    %1793 = vmatprep.subr.mxu0 0.0
    %1794 = vmatpush1.msra.mxu0 0.0
    %1795 = vmatprep.subr.mxu0 0.0
    %1796 = vmatpush1.msra.mxu0 0.0
    %1797 = vmatprep.subr.mxu0 0.0
    %1798 = vmatpush1.msra.mxu0 0.0
    %1799 = vmatprep.subr.mxu0 0.0
    %1800 = vmatpush1.msra.mxu0 0.0
    %1801 = vmatprep.subr.mxu0 0.0
    %1802 = vmatpush1.msra.mxu0 0.0
    %1803 = vmatprep.subr.mxu0 0.0
    %1804 = vmatpush1.msra.mxu0 0.0
    %1805 = vmatprep.subr.mxu0 0.0
    %1806 = vmatpush1.msra.mxu0 0.0
    %1807 = vmatprep.subr.mxu0 0.0
    %1808 = vmatpush1.msra.mxu0 0.0
    %1809 = vmatprep.mubr.f32.mxu0 0.0
    %1810 = vmatmul.mubr.f32.gmra.mrb[0].mxu0 %v1673
    %v1811 = vpop.f32.mrb[0].mxu0
    %v1812 = vadd.f32 %v1742, %v1811
    %v1813 = vpop.f32.mrb[0].mxu0
    %1814 = vdwg.mxu0
    %v1815 = vmul.f32 %v934, %v1644
    %v1816 = vmul.f32 %v935, %v1645
    %v1817 = vsub.f32 %v1815, 1.0
    %v1818 = vsub.f32 %v1816, 1.0
    %v1819 = vmul.f32 %v1817, 3e+38
    %v1820 = vmul.f32 %v1818, 3e+38
    %1822 = vset.pattern.permute.xlu0 0
    %1823 = vperm.xlu0 %1822, %v1819
    %v1824 = vpop.permute.xlu0 %1823
    %1827 = vset.pattern.permute.xlu0 0
    %1828 = vperm.xlu0 %1827, %v1820
    %v1829 = vpop.permute.xlu0 %1828
    %v1831 = vadd.f32 %v1670, %v1824
    %v1832 = vadd.f32 %v1671, %v1829
    %v1833 = vsel %vm573, %v1831, -inf
    %v1834 = vsel %vm573, %v1832, -inf
    %v1835 = vmax.f32 %v1833, %v1834
    %v1836 = vrot.slane %v1835, 4
    %v1837 = vmax.f32 %v1835, %v1836
    %v1838 = vrot.slane %v1837, 2
    %v1839 = vmax.f32 %v1837, %v1838
    %v1840 = vrot.slane %v1839, 1
    %v1841 = vmax.f32 %v1839, %v1840
    %v1842 = vsel %vm963, %v1815, -inf
    %v1843 = vsel %vm963, %v1816, -inf
    %v1844 = vmax.f32 %v1842, %v1843
    %v1845 = vrot.slane %v1844, 4
    %v1846 = vmax.f32 %v1844, %v1845
    %v1847 = vrot.slane %v1846, 2
    %v1848 = vmax.f32 %v1846, %v1847
    %v1849 = vrot.slane %v1848, 1
    %v1850 = vmax.f32 %v1848, %v1849
    %vm1851 = vcmp.gt.f32.partialorder %v1850, 0.0
    %v1852 = vsel %vm1851, 1, 0
    %1853 = vset.pattern.permute.xlu0 0
    %1854 = vperm.xlu0 %1853, %v1852
    %v1855 = vpop.permute.xlu0 %1854
    %vm1856 = vcmp.eq.s32.totalorder %v1855, 1
    %v1857 = vsel %vm1856, %v1841, 0.0
    %v1858 = vsel %vm982, %v1857, 0.0
    %v1859 = vadd.f32 %v1858, 0.0
    %v1860 = vmul.f32 %v989, %v1644
    %v1861 = vmul.f32 %v990, %v1645
    %v1862 = vsub.f32 %v1860, 1.0
    %v1863 = vsub.f32 %v1861, 1.0
    %v1864 = vmul.f32 %v1862, 3e+38
    %v1865 = vmul.f32 %v1863, 3e+38
    %1867 = vset.pattern.permute.xlu0 0
    %1868 = vperm.xlu0 %1867, %v1864
    %v1869 = vpop.permute.xlu0 %1868
    %1872 = vset.pattern.permute.xlu0 0
    %1873 = vperm.xlu0 %1872, %v1865
    %v1874 = vpop.permute.xlu0 %1873
    %v1876 = vadd.f32 %v1670, %v1869
    %v1877 = vadd.f32 %v1671, %v1874
    %v1878 = vsel %vm573, %v1876, -inf
    %v1879 = vsel %vm573, %v1877, -inf
    %v1880 = vmax.f32 %v1878, %v1879
    %v1881 = vrot.slane %v1880, 4
    %v1882 = vmax.f32 %v1880, %v1881
    %v1883 = vrot.slane %v1882, 2
    %v1884 = vmax.f32 %v1882, %v1883
    %v1885 = vrot.slane %v1884, 1
    %v1886 = vmax.f32 %v1884, %v1885
    %v1887 = vsel %vm963, %v1860, -inf
    %v1888 = vsel %vm963, %v1861, -inf
    %v1889 = vmax.f32 %v1887, %v1888
    %v1890 = vrot.slane %v1889, 4
    %v1891 = vmax.f32 %v1889, %v1890
    %v1892 = vrot.slane %v1891, 2
    %v1893 = vmax.f32 %v1891, %v1892
    %v1894 = vrot.slane %v1893, 1
    %v1895 = vmax.f32 %v1893, %v1894
    %vm1896 = vcmp.gt.f32.partialorder %v1895, 0.0
    %v1897 = vsel %vm1896, 1, 0
    %1898 = vset.pattern.permute.xlu0 0
    %1899 = vperm.xlu0 %1898, %v1897
    %v1900 = vpop.permute.xlu0 %1899
    %vm1901 = vcmp.eq.s32.totalorder %v1900, 1
    %v1902 = vsel %vm1901, %v1886, 0.0
    %v1903 = vsel %vm1036, %v1902, 0.0
    %v1904 = vadd.f32 %v1859, %v1903
    %v1905 = vadd.f32 %v1039, %v1904
    %1906 = vmatprep.subr.mxu0 0.0
    %1907 = vmatpush1.msra.mxu0 %v1644
    %1908 = vmatprep.subr.mxu0 0.0
    %1909 = vmatpush1.msra.mxu0 %v1645
    %1910 = vmatprep.subr.mxu0 0.0
    %1911 = vmatpush1.msra.mxu0 0.0
    %1912 = vmatprep.subr.mxu0 0.0
    %1913 = vmatpush1.msra.mxu0 0.0
    %1914 = vmatprep.subr.mxu0 0.0
    %1915 = vmatpush1.msra.mxu0 0.0
    %1916 = vmatprep.subr.mxu0 0.0
    %1917 = vmatpush1.msra.mxu0 0.0
    %1918 = vmatprep.subr.mxu0 0.0
    %1919 = vmatpush1.msra.mxu0 0.0
    %1920 = vmatprep.subr.mxu0 0.0
    %1921 = vmatpush1.msra.mxu0 0.0
    %1922 = vmatprep.subr.mxu0 0.0
    %1923 = vmatpush1.msra.mxu0 0.0
    %1924 = vmatprep.subr.mxu0 0.0
    %1925 = vmatpush1.msra.mxu0 0.0
    %1926 = vmatprep.subr.mxu0 0.0
    %1927 = vmatpush1.msra.mxu0 0.0
    %1928 = vmatprep.subr.mxu0 0.0
    %1929 = vmatpush1.msra.mxu0 0.0
    %1930 = vmatprep.subr.mxu0 0.0
    %1931 = vmatpush1.msra.mxu0 0.0
    %1932 = vmatprep.subr.mxu0 0.0
    %1933 = vmatpush1.msra.mxu0 0.0
    %1934 = vmatprep.subr.mxu0 0.0
    %1935 = vmatpush1.msra.mxu0 0.0
    %1936 = vmatprep.subr.mxu0 0.0
    %1937 = vmatpush1.msra.mxu0 0.0
    %1938 = vmatprep.subr.mxu0 0.0
    %1939 = vmatpush1.msra.mxu0 0.0
    %1940 = vmatprep.subr.mxu0 0.0
    %1941 = vmatpush1.msra.mxu0 0.0
    %1942 = vmatprep.subr.mxu0 0.0
    %1943 = vmatpush1.msra.mxu0 0.0
    %1944 = vmatprep.subr.mxu0 0.0
    %1945 = vmatpush1.msra.mxu0 0.0
    %1946 = vmatprep.subr.mxu0 0.0
    %1947 = vmatpush1.msra.mxu0 0.0
    %1948 = vmatprep.subr.mxu0 0.0
    %1949 = vmatpush1.msra.mxu0 0.0
    %1950 = vmatprep.subr.mxu0 0.0
    %1951 = vmatpush1.msra.mxu0 0.0
    %1952 = vmatprep.subr.mxu0 0.0
    %1953 = vmatpush1.msra.mxu0 0.0
    %1954 = vmatprep.subr.mxu0 0.0
    %1955 = vmatpush1.msra.mxu0 0.0
    %1956 = vmatprep.subr.mxu0 0.0
    %1957 = vmatpush1.msra.mxu0 0.0
    %1958 = vmatprep.subr.mxu0 0.0
    %1959 = vmatpush1.msra.mxu0 0.0
    %1960 = vmatprep.subr.mxu0 0.0
    %1961 = vmatpush1.msra.mxu0 0.0
    %1962 = vmatprep.subr.mxu0 0.0
    %1963 = vmatpush1.msra.mxu0 0.0
    %1964 = vmatprep.subr.mxu0 0.0
    %1965 = vmatpush1.msra.mxu0 0.0
    %1966 = vmatprep.subr.mxu0 0.0
    %1967 = vmatpush1.msra.mxu0 0.0
    %1968 = vmatprep.subr.mxu0 0.0
    %1969 = vmatpush1.msra.mxu0 0.0
    %1970 = vmatprep.mubr.f32.mxu0 0.0
    %1971 = vmatmul.mubr.f32.gmra.mrb[0].mxu0 %v289
    %v1972 = vpop.f32.mrb[0].mxu0
    %v1973 = vadd.f32 %v1644, %v1972
    %v1974 = vpop.f32.mrb[0].mxu0
    %1975 = vmatprep.mubr.f32.mxu0 0.0
    %1976 = vmatmul.mubr.f32.gmra.mrb[0].mxu0 %v292
    %v1977 = vpop.f32.mrb[0].mxu0
    %v1978 = vadd.f32 %v1645, %v1977
    %v1979 = vpop.f32.mrb[0].mxu0
    %1980 = vdwg.mxu0
    %vm1981 = vcmp.gt.f32.partialorder %v1973, 0.0
    %vm1982 = vcmp.gt.f32.partialorder %v1978, 0.0
    %v1983 = vmax.f32 %v1973, 1e-12
    %v1984 = vmax.f32 %v1978, 1e-12
    %v1985 = vrsqrt.pop %v1983
    %v1986 = vrsqrt.pop %v1984
    %v1987 = vsel %vm1981, %v1985, 0.0
    %v1988 = vsel %vm1982, %v1986, 0.0
    %v1989 = vld [vmem:[%s15] sm:$0xff]
    %v1990 = vld [vmem:[%s15 + $0x8] sm:$0xff]
    %v1991 = vld [vmem:[%s15 + $0x10] sm:$0xff]
    %v1992 = vld [vmem:[%s15 + $0x18] sm:$0xff]
    %v1994 = vsel %vm573, %v1670, 0
    %v1997 = vsel %vm573, %v1671, 0
    %1999 = vmatprep.subr.mxu0 0.0
    %2000 = vmatpush1.msra.mxu0 %v1989
    %2001 = vmatprep.subr.mxu0 0.0
    %2002 = vmatpush1.msra.mxu0 %v1990
    %2003 = vmatprep.subr.mxu0 0.0
    %2004 = vmatpush1.msra.mxu0 %v1991
    %2005 = vmatprep.subr.mxu0 0.0
    %2006 = vmatpush1.msra.mxu0 %v1992
    %2007 = vmatprep.subr.mxu0 0.0
    %2008 = vmatpush1.msra.mxu0 0.0
    %2009 = vmatprep.subr.mxu0 0.0
    %2010 = vmatpush1.msra.mxu0 0.0
    %2011 = vmatprep.subr.mxu0 0.0
    %2012 = vmatpush1.msra.mxu0 0.0
    %2013 = vmatprep.subr.mxu0 0.0
    %2014 = vmatpush1.msra.mxu0 0.0
    %2015 = vmatprep.subr.mxu0 0.0
    %2016 = vmatpush1.msra.mxu0 0.0
    %2017 = vmatprep.subr.mxu0 0.0
    %2018 = vmatpush1.msra.mxu0 0.0
    %2019 = vmatprep.subr.mxu0 0.0
    %2020 = vmatpush1.msra.mxu0 0.0
    %2021 = vmatprep.subr.mxu0 0.0
    %2022 = vmatpush1.msra.mxu0 0.0
    %2023 = vmatprep.subr.mxu0 0.0
    %2024 = vmatpush1.msra.mxu0 0.0
    %2025 = vmatprep.subr.mxu0 0.0
    %2026 = vmatpush1.msra.mxu0 0.0
    %2027 = vmatprep.subr.mxu0 0.0
    %2028 = vmatpush1.msra.mxu0 0.0
    %2029 = vmatprep.subr.mxu0 0.0
    %2030 = vmatpush1.msra.mxu0 0.0
    %2031 = vmatprep.subr.mxu0 0.0
    %2032 = vmatpush1.msra.mxu0 0.0
    %2033 = vmatprep.subr.mxu0 0.0
    %2034 = vmatpush1.msra.mxu0 0.0
    %2035 = vmatprep.subr.mxu0 0.0
    %2036 = vmatpush1.msra.mxu0 0.0
    %2037 = vmatprep.subr.mxu0 0.0
    %2038 = vmatpush1.msra.mxu0 0.0
    %2039 = vmatprep.subr.mxu0 0.0
    %2040 = vmatpush1.msra.mxu0 0.0
    %2041 = vmatprep.subr.mxu0 0.0
    %2042 = vmatpush1.msra.mxu0 0.0
    %2043 = vmatprep.subr.mxu0 0.0
    %2044 = vmatpush1.msra.mxu0 0.0
    %2045 = vmatprep.subr.mxu0 0.0
    %2046 = vmatpush1.msra.mxu0 0.0
    %2047 = vmatprep.subr.mxu0 0.0
    %2048 = vmatpush1.msra.mxu0 0.0
    %2049 = vmatprep.subr.mxu0 0.0
    %2050 = vmatpush1.msra.mxu0 0.0
    %2051 = vmatprep.subr.mxu0 0.0
    %2052 = vmatpush1.msra.mxu0 0.0
    %2053 = vmatprep.subr.mxu0 0.0
    %2054 = vmatpush1.msra.mxu0 0.0
    %2055 = vmatprep.subr.mxu0 0.0
    %2056 = vmatpush1.msra.mxu0 0.0
    %2057 = vmatprep.subr.mxu0 0.0
    %2058 = vmatpush1.msra.mxu0 0.0
    %2059 = vmatprep.subr.mxu0 0.0
    %2060 = vmatpush1.msra.mxu0 0.0
    %2061 = vmatprep.subr.mxu0 0.0
    %2062 = vmatpush1.msra.mxu0 0.0
    %2063 = vmatprep.mubr.f32.mxu0 0.0
    %2064 = vmatmul.mubr.f32.gmra.mrb[0].mxu0 %v1994
    %v2065 = vpop.f32.mrb[0].mxu0
    %v2066 = vadd.f32 0.0, %v2065
    %v2067 = vpop.f32.mrb[0].mxu0
    %2068 = vmatprep.mubr.f32.mxu0 0.0
    %2069 = vmatmul.mubr.f32.gmra.mrb[0].mxu0 %v1997
    %v2070 = vpop.f32.mrb[0].mxu0
    %v2071 = vadd.f32 0.0, %v2070
    %v2072 = vpop.f32.mrb[0].mxu0
    %2073 = vdwg.mxu0
    %2075 = vset.pattern.permute.xlu0 0
    %2076 = vperm.xlu0 %2075, %v1987
    %v2077 = vpop.permute.xlu0 %2076
    %2080 = vset.pattern.permute.xlu0 0
    %2081 = vperm.xlu0 %2080, %v1988
    %v2082 = vpop.permute.xlu0 %2081
    %v2084 = vmul.f32 %v2077, %v2066
    %v2085 = vmul.f32 %v2082, %v2071
    %v2086 = vmul.f32 %v1663, %v2084
    %v2087 = vmul.f32 %v1668, %v2085
    %2088 = vmatprep.subr.mxu0 0.0
    %2089 = vmatpush1.msra.mxu0 %v2084
    %2090 = vmatprep.subr.mxu0 0.0
    %2091 = vmatpush1.msra.mxu0 %v2085
    %2092 = vmatprep.subr.mxu0 0.0
    %2093 = vmatpush1.msra.mxu0 0.0
    %2094 = vmatprep.subr.mxu0 0.0
    %2095 = vmatpush1.msra.mxu0 0.0
    %2096 = vmatprep.subr.mxu0 0.0
    %2097 = vmatpush1.msra.mxu0 0.0
    %2098 = vmatprep.subr.mxu0 0.0
    %2099 = vmatpush1.msra.mxu0 0.0
    %2100 = vmatprep.subr.mxu0 0.0
    %2101 = vmatpush1.msra.mxu0 0.0
    %2102 = vmatprep.subr.mxu0 0.0
    %2103 = vmatpush1.msra.mxu0 0.0
    %2104 = vmatprep.subr.mxu0 0.0
    %2105 = vmatpush1.msra.mxu0 0.0
    %2106 = vmatprep.subr.mxu0 0.0
    %2107 = vmatpush1.msra.mxu0 0.0
    %2108 = vmatprep.subr.mxu0 0.0
    %2109 = vmatpush1.msra.mxu0 0.0
    %2110 = vmatprep.subr.mxu0 0.0
    %2111 = vmatpush1.msra.mxu0 0.0
    %2112 = vmatprep.subr.mxu0 0.0
    %2113 = vmatpush1.msra.mxu0 0.0
    %2114 = vmatprep.subr.mxu0 0.0
    %2115 = vmatpush1.msra.mxu0 0.0
    %2116 = vmatprep.subr.mxu0 0.0
    %2117 = vmatpush1.msra.mxu0 0.0
    %2118 = vmatprep.subr.mxu0 0.0
    %2119 = vmatpush1.msra.mxu0 0.0
    %2120 = vmatprep.subr.mxu0 0.0
    %2121 = vmatpush1.msra.mxu0 0.0
    %2122 = vmatprep.subr.mxu0 0.0
    %2123 = vmatpush1.msra.mxu0 0.0
    %2124 = vmatprep.subr.mxu0 0.0
    %2125 = vmatpush1.msra.mxu0 0.0
    %2126 = vmatprep.subr.mxu0 0.0
    %2127 = vmatpush1.msra.mxu0 0.0
    %2128 = vmatprep.subr.mxu0 0.0
    %2129 = vmatpush1.msra.mxu0 0.0
    %2130 = vmatprep.subr.mxu0 0.0
    %2131 = vmatpush1.msra.mxu0 0.0
    %2132 = vmatprep.subr.mxu0 0.0
    %2133 = vmatpush1.msra.mxu0 0.0
    %2134 = vmatprep.subr.mxu0 0.0
    %2135 = vmatpush1.msra.mxu0 0.0
    %2136 = vmatprep.subr.mxu0 0.0
    %2137 = vmatpush1.msra.mxu0 0.0
    %2138 = vmatprep.subr.mxu0 0.0
    %2139 = vmatpush1.msra.mxu0 0.0
    %2140 = vmatprep.subr.mxu0 0.0
    %2141 = vmatpush1.msra.mxu0 0.0
    %2142 = vmatprep.subr.mxu0 0.0
    %2143 = vmatpush1.msra.mxu0 0.0
    %2144 = vmatprep.subr.mxu0 0.0
    %2145 = vmatpush1.msra.mxu0 0.0
    %2146 = vmatprep.subr.mxu0 0.0
    %2147 = vmatpush1.msra.mxu0 0.0
    %2148 = vmatprep.subr.mxu0 0.0
    %2149 = vmatpush1.msra.mxu0 0.0
    %2150 = vmatprep.subr.mxu0 0.0
    %2151 = vmatpush1.msra.mxu0 0.0
    %2152 = vmatprep.mubr.f32.mxu0 0.0
    %2153 = vmatmul.mubr.f32.gmra.mrb[0].mxu0 %v289
    %v2154 = vpop.f32.mrb[0].mxu0
    %v2155 = vadd.f32 %v2086, %v2154
    %v2156 = vpop.f32.mrb[0].mxu0
    %2157 = vmatprep.mubr.f32.mxu0 0.0
    %2158 = vmatmul.mubr.f32.gmra.mrb[0].mxu0 %v292
    %v2159 = vpop.f32.mrb[0].mxu0
    %v2160 = vadd.f32 %v2087, %v2159
    %v2161 = vpop.f32.mrb[0].mxu0
    %2162 = vdwg.mxu0
    %v2163 = vmul.f32 %v2077, %v2155
    %v2164 = vmul.f32 %v2082, %v2160
    %v2165 = vld [vmem:[#allocation17] sm:$0x1]
    %v2167 = vlaneseq
    %v2168 = vshrl.u32 %v2167, 7
    %v2169 = vsub.s32 0, %v2168
    %v2170 = vrot.slane %v2165, %v2169
    %v2172 = vadd.f32 %v2163, %v2170
    %v2173 = vadd.f32 %v2164, %v2170
    %v2174 = vmax.f32 %v2172, 0.0
    %v2175 = vmax.f32 %v2173, 0.0
    %v2176 = vmul.f32 %v2174, %v1663
    %v2177 = vmul.f32 %v2175, %v1668
    %v2178 = vld [vmem:[#allocation19] sm:$0x1]
    %v2180 = vlaneseq
    %v2181 = vshrl.u32 %v2180, 7
    %v2182 = vsub.s32 0, %v2181
    %v2183 = vrot.slane %v2178, %v2182
    %v2185 = vmul.f32 %v2176, %v2183
    %v2186 = vmul.f32 %v2177, %v2183
    %v2187 = vsel %vm573, %v2185, 0.0
    %2188 = vadd.xlane.f32.xlu0 %v2187
    %v2189 = vpop.xlane.xlu0 %2188
    %v2190 = vsel %vm573, %v2186, 0.0
    %2191 = vadd.xlane.f32.xlu0 %v2190
    %v2192 = vpop.xlane.xlu0 %2191
    %v2193 = vld [vmem:[#allocation20] sm:$0x1]
    %v2195 = vlaneseq
    %v2196 = vshrl.u32 %v2195, 7
    %v2197 = vsub.s32 0, %v2196
    %v2198 = vrot.slane %v2193, %v2197
    %v2200 = vmul.f32 %v2176, %v2198
    %v2201 = vmul.f32 %v2177, %v2198
    %v2202 = vsel %vm573, %v2200, 0.0
    %2203 = vadd.xlane.f32.xlu0 %v2202
    %v2204 = vpop.xlane.xlu0 %2203
    %v2205 = vsel %vm573, %v2201, 0.0
    %2206 = vadd.xlane.f32.xlu0 %v2205
    %v2207 = vpop.xlane.xlu0 %2206
    %2208 = vmatprep.subr.mxu0 0.0
    %2209 = vmatpush1.msra.mxu0 %v2189
    %2210 = vmatprep.subr.mxu0 0.0
    %2211 = vmatpush1.msra.mxu0 %v2192
    %2212 = vmatprep.subr.mxu0 0.0
    %2213 = vmatpush1.msra.mxu0 0.0
    %2214 = vmatprep.subr.mxu0 0.0
    %2215 = vmatpush1.msra.mxu0 0.0
    %2216 = vmatprep.subr.mxu0 0.0
    %2217 = vmatpush1.msra.mxu0 0.0
    %2218 = vmatprep.subr.mxu0 0.0
    %2219 = vmatpush1.msra.mxu0 0.0
    %2220 = vmatprep.subr.mxu0 0.0
    %2221 = vmatpush1.msra.mxu0 0.0
    %2222 = vmatprep.subr.mxu0 0.0
    %2223 = vmatpush1.msra.mxu0 0.0
    %2224 = vmatprep.subr.mxu0 0.0
    %2225 = vmatpush1.msra.mxu0 0.0
    %2226 = vmatprep.subr.mxu0 0.0
    %2227 = vmatpush1.msra.mxu0 0.0
    %2228 = vmatprep.subr.mxu0 0.0
    %2229 = vmatpush1.msra.mxu0 0.0
    %2230 = vmatprep.subr.mxu0 0.0
    %2231 = vmatpush1.msra.mxu0 0.0
    %2232 = vmatprep.subr.mxu0 0.0
    %2233 = vmatpush1.msra.mxu0 0.0
    %2234 = vmatprep.subr.mxu0 0.0
    %2235 = vmatpush1.msra.mxu0 0.0
    %2236 = vmatprep.subr.mxu0 0.0
    %2237 = vmatpush1.msra.mxu0 0.0
    %2238 = vmatprep.subr.mxu0 0.0
    %2239 = vmatpush1.msra.mxu0 0.0
    %2240 = vmatprep.subr.mxu0 0.0
    %2241 = vmatpush1.msra.mxu0 0.0
    %2242 = vmatprep.subr.mxu0 0.0
    %2243 = vmatpush1.msra.mxu0 0.0
    %2244 = vmatprep.subr.mxu0 0.0
    %2245 = vmatpush1.msra.mxu0 0.0
    %2246 = vmatprep.subr.mxu0 0.0
    %2247 = vmatpush1.msra.mxu0 0.0
    %2248 = vmatprep.subr.mxu0 0.0
    %2249 = vmatpush1.msra.mxu0 0.0
    %2250 = vmatprep.subr.mxu0 0.0
    %2251 = vmatpush1.msra.mxu0 0.0
    %2252 = vmatprep.subr.mxu0 0.0
    %2253 = vmatpush1.msra.mxu0 0.0
    %2254 = vmatprep.subr.mxu0 0.0
    %2255 = vmatpush1.msra.mxu0 0.0
    %2256 = vmatprep.subr.mxu0 0.0
    %2257 = vmatpush1.msra.mxu0 0.0
    %2258 = vmatprep.subr.mxu0 0.0
    %2259 = vmatpush1.msra.mxu0 0.0
    %2260 = vmatprep.subr.mxu0 0.0
    %2261 = vmatpush1.msra.mxu0 0.0
    %2262 = vmatprep.subr.mxu0 0.0
    %2263 = vmatpush1.msra.mxu0 0.0
    %2264 = vmatprep.subr.mxu0 0.0
    %2265 = vmatpush1.msra.mxu0 0.0
    %2266 = vmatprep.subr.mxu0 0.0
    %2267 = vmatpush1.msra.mxu0 0.0
    %2268 = vmatprep.subr.mxu0 0.0
    %2269 = vmatpush1.msra.mxu0 0.0
    %2270 = vmatprep.subr.mxu0 0.0
    %2271 = vmatpush1.msra.mxu0 0.0
    %2272 = vmatprep.mubr.f32.mxu0 0.0
    %2273 = vmatmul.mubr.f32.gmra.mrb[0].mxu0 %v289
    %v2274 = vpop.f32.mrb[0].mxu0
    %v2275 = vadd.f32 %v2204, %v2274
    %v2276 = vpop.f32.mrb[0].mxu0
    %2277 = vmatprep.mubr.f32.mxu0 0.0
    %2278 = vmatmul.mubr.f32.gmra.mrb[0].mxu0 %v292
    %v2279 = vpop.f32.mrb[0].mxu0
    %v2280 = vadd.f32 %v2207, %v2279
    %v2281 = vpop.f32.mrb[0].mxu0
    %2282 = vdwg.mxu0
    %v2283 = vld [vmem:[#allocation4] sm:$0x1]
    %v2285 = vlaneseq
    %v2286 = vshrl.u32 %v2285, 7
    %v2287 = vsub.s32 0, %v2286
    %v2288 = vrot.slane %v2283, %v2287
    %v2290 = vadd.f32 %v2275, %v2288
    %v2291 = vadd.f32 %v2280, %v2288
    %2293 = vset.pattern.permute.xlu0 0
    %2294 = vperm.xlu0 %2293, %v2290
    %v2295 = vpop.permute.xlu0 %2294
    %2298 = vset.pattern.permute.xlu0 0
    %2299 = vperm.xlu0 %2298, %v2291
    %v2300 = vpop.permute.xlu0 %2299
    %2302 = vxpose.xlu0.b32.start [1/16] %v2295, 128
    %2303 = vxpose.xlu0.b32.cont [2/16] %v2300, 128
    %2304 = vxpose.xlu0.b32.cont [3/16] 0.0, 128
    %2305 = vxpose.xlu0.b32.cont [4/16] 0.0, 128
    %2306 = vxpose.xlu0.b32.cont [5/16] 0.0, 128
    %2307 = vxpose.xlu0.b32.cont [6/16] 0.0, 128
    %2308 = vxpose.xlu0.b32.cont [7/16] 0.0, 128
    %2309 = vxpose.xlu0.b32.cont [8/16] 0.0, 128
    %2310 = vxpose.xlu0.b32.cont [9/16] 0.0, 128
    %2311 = vxpose.xlu0.b32.cont [10/16] 0.0, 128
    %2312 = vxpose.xlu0.b32.cont [11/16] 0.0, 128
    %2313 = vxpose.xlu0.b32.cont [12/16] 0.0, 128
    %2314 = vxpose.xlu0.b32.cont [13/16] 0.0, 128
    %2315 = vxpose.xlu0.b32.cont [14/16] 0.0, 128
    %2316 = vxpose.xlu0.b32.cont [15/16] 0.0, 128
    %2317 = vxpose.xlu0.b32.end [16/16] 0.0, 128
    %v2318 = vpop.trf.xlu0
    %v2319 = vpop.trf.xlu0
    %v2320 = vpop.trf.xlu0
    %v2321 = vpop.trf.xlu0
    %v2322 = vpop.trf.xlu0
    %v2323 = vpop.trf.xlu0
    %v2324 = vpop.trf.xlu0
    %v2325 = vpop.trf.xlu0
    %v2326 = vpop.trf.xlu0
    %v2327 = vpop.trf.xlu0
    %v2328 = vpop.trf.xlu0
    %v2329 = vpop.trf.xlu0
    %v2330 = vpop.trf.xlu0
    %v2331 = vpop.trf.xlu0
    %v2332 = vpop.trf.xlu0
    %v2333 = vpop.trf.xlu0
    %vm2334 = vcmp.gt.f32.partialorder %v2318, %v2295
    %vm2335 = vcmp.gt.f32.partialorder %v2319, %v2300
    %vm2336 = vcmp.eq.f32.partialorder %v2318, %v2295
    %vm2337 = vcmp.eq.f32.partialorder %v2319, %v2300
    %v2338 = vsel %vm2336, %v280, 0.0
    %v2339 = vsel %vm2337, %v281, 0.0
    %v2340 = vsel %vm2334, 1.0, %v2338
    %v2341 = vsel %vm2335, 1.0, %v2339
    %v2342 = vmul.f32 %v2340, %v269
    %v2343 = vmul.f32 %v2341, %v270
    %v2345 = vsel %vm287, %v2342, 0
    %v2348 = vsel %vm287, %v2343, 0
    %2350 = vmatprep.subr.mxu0 0.0
    %2351 = vmatpush1.msra.mxu0 %v1644
    %2352 = vmatprep.subr.mxu0 0.0
    %2353 = vmatpush1.msra.mxu0 %v1645
    %2354 = vmatprep.subr.mxu0 0.0
    %2355 = vmatpush1.msra.mxu0 0.0
    %2356 = vmatprep.subr.mxu0 0.0
    %2357 = vmatpush1.msra.mxu0 0.0
    %2358 = vmatprep.subr.mxu0 0.0
    %2359 = vmatpush1.msra.mxu0 0.0
    %2360 = vmatprep.subr.mxu0 0.0
    %2361 = vmatpush1.msra.mxu0 0.0
    %2362 = vmatprep.subr.mxu0 0.0
    %2363 = vmatpush1.msra.mxu0 0.0
    %2364 = vmatprep.subr.mxu0 0.0
    %2365 = vmatpush1.msra.mxu0 0.0
    %2366 = vmatprep.subr.mxu0 0.0
    %2367 = vmatpush1.msra.mxu0 0.0
    %2368 = vmatprep.subr.mxu0 0.0
    %2369 = vmatpush1.msra.mxu0 0.0
    %2370 = vmatprep.subr.mxu0 0.0
    %2371 = vmatpush1.msra.mxu0 0.0
    %2372 = vmatprep.subr.mxu0 0.0
    %2373 = vmatpush1.msra.mxu0 0.0
    %2374 = vmatprep.subr.mxu0 0.0
    %2375 = vmatpush1.msra.mxu0 0.0
    %2376 = vmatprep.subr.mxu0 0.0
    %2377 = vmatpush1.msra.mxu0 0.0
    %2378 = vmatprep.subr.mxu0 0.0
    %2379 = vmatpush1.msra.mxu0 0.0
    %2380 = vmatprep.subr.mxu0 0.0
    %2381 = vmatpush1.msra.mxu0 0.0
    %2382 = vmatprep.subr.mxu0 0.0
    %2383 = vmatpush1.msra.mxu0 0.0
    %2384 = vmatprep.subr.mxu0 0.0
    %2385 = vmatpush1.msra.mxu0 0.0
    %2386 = vmatprep.subr.mxu0 0.0
    %2387 = vmatpush1.msra.mxu0 0.0
    %2388 = vmatprep.subr.mxu0 0.0
    %2389 = vmatpush1.msra.mxu0 0.0
    %2390 = vmatprep.subr.mxu0 0.0
    %2391 = vmatpush1.msra.mxu0 0.0
    %2392 = vmatprep.subr.mxu0 0.0
    %2393 = vmatpush1.msra.mxu0 0.0
    %2394 = vmatprep.subr.mxu0 0.0
    %2395 = vmatpush1.msra.mxu0 0.0
    %2396 = vmatprep.subr.mxu0 0.0
    %2397 = vmatpush1.msra.mxu0 0.0
    %2398 = vmatprep.subr.mxu0 0.0
    %2399 = vmatpush1.msra.mxu0 0.0
    %2400 = vmatprep.subr.mxu0 0.0
    %2401 = vmatpush1.msra.mxu0 0.0
    %2402 = vmatprep.subr.mxu0 0.0
    %2403 = vmatpush1.msra.mxu0 0.0
    %2404 = vmatprep.subr.mxu0 0.0
    %2405 = vmatpush1.msra.mxu0 0.0
    %2406 = vmatprep.subr.mxu0 0.0
    %2407 = vmatpush1.msra.mxu0 0.0
    %2408 = vmatprep.subr.mxu0 0.0
    %2409 = vmatpush1.msra.mxu0 0.0
    %2410 = vmatprep.subr.mxu0 0.0
    %2411 = vmatpush1.msra.mxu0 0.0
    %2412 = vmatprep.subr.mxu0 0.0
    %2413 = vmatpush1.msra.mxu0 0.0
    %2414 = vmatprep.mubr.f32.mxu0 0.0
    %2415 = vmatmul.mubr.f32.gmra.mrb[0].mxu0 %v2345
    %v2416 = vpop.f32.mrb[0].mxu0
    %v2417 = vadd.f32 0.0, %v2416
    %v2418 = vpop.f32.mrb[0].mxu0
    %2419 = vmatprep.mubr.f32.mxu0 0.0
    %2420 = vmatmul.mubr.f32.gmra.mrb[0].mxu0 %v2348
    %v2421 = vpop.f32.mrb[0].mxu0
    %v2422 = vadd.f32 0.0, %v2421
    %v2423 = vpop.f32.mrb[0].mxu0
    %2424 = vdwg.mxu0
    %2425 = vmatprep.subr.mxu0 0.0
    %2426 = vmatpush1.msra.mxu0 %v1644
    %2427 = vmatprep.subr.mxu0 0.0
    %2428 = vmatpush1.msra.mxu0 %v1645
    %2429 = vmatprep.subr.mxu0 0.0
    %2430 = vmatpush1.msra.mxu0 0.0
    %2431 = vmatprep.subr.mxu0 0.0
    %2432 = vmatpush1.msra.mxu0 0.0
    %2433 = vmatprep.subr.mxu0 0.0
    %2434 = vmatpush1.msra.mxu0 0.0
    %2435 = vmatprep.subr.mxu0 0.0
    %2436 = vmatpush1.msra.mxu0 0.0
    %2437 = vmatprep.subr.mxu0 0.0
    %2438 = vmatpush1.msra.mxu0 0.0
    %2439 = vmatprep.subr.mxu0 0.0
    %2440 = vmatpush1.msra.mxu0 0.0
    %2441 = vmatprep.subr.mxu0 0.0
    %2442 = vmatpush1.msra.mxu0 0.0
    %2443 = vmatprep.subr.mxu0 0.0
    %2444 = vmatpush1.msra.mxu0 0.0
    %2445 = vmatprep.subr.mxu0 0.0
    %2446 = vmatpush1.msra.mxu0 0.0
    %2447 = vmatprep.subr.mxu0 0.0
    %2448 = vmatpush1.msra.mxu0 0.0
    %2449 = vmatprep.subr.mxu0 0.0
    %2450 = vmatpush1.msra.mxu0 0.0
    %2451 = vmatprep.subr.mxu0 0.0
    %2452 = vmatpush1.msra.mxu0 0.0
    %2453 = vmatprep.subr.mxu0 0.0
    %2454 = vmatpush1.msra.mxu0 0.0
    %2455 = vmatprep.subr.mxu0 0.0
    %2456 = vmatpush1.msra.mxu0 0.0
    %2457 = vmatprep.subr.mxu0 0.0
    %2458 = vmatpush1.msra.mxu0 0.0
    %2459 = vmatprep.subr.mxu0 0.0
    %2460 = vmatpush1.msra.mxu0 0.0
    %2461 = vmatprep.subr.mxu0 0.0
    %2462 = vmatpush1.msra.mxu0 0.0
    %2463 = vmatprep.subr.mxu0 0.0
    %2464 = vmatpush1.msra.mxu0 0.0
    %2465 = vmatprep.subr.mxu0 0.0
    %2466 = vmatpush1.msra.mxu0 0.0
    %2467 = vmatprep.subr.mxu0 0.0
    %2468 = vmatpush1.msra.mxu0 0.0
    %2469 = vmatprep.subr.mxu0 0.0
    %2470 = vmatpush1.msra.mxu0 0.0
    %2471 = vmatprep.subr.mxu0 0.0
    %2472 = vmatpush1.msra.mxu0 0.0
    %2473 = vmatprep.subr.mxu0 0.0
    %2474 = vmatpush1.msra.mxu0 0.0
    %2475 = vmatprep.subr.mxu0 0.0
    %2476 = vmatpush1.msra.mxu0 0.0
    %2477 = vmatprep.subr.mxu0 0.0
    %2478 = vmatpush1.msra.mxu0 0.0
    %2479 = vmatprep.subr.mxu0 0.0
    %2480 = vmatpush1.msra.mxu0 0.0
    %2481 = vmatprep.subr.mxu0 0.0
    %2482 = vmatpush1.msra.mxu0 0.0
    %2483 = vmatprep.subr.mxu0 0.0
    %2484 = vmatpush1.msra.mxu0 0.0
    %2485 = vmatprep.subr.mxu0 0.0
    %2486 = vmatpush1.msra.mxu0 0.0
    %2487 = vmatprep.subr.mxu0 0.0
    %2488 = vmatpush1.msra.mxu0 0.0
    %2489 = vmatprep.mubr.f32.mxu0 0.0
    %2490 = vmatmul.mubr.f32.gmra.mrb[0].mxu0 %v813
    %v2491 = vpop.f32.mrb[0].mxu0
    %v2492 = vadd.f32 0.0, %v2491
    %v2493 = vpop.f32.mrb[0].mxu0
    %2494 = vmatprep.mubr.f32.mxu0 0.0
    %2495 = vmatmul.mubr.f32.gmra.mrb[0].mxu0 %v816
    %v2496 = vpop.f32.mrb[0].mxu0
    %v2497 = vadd.f32 0.0, %v2496
    %v2498 = vpop.f32.mrb[0].mxu0
    %2499 = vdwg.mxu0
    %v2500 = vmul.f32 %v2492, 0.5
    %v2501 = vmul.f32 %v2497, 0.5
    %v2502 = vceil.f32 %v2500
    %v2503 = vceil.f32 %v2501
    %vm2504 = vcmp.gt.f32.partialorder %v1644, 0.0
    %vm2505 = vcmp.gt.f32.partialorder %v1645, 0.0
    %vm2506 = vcmp.lt.f32.partialorder %v2417, %v2502
    %vm2507 = vcmp.lt.f32.partialorder %v2422, %v2503
    %vm2508 = vmand %vm2504, %vm2506
    %vm2509 = vmand %vm2505, %vm2507
    %v2510 = vsel %vm2508, 1.0, 0.0
    %v2511 = vsel %vm2509, 1.0, 0.0
    %v2512 = vtanh.pop %v2290
    %v2513 = vtanh.pop %v2291
    %2515 = vset.pattern.permute.xlu0 0
    %2516 = vperm.xlu0 %2515, %v2512
    %v2517 = vpop.permute.xlu0 %2516
    %2520 = vset.pattern.permute.xlu0 0
    %2521 = vperm.xlu0 %2520, %v2513
    %v2522 = vpop.permute.xlu0 %2521
    %v2524 = vmul.f32 %v2176, %v2517
    %v2525 = vmul.f32 %v2177, %v2522
    %2527 = vset.pattern.permute.xlu0 0
    %2528 = vperm.xlu0 %2527, %v2510
    %v2529 = vpop.permute.xlu0 %2528
    %2532 = vset.pattern.permute.xlu0 0
    %2533 = vperm.xlu0 %2532, %v2511
    %v2534 = vpop.permute.xlu0 %2533
    %v2536 = vmul.f32 %v2524, %v2529
    %v2537 = vmul.f32 %v2525, %v2534
    %2538 = vmatprep.subr.mxu0 0.0
    %2539 = vmatpush1.msra.mxu0 %v2536
    %2540 = vmatprep.subr.mxu0 0.0
    %2541 = vmatpush1.msra.mxu0 %v2537
    %2542 = vmatprep.subr.mxu0 0.0
    %2543 = vmatpush1.msra.mxu0 0.0
    %2544 = vmatprep.subr.mxu0 0.0
    %2545 = vmatpush1.msra.mxu0 0.0
    %2546 = vmatprep.subr.mxu0 0.0
    %2547 = vmatpush1.msra.mxu0 0.0
    %2548 = vmatprep.subr.mxu0 0.0
    %2549 = vmatpush1.msra.mxu0 0.0
    %2550 = vmatprep.subr.mxu0 0.0
    %2551 = vmatpush1.msra.mxu0 0.0
    %2552 = vmatprep.subr.mxu0 0.0
    %2553 = vmatpush1.msra.mxu0 0.0
    %2554 = vmatprep.subr.mxu0 0.0
    %2555 = vmatpush1.msra.mxu0 0.0
    %2556 = vmatprep.subr.mxu0 0.0
    %2557 = vmatpush1.msra.mxu0 0.0
    %2558 = vmatprep.subr.mxu0 0.0
    %2559 = vmatpush1.msra.mxu0 0.0
    %2560 = vmatprep.subr.mxu0 0.0
    %2561 = vmatpush1.msra.mxu0 0.0
    %2562 = vmatprep.subr.mxu0 0.0
    %2563 = vmatpush1.msra.mxu0 0.0
    %2564 = vmatprep.subr.mxu0 0.0
    %2565 = vmatpush1.msra.mxu0 0.0
    %2566 = vmatprep.subr.mxu0 0.0
    %2567 = vmatpush1.msra.mxu0 0.0
    %2568 = vmatprep.subr.mxu0 0.0
    %2569 = vmatpush1.msra.mxu0 0.0
    %2570 = vmatprep.subr.mxu0 0.0
    %2571 = vmatpush1.msra.mxu0 0.0
    %2572 = vmatprep.subr.mxu0 0.0
    %2573 = vmatpush1.msra.mxu0 0.0
    %2574 = vmatprep.subr.mxu0 0.0
    %2575 = vmatpush1.msra.mxu0 0.0
    %2576 = vmatprep.subr.mxu0 0.0
    %2577 = vmatpush1.msra.mxu0 0.0
    %2578 = vmatprep.subr.mxu0 0.0
    %2579 = vmatpush1.msra.mxu0 0.0
    %2580 = vmatprep.subr.mxu0 0.0
    %2581 = vmatpush1.msra.mxu0 0.0
    %2582 = vmatprep.subr.mxu0 0.0
    %2583 = vmatpush1.msra.mxu0 0.0
    %2584 = vmatprep.subr.mxu0 0.0
    %2585 = vmatpush1.msra.mxu0 0.0
    %2586 = vmatprep.subr.mxu0 0.0
    %2587 = vmatpush1.msra.mxu0 0.0
    %2588 = vmatprep.subr.mxu0 0.0
    %2589 = vmatpush1.msra.mxu0 0.0
    %2590 = vmatprep.subr.mxu0 0.0
    %2591 = vmatpush1.msra.mxu0 0.0
    %2592 = vmatprep.subr.mxu0 0.0
    %2593 = vmatpush1.msra.mxu0 0.0
    %2594 = vmatprep.subr.mxu0 0.0
    %2595 = vmatpush1.msra.mxu0 0.0
    %2596 = vmatprep.subr.mxu0 0.0
    %2597 = vmatpush1.msra.mxu0 0.0
    %2598 = vmatprep.subr.mxu0 0.0
    %2599 = vmatpush1.msra.mxu0 0.0
    %2600 = vmatprep.subr.mxu0 0.0
    %2601 = vmatpush1.msra.mxu0 0.0
    %2602 = vmatprep.mubr.f32.mxu0 0.0
    %2603 = vmatmul.mubr.f32.gmra.mrb[0].mxu0 %v1673
    %v2604 = vpop.f32.mrb[0].mxu0
    %v2605 = vadd.f32 0.0, %v2604
    %v2606 = vpop.f32.mrb[0].mxu0
    %2607 = vdwg.mxu0
    %v2608 = vadd.f32 %v1812, %v2605
    %v2609 = vmul.f32 %v934, %v2510
    %v2610 = vmul.f32 %v935, %v2511
    %v2611 = vsub.f32 %v2609, 1.0
    %v2612 = vsub.f32 %v2610, 1.0
    %v2613 = vmul.f32 %v2611, 3e+38
    %v2614 = vmul.f32 %v2612, 3e+38
    %2616 = vset.pattern.permute.xlu0 0
    %2617 = vperm.xlu0 %2616, %v2613
    %v2618 = vpop.permute.xlu0 %2617
    %2621 = vset.pattern.permute.xlu0 0
    %2622 = vperm.xlu0 %2621, %v2614
    %v2623 = vpop.permute.xlu0 %2622
    %v2625 = vadd.f32 %v2536, %v2618
    %v2626 = vadd.f32 %v2537, %v2623
    %v2627 = vsel %vm573, %v2625, -inf
    %v2628 = vsel %vm573, %v2626, -inf
    %v2629 = vmax.f32 %v2627, %v2628
    %v2630 = vrot.slane %v2629, 4
    %v2631 = vmax.f32 %v2629, %v2630
    %v2632 = vrot.slane %v2631, 2
    %v2633 = vmax.f32 %v2631, %v2632
    %v2634 = vrot.slane %v2633, 1
    %v2635 = vmax.f32 %v2633, %v2634
    %v2636 = vsel %vm963, %v2609, -inf
    %v2637 = vsel %vm963, %v2610, -inf
    %v2638 = vmax.f32 %v2636, %v2637
    %v2639 = vrot.slane %v2638, 4
    %v2640 = vmax.f32 %v2638, %v2639
    %v2641 = vrot.slane %v2640, 2
    %v2642 = vmax.f32 %v2640, %v2641
    %v2643 = vrot.slane %v2642, 1
    %v2644 = vmax.f32 %v2642, %v2643
    %vm2645 = vcmp.gt.f32.partialorder %v2644, 0.0
    %v2646 = vsel %vm2645, 1, 0
    %2647 = vset.pattern.permute.xlu0 0
    %2648 = vperm.xlu0 %2647, %v2646
    %v2649 = vpop.permute.xlu0 %2648
    %vm2650 = vcmp.eq.s32.totalorder %v2649, 1
    %v2651 = vsel %vm2650, %v2635, 0.0
    %v2652 = vsel %vm982, %v2651, 0.0
    %v2653 = vadd.f32 %v2652, 0.0
    %v2654 = vmul.f32 %v989, %v2510
    %v2655 = vmul.f32 %v990, %v2511
    %v2656 = vsub.f32 %v2654, 1.0
    %v2657 = vsub.f32 %v2655, 1.0
    %v2658 = vmul.f32 %v2656, 3e+38
    %v2659 = vmul.f32 %v2657, 3e+38
    %2661 = vset.pattern.permute.xlu0 0
    %2662 = vperm.xlu0 %2661, %v2658
    %v2663 = vpop.permute.xlu0 %2662
    %2666 = vset.pattern.permute.xlu0 0
    %2667 = vperm.xlu0 %2666, %v2659
    %v2668 = vpop.permute.xlu0 %2667
    %v2670 = vadd.f32 %v2536, %v2663
    %v2671 = vadd.f32 %v2537, %v2668
    %v2672 = vsel %vm573, %v2670, -inf
    %v2673 = vsel %vm573, %v2671, -inf
    %v2674 = vmax.f32 %v2672, %v2673
    %v2675 = vrot.slane %v2674, 4
    %v2676 = vmax.f32 %v2674, %v2675
    %v2677 = vrot.slane %v2676, 2
    %v2678 = vmax.f32 %v2676, %v2677
    %v2679 = vrot.slane %v2678, 1
    %v2680 = vmax.f32 %v2678, %v2679
    %v2681 = vsel %vm963, %v2654, -inf
    %v2682 = vsel %vm963, %v2655, -inf
    %v2683 = vmax.f32 %v2681, %v2682
    %v2684 = vrot.slane %v2683, 4
    %v2685 = vmax.f32 %v2683, %v2684
    %v2686 = vrot.slane %v2685, 2
    %v2687 = vmax.f32 %v2685, %v2686
    %v2688 = vrot.slane %v2687, 1
    %v2689 = vmax.f32 %v2687, %v2688
    %vm2690 = vcmp.gt.f32.partialorder %v2689, 0.0
    %v2691 = vsel %vm2690, 1, 0
    %2692 = vset.pattern.permute.xlu0 0
    %2693 = vperm.xlu0 %2692, %v2691
    %v2694 = vpop.permute.xlu0 %2693
    %vm2695 = vcmp.eq.s32.totalorder %v2694, 1
    %v2696 = vsel %vm2695, %v2680, 0.0
    %v2697 = vsel %vm1036, %v2696, 0.0
    %v2698 = vadd.f32 %v2653, %v2697
    %v2699 = vadd.f32 %v1905, %v2698
    %v2700 = vld [vmem:[%s20] sm:$0xff]
    %v2701 = vld [vmem:[%s20 + $0x8] sm:$0xff]
    %v2702 = vld [vmem:[%s20 + $0x10] sm:$0xff]
    %v2703 = vld [vmem:[%s20 + $0x18] sm:$0xff]
    %v2704 = vld [vmem:[#allocation22] sm:$0xff]
    %v2705 = vld [vmem:[#allocation22 + $0x8] sm:$0xff]
    %v2706 = vld [vmem:[#allocation22 + $0x10] sm:$0xff]
    %v2707 = vld [vmem:[#allocation22 + $0x18] sm:$0xff]
    %v2709 = vsel %vm573, %v2608, 0
    %2711 = vmatprep.subr.mxu0 0.0
    %2712 = vmatpush1.msra.mxu0 %v2704
    %2713 = vmatprep.subr.mxu0 0.0
    %2714 = vmatpush1.msra.mxu0 %v2705
    %2715 = vmatprep.subr.mxu0 0.0
    %2716 = vmatpush1.msra.mxu0 %v2706
    %2717 = vmatprep.subr.mxu0 0.0
    %2718 = vmatpush1.msra.mxu0 %v2707
    %2719 = vmatprep.subr.mxu0 0.0
    %2720 = vmatpush1.msra.mxu0 0.0
    %2721 = vmatprep.subr.mxu0 0.0
    %2722 = vmatpush1.msra.mxu0 0.0
    %2723 = vmatprep.subr.mxu0 0.0
    %2724 = vmatpush1.msra.mxu0 0.0
    %2725 = vmatprep.subr.mxu0 0.0
    %2726 = vmatpush1.msra.mxu0 0.0
    %2727 = vmatprep.subr.mxu0 0.0
    %2728 = vmatpush1.msra.mxu0 0.0
    %2729 = vmatprep.subr.mxu0 0.0
    %2730 = vmatpush1.msra.mxu0 0.0
    %2731 = vmatprep.subr.mxu0 0.0
    %2732 = vmatpush1.msra.mxu0 0.0
    %2733 = vmatprep.subr.mxu0 0.0
    %2734 = vmatpush1.msra.mxu0 0.0
    %2735 = vmatprep.subr.mxu0 0.0
    %2736 = vmatpush1.msra.mxu0 0.0
    %2737 = vmatprep.subr.mxu0 0.0
    %2738 = vmatpush1.msra.mxu0 0.0
    %2739 = vmatprep.subr.mxu0 0.0
    %2740 = vmatpush1.msra.mxu0 0.0
    %2741 = vmatprep.subr.mxu0 0.0
    %2742 = vmatpush1.msra.mxu0 0.0
    %2743 = vmatprep.subr.mxu0 0.0
    %2744 = vmatpush1.msra.mxu0 0.0
    %2745 = vmatprep.subr.mxu0 0.0
    %2746 = vmatpush1.msra.mxu0 0.0
    %2747 = vmatprep.subr.mxu0 0.0
    %2748 = vmatpush1.msra.mxu0 0.0
    %2749 = vmatprep.subr.mxu0 0.0
    %2750 = vmatpush1.msra.mxu0 0.0
    %2751 = vmatprep.subr.mxu0 0.0
    %2752 = vmatpush1.msra.mxu0 0.0
    %2753 = vmatprep.subr.mxu0 0.0
    %2754 = vmatpush1.msra.mxu0 0.0
    %2755 = vmatprep.subr.mxu0 0.0
    %2756 = vmatpush1.msra.mxu0 0.0
    %2757 = vmatprep.subr.mxu0 0.0
    %2758 = vmatpush1.msra.mxu0 0.0
    %2759 = vmatprep.subr.mxu0 0.0
    %2760 = vmatpush1.msra.mxu0 0.0
    %2761 = vmatprep.subr.mxu0 0.0
    %2762 = vmatpush1.msra.mxu0 0.0
    %2763 = vmatprep.subr.mxu0 0.0
    %2764 = vmatpush1.msra.mxu0 0.0
    %2765 = vmatprep.subr.mxu0 0.0
    %2766 = vmatpush1.msra.mxu0 0.0
    %2767 = vmatprep.subr.mxu0 0.0
    %2768 = vmatpush1.msra.mxu0 0.0
    %2769 = vmatprep.subr.mxu0 0.0
    %2770 = vmatpush1.msra.mxu0 0.0
    %2771 = vmatprep.subr.mxu0 0.0
    %2772 = vmatpush1.msra.mxu0 0.0
    %2773 = vmatprep.subr.mxu0 0.0
    %2774 = vmatpush1.msra.mxu0 0.0
    %2775 = vmatprep.mubr.f32.mxu0 0.0
    %2776 = vmatmul.mubr.f32.gmra.mrb[0].mxu0 %v2709
    %v2777 = vpop.f32.mrb[0].mxu0
    %v2778 = vadd.f32 0.0, %v2777
    %v2779 = vpop.f32.mrb[0].mxu0
    %2780 = vdwg.mxu0
    %v2782 = vsel %vm573, %v2699, 0
    %2784 = vmatprep.subr.mxu0 0.0
    %2785 = vmatpush1.msra.mxu0 %v2700
    %2786 = vmatprep.subr.mxu0 0.0
    %2787 = vmatpush1.msra.mxu0 %v2701
    %2788 = vmatprep.subr.mxu0 0.0
    %2789 = vmatpush1.msra.mxu0 %v2702
    %2790 = vmatprep.subr.mxu0 0.0
    %2791 = vmatpush1.msra.mxu0 %v2703
    %2792 = vmatprep.subr.mxu0 0.0
    %2793 = vmatpush1.msra.mxu0 0.0
    %2794 = vmatprep.subr.mxu0 0.0
    %2795 = vmatpush1.msra.mxu0 0.0
    %2796 = vmatprep.subr.mxu0 0.0
    %2797 = vmatpush1.msra.mxu0 0.0
    %2798 = vmatprep.subr.mxu0 0.0
    %2799 = vmatpush1.msra.mxu0 0.0
    %2800 = vmatprep.subr.mxu0 0.0
    %2801 = vmatpush1.msra.mxu0 0.0
    %2802 = vmatprep.subr.mxu0 0.0
    %2803 = vmatpush1.msra.mxu0 0.0
    %2804 = vmatprep.subr.mxu0 0.0
    %2805 = vmatpush1.msra.mxu0 0.0
    %2806 = vmatprep.subr.mxu0 0.0
    %2807 = vmatpush1.msra.mxu0 0.0
    %2808 = vmatprep.subr.mxu0 0.0
    %2809 = vmatpush1.msra.mxu0 0.0
    %2810 = vmatprep.subr.mxu0 0.0
    %2811 = vmatpush1.msra.mxu0 0.0
    %2812 = vmatprep.subr.mxu0 0.0
    %2813 = vmatpush1.msra.mxu0 0.0
    %2814 = vmatprep.subr.mxu0 0.0
    %2815 = vmatpush1.msra.mxu0 0.0
    %2816 = vmatprep.subr.mxu0 0.0
    %2817 = vmatpush1.msra.mxu0 0.0
    %2818 = vmatprep.subr.mxu0 0.0
    %2819 = vmatpush1.msra.mxu0 0.0
    %2820 = vmatprep.subr.mxu0 0.0
    %2821 = vmatpush1.msra.mxu0 0.0
    %2822 = vmatprep.subr.mxu0 0.0
    %2823 = vmatpush1.msra.mxu0 0.0
    %2824 = vmatprep.subr.mxu0 0.0
    %2825 = vmatpush1.msra.mxu0 0.0
    %2826 = vmatprep.subr.mxu0 0.0
    %2827 = vmatpush1.msra.mxu0 0.0
    %2828 = vmatprep.subr.mxu0 0.0
    %2829 = vmatpush1.msra.mxu0 0.0
    %2830 = vmatprep.subr.mxu0 0.0
    %2831 = vmatpush1.msra.mxu0 0.0
    %2832 = vmatprep.subr.mxu0 0.0
    %2833 = vmatpush1.msra.mxu0 0.0
    %2834 = vmatprep.subr.mxu0 0.0
    %2835 = vmatpush1.msra.mxu0 0.0
    %2836 = vmatprep.subr.mxu0 0.0
    %2837 = vmatpush1.msra.mxu0 0.0
    %2838 = vmatprep.subr.mxu0 0.0
    %2839 = vmatpush1.msra.mxu0 0.0
    %2840 = vmatprep.subr.mxu0 0.0
    %2841 = vmatpush1.msra.mxu0 0.0
    %2842 = vmatprep.subr.mxu0 0.0
    %2843 = vmatpush1.msra.mxu0 0.0
    %2844 = vmatprep.subr.mxu0 0.0
    %2845 = vmatpush1.msra.mxu0 0.0
    %2846 = vmatprep.subr.mxu0 0.0
    %2847 = vmatpush1.msra.mxu0 0.0
    %2848 = vmatprep.mubr.f32.mxu0 0.0
    %2849 = vmatmul.mubr.f32.gmra.mrb[0].mxu0 %v2782
    %v2850 = vpop.f32.mrb[0].mxu0
    %v2851 = vadd.f32 %v2778, %v2850
    %v2852 = vpop.f32.mrb[0].mxu0
    %2853 = vdwg.mxu0
    %v2854 = vld [vmem:[#allocation23] sm:$0xff]
    %vm2855 = vcmask 64512
    %v2857 = vsel %vm2855, %v254, 0
    %2859 = vmatprep.subr.mxu0 0.0
    %2860 = vmatpush1.msra.mxu0 %v2854
    %2861 = vmatprep.subr.mxu0 0.0
    %2862 = vmatpush1.msra.mxu0 0.0
    %2863 = vmatprep.subr.mxu0 0.0
    %2864 = vmatpush1.msra.mxu0 0.0
    %2865 = vmatprep.subr.mxu0 0.0
    %2866 = vmatpush1.msra.mxu0 0.0
    %2867 = vmatprep.subr.mxu0 0.0
    %2868 = vmatpush1.msra.mxu0 0.0
    %2869 = vmatprep.subr.mxu0 0.0
    %2870 = vmatpush1.msra.mxu0 0.0
    %2871 = vmatprep.subr.mxu0 0.0
    %2872 = vmatpush1.msra.mxu0 0.0
    %2873 = vmatprep.subr.mxu0 0.0
    %2874 = vmatpush1.msra.mxu0 0.0
    %2875 = vmatprep.subr.mxu0 0.0
    %2876 = vmatpush1.msra.mxu0 0.0
    %2877 = vmatprep.subr.mxu0 0.0
    %2878 = vmatpush1.msra.mxu0 0.0
    %2879 = vmatprep.subr.mxu0 0.0
    %2880 = vmatpush1.msra.mxu0 0.0
    %2881 = vmatprep.subr.mxu0 0.0
    %2882 = vmatpush1.msra.mxu0 0.0
    %2883 = vmatprep.subr.mxu0 0.0
    %2884 = vmatpush1.msra.mxu0 0.0
    %2885 = vmatprep.subr.mxu0 0.0
    %2886 = vmatpush1.msra.mxu0 0.0
    %2887 = vmatprep.subr.mxu0 0.0
    %2888 = vmatpush1.msra.mxu0 0.0
    %2889 = vmatprep.subr.mxu0 0.0
    %2890 = vmatpush1.msra.mxu0 0.0
    %2891 = vmatprep.subr.mxu0 0.0
    %2892 = vmatpush1.msra.mxu0 0.0
    %2893 = vmatprep.subr.mxu0 0.0
    %2894 = vmatpush1.msra.mxu0 0.0
    %2895 = vmatprep.subr.mxu0 0.0
    %2896 = vmatpush1.msra.mxu0 0.0
    %2897 = vmatprep.subr.mxu0 0.0
    %2898 = vmatpush1.msra.mxu0 0.0
    %2899 = vmatprep.subr.mxu0 0.0
    %2900 = vmatpush1.msra.mxu0 0.0
    %2901 = vmatprep.subr.mxu0 0.0
    %2902 = vmatpush1.msra.mxu0 0.0
    %2903 = vmatprep.subr.mxu0 0.0
    %2904 = vmatpush1.msra.mxu0 0.0
    %2905 = vmatprep.subr.mxu0 0.0
    %2906 = vmatpush1.msra.mxu0 0.0
    %2907 = vmatprep.subr.mxu0 0.0
    %2908 = vmatpush1.msra.mxu0 0.0
    %2909 = vmatprep.subr.mxu0 0.0
    %2910 = vmatpush1.msra.mxu0 0.0
    %2911 = vmatprep.subr.mxu0 0.0
    %2912 = vmatpush1.msra.mxu0 0.0
    %2913 = vmatprep.subr.mxu0 0.0
    %2914 = vmatpush1.msra.mxu0 0.0
    %2915 = vmatprep.subr.mxu0 0.0
    %2916 = vmatpush1.msra.mxu0 0.0
    %2917 = vmatprep.subr.mxu0 0.0
    %2918 = vmatpush1.msra.mxu0 0.0
    %2919 = vmatprep.subr.mxu0 0.0
    %2920 = vmatpush1.msra.mxu0 0.0
    %2921 = vmatprep.subr.mxu0 0.0
    %2922 = vmatpush1.msra.mxu0 0.0
    %2923 = vmatprep.mubr.f32.mxu0 0.0
    %2924 = vmatmul.mubr.f32.gmra.mrb[0].mxu0 %v2857
    %v2925 = vpop.f32.mrb[0].mxu0
    %v2926 = vadd.f32 0.0, %v2925
    %v2927 = vpop.f32.mrb[0].mxu0
    %2928 = vdwg.mxu0
    %v2929 = vadd.f32 %v2851, %v2926
    %v2930 = vld [vmem:[#allocation25] sm:$0x1]
    %v2932 = vlaneseq
    %v2933 = vshrl.u32 %v2932, 7
    %v2934 = vsub.s32 0, %v2933
    %v2935 = vrot.slane %v2930, %v2934
    %v2937 = vadd.f32 %v2929, %v2935
    %v2938 = vmax.f32 %v2937, 0.0
    %v2939 = vld [vmem:[%s24] sm:$0xff]
    %v2940 = vld [vmem:[%s24 + $0x8] sm:$0xff]
    %v2941 = vld [vmem:[%s24 + $0x10] sm:$0xff]
    %v2942 = vld [vmem:[%s24 + $0x18] sm:$0xff]
    %v2943 = vld [vmem:[%s24 + $0x20] sm:$0xff]
    %v2944 = vld [vmem:[%s24 + $0x28] sm:$0xff]
    %v2945 = vld [vmem:[%s24 + $0x30] sm:$0xff]
    %v2946 = vld [vmem:[%s24 + $0x38] sm:$0xff]
    %v2947 = vld [vmem:[%s25] sm:$0x1]
    %v2949 = vlaneseq
    %v2950 = vshrl.u32 %v2949, 7
    %v2951 = vsub.s32 0, %v2950
    %v2952 = vrot.slane %v2947, %v2951
    %vm2954 = vcmask 523264
    %v2956 = vsel %vm2954, %v2938, 0
    %2958 = vmatprep.subr.mxu0 0.0
    %2959 = vmatpush1.msra.mxu0 %v2939
    %2960 = vmatprep.subr.mxu0 0.0
    %2961 = vmatpush1.msra.mxu0 %v2940
    %2962 = vmatprep.subr.mxu0 0.0
    %2963 = vmatpush1.msra.mxu0 %v2941
    %2964 = vmatprep.subr.mxu0 0.0
    %2965 = vmatpush1.msra.mxu0 %v2942
    %2966 = vmatprep.subr.mxu0 0.0
    %2967 = vmatpush1.msra.mxu0 %v2943
    %2968 = vmatprep.subr.mxu0 0.0
    %2969 = vmatpush1.msra.mxu0 %v2944
    %2970 = vmatprep.subr.mxu0 0.0
    %2971 = vmatpush1.msra.mxu0 %v2945
    %2972 = vmatprep.subr.mxu0 0.0
    %2973 = vmatpush1.msra.mxu0 %v2946
    %2974 = vmatprep.subr.mxu0 0.0
    %2975 = vmatpush1.msra.mxu0 0.0
    %2976 = vmatprep.subr.mxu0 0.0
    %2977 = vmatpush1.msra.mxu0 0.0
    %2978 = vmatprep.subr.mxu0 0.0
    %2979 = vmatpush1.msra.mxu0 0.0
    %2980 = vmatprep.subr.mxu0 0.0
    %2981 = vmatpush1.msra.mxu0 0.0
    %2982 = vmatprep.subr.mxu0 0.0
    %2983 = vmatpush1.msra.mxu0 0.0
    %2984 = vmatprep.subr.mxu0 0.0
    %2985 = vmatpush1.msra.mxu0 0.0
    %2986 = vmatprep.subr.mxu0 0.0
    %2987 = vmatpush1.msra.mxu0 0.0
    %2988 = vmatprep.subr.mxu0 0.0
    %2989 = vmatpush1.msra.mxu0 0.0
    %2990 = vmatprep.subr.mxu0 0.0
    %2991 = vmatpush1.msra.mxu0 0.0
    %2992 = vmatprep.subr.mxu0 0.0
    %2993 = vmatpush1.msra.mxu0 0.0
    %2994 = vmatprep.subr.mxu0 0.0
    %2995 = vmatpush1.msra.mxu0 0.0
    %2996 = vmatprep.subr.mxu0 0.0
    %2997 = vmatpush1.msra.mxu0 0.0
    %2998 = vmatprep.subr.mxu0 0.0
    %2999 = vmatpush1.msra.mxu0 0.0
    %3000 = vmatprep.subr.mxu0 0.0
    %3001 = vmatpush1.msra.mxu0 0.0
    %3002 = vmatprep.subr.mxu0 0.0
    %3003 = vmatpush1.msra.mxu0 0.0
    %3004 = vmatprep.subr.mxu0 0.0
    %3005 = vmatpush1.msra.mxu0 0.0
    %3006 = vmatprep.subr.mxu0 0.0
    %3007 = vmatpush1.msra.mxu0 0.0
    %3008 = vmatprep.subr.mxu0 0.0
    %3009 = vmatpush1.msra.mxu0 0.0
    %3010 = vmatprep.subr.mxu0 0.0
    %3011 = vmatpush1.msra.mxu0 0.0
    %3012 = vmatprep.subr.mxu0 0.0
    %3013 = vmatpush1.msra.mxu0 0.0
    %3014 = vmatprep.subr.mxu0 0.0
    %3015 = vmatpush1.msra.mxu0 0.0
    %3016 = vmatprep.subr.mxu0 0.0
    %3017 = vmatpush1.msra.mxu0 0.0
    %3018 = vmatprep.subr.mxu0 0.0
    %3019 = vmatpush1.msra.mxu0 0.0
    %3020 = vmatprep.subr.mxu0 0.0
    %3021 = vmatpush1.msra.mxu0 0.0
    %3022 = vmatprep.mubr.f32.mxu0 0.0
    %3023 = vmatmul.mubr.f32.gmra.mrb[0].mxu0 %v2956
    %v3024 = vpop.f32.mrb[0].mxu0
    %v3025 = vadd.f32 %v2952, %v3024
    %v3026 = vpop.f32.mrb[0].mxu0
    %3027 = vdwg.mxu0
    %v3028 = vmax.f32 %v3025, 0.0
    %v3029 = vld [vmem:[%s26] sm:$0xff]
    %v3030 = vld [vmem:[%s26 + $0x8] sm:$0xff]
    %v3031 = vld [vmem:[%s26 + $0x10] sm:$0xff]
    %v3032 = vld [vmem:[%s26 + $0x18] sm:$0xff]
    %v3033 = vld [vmem:[%s26 + $0x20] sm:$0xff]
    %v3034 = vld [vmem:[%s26 + $0x28] sm:$0xff]
    %v3035 = vld [vmem:[%s26 + $0x30] sm:$0xff]
    %v3036 = vld [vmem:[%s26 + $0x38] sm:$0xff]
    %v3037 = vld [vmem:[#allocation5] sm:$0x1]
    %v3039 = vlaneseq
    %v3040 = vshrl.u32 %v3039, 7
    %v3041 = vsub.s32 0, %v3040
    %v3042 = vrot.slane %v3037, %v3041
    %v3045 = vsel %vm2954, %v3028, 0
    %3047 = vmatprep.subr.mxu0 0.0
    %3048 = vmatpush1.msra.mxu0 %v3029
    %3049 = vmatprep.subr.mxu0 0.0
    %3050 = vmatpush1.msra.mxu0 %v3030
    %3051 = vmatprep.subr.mxu0 0.0
    %3052 = vmatpush1.msra.mxu0 %v3031
    %3053 = vmatprep.subr.mxu0 0.0
    %3054 = vmatpush1.msra.mxu0 %v3032
    %3055 = vmatprep.subr.mxu0 0.0
    %3056 = vmatpush1.msra.mxu0 %v3033
    %3057 = vmatprep.subr.mxu0 0.0
    %3058 = vmatpush1.msra.mxu0 %v3034
    %3059 = vmatprep.subr.mxu0 0.0
    %3060 = vmatpush1.msra.mxu0 %v3035
    %3061 = vmatprep.subr.mxu0 0.0
    %3062 = vmatpush1.msra.mxu0 %v3036
    %3063 = vmatprep.subr.mxu0 0.0
    %3064 = vmatpush1.msra.mxu0 0.0
    %3065 = vmatprep.subr.mxu0 0.0
    %3066 = vmatpush1.msra.mxu0 0.0
    %3067 = vmatprep.subr.mxu0 0.0
    %3068 = vmatpush1.msra.mxu0 0.0
    %3069 = vmatprep.subr.mxu0 0.0
    %3070 = vmatpush1.msra.mxu0 0.0
    %3071 = vmatprep.subr.mxu0 0.0
    %3072 = vmatpush1.msra.mxu0 0.0
    %3073 = vmatprep.subr.mxu0 0.0
    %3074 = vmatpush1.msra.mxu0 0.0
    %3075 = vmatprep.subr.mxu0 0.0
    %3076 = vmatpush1.msra.mxu0 0.0
    %3077 = vmatprep.subr.mxu0 0.0
    %3078 = vmatpush1.msra.mxu0 0.0
    %3079 = vmatprep.subr.mxu0 0.0
    %3080 = vmatpush1.msra.mxu0 0.0
    %3081 = vmatprep.subr.mxu0 0.0
    %3082 = vmatpush1.msra.mxu0 0.0
    %3083 = vmatprep.subr.mxu0 0.0
    %3084 = vmatpush1.msra.mxu0 0.0
    %3085 = vmatprep.subr.mxu0 0.0
    %3086 = vmatpush1.msra.mxu0 0.0
    %3087 = vmatprep.subr.mxu0 0.0
    %3088 = vmatpush1.msra.mxu0 0.0
    %3089 = vmatprep.subr.mxu0 0.0
    %3090 = vmatpush1.msra.mxu0 0.0
    %3091 = vmatprep.subr.mxu0 0.0
    %3092 = vmatpush1.msra.mxu0 0.0
    %3093 = vmatprep.subr.mxu0 0.0
    %3094 = vmatpush1.msra.mxu0 0.0
    %3095 = vmatprep.subr.mxu0 0.0
    %3096 = vmatpush1.msra.mxu0 0.0
    %3097 = vmatprep.subr.mxu0 0.0
    %3098 = vmatpush1.msra.mxu0 0.0
    %3099 = vmatprep.subr.mxu0 0.0
    %3100 = vmatpush1.msra.mxu0 0.0
    %3101 = vmatprep.subr.mxu0 0.0
    %3102 = vmatpush1.msra.mxu0 0.0
    %3103 = vmatprep.subr.mxu0 0.0
    %3104 = vmatpush1.msra.mxu0 0.0
    %3105 = vmatprep.subr.mxu0 0.0
    %3106 = vmatpush1.msra.mxu0 0.0
    %3107 = vmatprep.subr.mxu0 0.0
    %3108 = vmatpush1.msra.mxu0 0.0
    %3109 = vmatprep.subr.mxu0 0.0
    %3110 = vmatpush1.msra.mxu0 0.0
    %3111 = vmatprep.mubr.f32.mxu0 0.0
    %3112 = vmatmul.mubr.f32.gmra.mrb[0].mxu0 %v3045
    %v3113 = vpop.f32.mrb[0].mxu0
    %v3114 = vadd.f32 %v3042, %v3113
    %v3115 = vpop.f32.mrb[0].mxu0
    %3116 = vdwg.mxu0
    %vm3117 = vcmask 1024
    %3118 = vst.msk [vmem:[%s28] sm:$0x3] %vm3117, %v3114
    // Predicated region
    $region166: #{hiernet_forward.1} parent=1 // pred_check
      _
    $region167: #{hiernet_forward.1} parent=1 // pred_check_branch
      %3120 = sbr.rel (0) target = $region169
    $region168: #{hiernet_forward.1} parent=1 // pred_region
      _
    $region169: #{hiernet_forward.1} parent=1 // pred_fallthru
      _
    // Predicated region
    $region170: #{hiernet_forward.1} parent=1 // pred_check
      _
    $region171: #{hiernet_forward.1} parent=1 // pred_check_branch
      %3122 = sbr.rel (0) target = $region173
    $region172: #{hiernet_forward.1} parent=1 // pred_region
      _
    $region173: #{hiernet_forward.1} parent=1 // pred_fallthru
      _
    %3123 = vsyncpa [#allocation7], 1
    %3124 = vsyncpa [#allocation9], 1
    %3125 = vsyncpa [#allocation12], 1
    %3126 = vsyncpa [#allocation15], 1
    %3127 = vsyncpa [#allocation18], 1
    %3128 = vsyncpa [#allocation21], 1
    %3129 = vsyncpa [#allocation24], 1

</llo_original>
